<compile_context>
chip_gen: v7x
topology: tpu7x:2x2x1
jax: 0.10.0
libtpu: 0.0.40
codegen_flags: <defaults>
</compile_context>

<pallas_src>
import jax
import jax.numpy as jnp
from jax.experimental import pallas as pl
from jax.experimental.pallas import tpu as pltpu

LANE = 128     # TPU lane width (pad hidden feature axes to multiples of this).
SUBLANE = 8    # Sublane width (pad the tiny 6-wide output to this only).


def _round_up(x, m):
    return ((x + m - 1) // m) * m


# --------------------------------------------------------------------------- #
# Kernel: 4 x (matmul [+bias] [+ReLU]) on one batch tile, weights resident.
# --------------------------------------------------------------------------- #
def _mlp_kernel(x_ref,
                w1_ref, b1_ref,
                w2_ref, b2_ref,
                w3_ref, b3_ref,
                w4_ref, b4_ref,
                o_ref):
    cdt = w1_ref.dtype  # compute dtype for the MXU operands (bf16 or f32)

    # Layer 1: Linear + ReLU   (Dropout -> identity in eval mode)
    h = jnp.dot(x_ref[...], w1_ref[...], preferred_element_type=jnp.float32)
    h = jnp.maximum(h + b1_ref[...], 0.0)

    # Layer 2: Linear + ReLU
    h = jnp.dot(h.astype(cdt), w2_ref[...], preferred_element_type=jnp.float32)
    h = jnp.maximum(h + b2_ref[...], 0.0)

    # Layer 3: Linear + ReLU
    h = jnp.dot(h.astype(cdt), w3_ref[...], preferred_element_type=jnp.float32)
    h = jnp.maximum(h + b3_ref[...], 0.0)

    # Layer 4: Linear (no activation); narrow (8-lane) output store.
    out = jnp.dot(h.astype(cdt), w4_ref[...],
                  preferred_element_type=jnp.float32) + b4_ref[...]
    o_ref[...] = out.astype(o_ref.dtype)


# --------------------------------------------------------------------------- #
# Parameter preparation (one-time, outside the hot path).
# --------------------------------------------------------------------------- #
def prepare_padded_params(params, compute_dtype=jnp.bfloat16):
    """Pad weights/biases once so the kernel sees TPU-friendly shapes.

    - w1 keeps its real input dim; only its output dim is padded to 128 lanes.
    - Hidden dims are padded to multiples of 128 lanes.
    - The final output dim is padded 6 -> 8 only (narrow HBM writeback).
    Zero weight rows/cols contribute nothing, padded biases are zero and
    ReLU(0)=0, so the real output columns are identical to the unpadded math.
    Weights are cast to `compute_dtype`; biases stay float32 (they are added to
    the f32 MXU accumulator inside the kernel).
    """
    w1, w2, w3, w4 = params["w1"], params["w2"], params["w3"], params["w4"]
    b1, b2, b3, b4 = params["b1"], params["b2"], params["b3"], params["b4"]

    h1p = _round_up(w1.shape[1], LANE)       # hidden_dim        -> lanes
    h2p = _round_up(w2.shape[1], LANE)       # 2 * hidden_dim    -> lanes
    outp = _round_up(w4.shape[1], SUBLANE)   # 6 -> 8 (narrow output)

    def pad2(a, rows, cols, dtype):
        return jnp.pad(
            a, ((0, rows - a.shape[0]), (0, cols - a.shape[1]))).astype(dtype)

    return {
        "w1": pad2(w1, w1.shape[0], h1p, compute_dtype),
        "b1": pad2(b1, 1, h1p, jnp.float32),
        "w2": pad2(w2, h1p, h2p, compute_dtype),
        "b2": pad2(b2, 1, h2p, jnp.float32),
        "w3": pad2(w3, h2p, h1p, compute_dtype),
        "b3": pad2(b3, 1, h1p, jnp.float32),
        "w4": pad2(w4, h1p, outp, compute_dtype),
        "b4": pad2(b4, 1, outp, jnp.float32),
    }


def _choose_block_m(batch, block_m_target, min_block_m):
    """Pick the batch tile so the grid has >=4 steps (2 per v7x TensorCore)
    whenever the batch is large enough, while never going below min_block_m
    and never above block_m_target."""
    b_r = _round_up(batch, SUBLANE)
    if b_r >= 4 * min_block_m:
        steps = 4
    elif b_r >= 2 * min_block_m:
        steps = 2
    else:
        steps = 1
    bm = min(block_m_target, _round_up(pl.cdiv(b_r, steps), SUBLANE))
    return max(SUBLANE, bm)


# --------------------------------------------------------------------------- #
# Forward wrapper.
# --------------------------------------------------------------------------- #
def pose_prober_forward(x, padded_params, *, out_dim=6, block_m=2048,
                        min_block_m=512, small_batch_threshold=512):
    """x: [B, input_dim] float32.  padded_params: output of prepare_padded_params."""
    B, input_dim = x.shape
    w1, b1 = padded_params["w1"], padded_params["b1"]   # [in,  H1p], [1, H1p]
    w2, b2 = padded_params["w2"], padded_params["b2"]   # [H1p, H2p], [1, H2p]
    w3, b3 = padded_params["w3"], padded_params["b3"]   # [H2p, H1p], [1, H1p]
    w4, b4 = padded_params["w4"], padded_params["b4"]   # [H1p, 8],   [1, 8]

    assert w1.shape[0] == input_dim, (w1.shape, input_dim)
    out_p = w4.shape[1]
    assert out_dim <= out_p
    compute_dtype = w1.dtype

    # Fast path: tiny batches are dominated by pallas_call fixed cost; let XLA
    # fuse the dot chain instead (padded columns are zero -> same answer).
    if B < small_batch_threshold:
        h = jnp.maximum(x @ w1.astype(jnp.float32) + b1, 0.0)
        h = jnp.maximum(h @ w2.astype(jnp.float32) + b2, 0.0)
        h = jnp.maximum(h @ w3.astype(jnp.float32) + b3, 0.0)
        out = h @ w4.astype(jnp.float32) + b4
        return out[:, :out_dim]

    bm = _choose_block_m(B, block_m, min_block_m)
    grid_steps = pl.cdiv(B, bm)
    B_p = grid_steps * bm

    # Pad only batch rows (feature axis stays its real, narrow width).
    x_p = jnp.pad(x, ((0, B_p - B), (0, 0))).astype(compute_dtype)

    def batch_map(i):
        return (i, 0)

    def resident_map(i):
        # Constant block index: Pallas keeps these tiles resident across the
        # grid (no per-step re-DMA of the small weights).
        return (0, 0)

    def call(single_buffer_weights):
        mode = pl.Buffered(1) if single_buffer_weights else None

        def wspec(shape):
            if mode is None:
                return pl.BlockSpec(shape, resident_map)
            return pl.BlockSpec(shape, resident_map, pipeline_mode=mode)

        return pl.pallas_call(
            _mlp_kernel,
            out_shape=jax.ShapeDtypeStruct((B_p, out_p), jnp.float32),
            grid_spec=pl.GridSpec(
                grid=(grid_steps,),
                in_specs=[
                    pl.BlockSpec((bm, input_dim), batch_map),  # x tile (narrow)
                    wspec(w1.shape), wspec(b1.shape),
                    wspec(w2.shape), wspec(b2.shape),
                    wspec(w3.shape), wspec(b3.shape),
                    wspec(w4.shape), wspec(b4.shape),
                ],
                out_specs=pl.BlockSpec((bm, out_p), batch_map),  # narrow store
            ),
            compiler_params=pltpu.CompilerParams(
                dimension_semantics=("parallel",),
            ),
        )(x_p, w1, b1, w2, b2, w3, b3, w4, b4)

    try:
        # Buffered(1): weights have a constant index_map, so a second pipeline
        # buffer is pointless VMEM.  Fall back if this jax build rejects it.
        out = call(single_buffer_weights=True)
    except Exception:  # pragma: no cover - defensive fallback only
        out = call(single_buffer_weights=False)

    # Drop padded batch rows and padded output lanes.
    return out[:B, :out_dim]


# --------------------------------------------------------------------------- #
# Init + plain-JAX reference.
# --------------------------------------------------------------------------- #
def init_pose_prober_params(key, input_dim, hidden_dim):
    """Deterministic init mimicking nn.Linear's U(-1/sqrt(fan_in), 1/sqrt(fan_in)).
    Weights are stored TRANSPOSED: [in_features, out_features]."""
    dims = [(input_dim, hidden_dim),
            (hidden_dim, hidden_dim * 2),
            (hidden_dim * 2, hidden_dim),
            (hidden_dim, 6)]
    params = {}
    for idx, (fan_in, fan_out) in enumerate(dims, start=1):
        key, kw, kb = jax.random.split(key, 3)
        bound = 1.0 / jnp.sqrt(float(fan_in))
        params[f"w{idx}"] = jax.random.uniform(
            kw, (fan_in, fan_out), jnp.float32, minval=-bound, maxval=bound)
        params[f"b{idx}"] = jax.random.uniform(
            kb, (1, fan_out), jnp.float32, minval=-bound, maxval=bound)
    return params


def pose_prober_reference(x, params):
    """Plain-JAX f32 reference of the same forward pass (eval-mode dropout)."""
    h = jnp.maximum(x @ params["w1"] + params["b1"], 0.0)
    h = jnp.maximum(h @ params["w2"] + params["b2"], 0.0)
    h = jnp.maximum(h @ params["w3"] + params["b3"], 0.0)
    return h @ params["w4"] + params["b4"]


if __name__ == "__main__":
    key = jax.random.PRNGKey(0)
    k_param, k_x_small, k_x_big = jax.random.split(key, 3)

    # Small module shapes: PoseProber(input_dim=16, hidden_dim=32).
    input_dim, hidden_dim = 16, 32
    params = init_pose_prober_params(k_param, input_dim, hidden_dim)

    # --- Pallas path: batch large enough for a 4-step grid (4 x 512 rows). ---
    x_big = jax.random.normal(k_x_big, (2048, input_dim), jnp.float32)
    padded_bf16 = prepare_padded_params(params, compute_dtype=jnp.bfloat16)
    out_big = pose_prober_forward(x_big, padded_bf16)
    out_big = jax.block_until_ready(out_big)
    ref_big = pose_prober_reference(x_big, params)
    assert out_big.shape == (2048, 6), out_big.shape
    # bf16 compute vs f32 reference: relaxed tolerance.
    assert jnp.allclose(out_big, ref_big, atol=5e-2, rtol=5e-2), (
        "bf16 kernel mismatch; max abs err = "
        f"{float(jnp.max(jnp.abs(out_big - ref_big)))}")

    # --- Small-batch fast path (no pallas_call launch for B=8). ---
    x_small = jax.random.normal(k_x_small, (8, input_dim), jnp.float32)
    padded_f32 = prepare_padded_params(params, compute_dtype=jnp.float32)
    out_small = jax.block_until_ready(pose_prober_forward(x_small, padded_f32))
    ref_small = pose_prober_reference(x_small, params)
    assert out_small.shape == (8, 6), out_small.shape
    assert jnp.allclose(out_small, ref_small, atol=1e-4, rtol=1e-4), \
        "fast-path mismatch vs JAX reference"

    print("KERNEL_OK")
</pallas_src>

<mosaic_0001>
module attributes {stable_mosaic.version = 11 : i64} {
  func.func @_mlp_kernel(%arg0: i32, %arg1: memref<512x16xbf16, #tpu.memory_space<vmem>>, %arg2: memref<16x128xbf16, #tpu.memory_space<vmem>>, %arg3: memref<1x128xf32, #tpu.memory_space<vmem>>, %arg4: memref<128x128xbf16, #tpu.memory_space<vmem>>, %arg5: memref<1x128xf32, #tpu.memory_space<vmem>>, %arg6: memref<128x128xbf16, #tpu.memory_space<vmem>>, %arg7: memref<1x128xf32, #tpu.memory_space<vmem>>, %arg8: memref<128x8xbf16, #tpu.memory_space<vmem>>, %arg9: memref<1x8xf32, #tpu.memory_space<vmem>>, %arg10: memref<512x8xf32, #tpu.memory_space<vmem>>) attributes {dimension_semantics = [#tpu.dimension_semantics<parallel>], iteration_bounds = array<i64: 4>, scalar_prefetch = 0 : i64, scratch_operands = 0 : i64, tpu.core_type = #tpu.core_type<tc>, window_params = [{transform_indices = @transform_0, window_bounds = array<i64: 512, 16>}, {pipeline_mode = #tpu.pipeline_mode<synchronous>, transform_indices = @transform_1, window_bounds = array<i64: 16, 128>}, {pipeline_mode = #tpu.pipeline_mode<synchronous>, transform_indices = @transform_2, window_bounds = array<i64: 1, 128>}, {pipeline_mode = #tpu.pipeline_mode<synchronous>, transform_indices = @transform_3, window_bounds = array<i64: 128, 128>}, {pipeline_mode = #tpu.pipeline_mode<synchronous>, transform_indices = @transform_4, window_bounds = array<i64: 1, 128>}, {pipeline_mode = #tpu.pipeline_mode<synchronous>, transform_indices = @transform_5, window_bounds = array<i64: 128, 128>}, {pipeline_mode = #tpu.pipeline_mode<synchronous>, transform_indices = @transform_6, window_bounds = array<i64: 1, 128>}, {pipeline_mode = #tpu.pipeline_mode<synchronous>, transform_indices = @transform_7, window_bounds = array<i64: 128, 8>}, {pipeline_mode = #tpu.pipeline_mode<synchronous>, transform_indices = @transform_8, window_bounds = array<i64: 1, 8>}, {transform_indices = @transform_9, window_bounds = array<i64: 512, 8>}]} {
    %c0 = arith.constant 0 : index
    %c0_0 = arith.constant 0 : index
    %0 = vector.load %arg1[%c0, %c0_0] : memref<512x16xbf16, #tpu.memory_space<vmem>>, vector<512x16xbf16>
    %c0_1 = arith.constant 0 : index
    %c0_2 = arith.constant 0 : index
    %1 = vector.load %arg2[%c0_1, %c0_2] : memref<16x128xbf16, #tpu.memory_space<vmem>>, vector<16x128xbf16>
    %cst = arith.constant dense<0.000000e+00> : vector<512x128xf32>
    %2 = tpu.matmul %0, %1, %cst {dimension_numbers = #tpu.dot_dimension_numbers<[1], [0], [0], [1], [0, 0, 1, 1], [], []>} : vector<512x16xbf16>, vector<16x128xbf16>, vector<512x128xf32> -> vector<512x128xf32>
    %c0_3 = arith.constant 0 : index
    %c0_4 = arith.constant 0 : index
    %3 = vector.load %arg3[%c0_3, %c0_4] : memref<1x128xf32, #tpu.memory_space<vmem>>, vector<1x128xf32>
    %4 = vector.broadcast %3 : vector<1x128xf32> to vector<512x128xf32>
    %5 = arith.addf %2, %4 : vector<512x128xf32>
    %cst_5 = arith.constant 0.000000e+00 : f32
    %6 = vector.broadcast %cst_5 : f32 to vector<512x128xf32>
    %7 = arith.maximumf %5, %6 : vector<512x128xf32>
    %8 = arith.truncf %7 : vector<512x128xf32> to vector<512x128xbf16>
    %c0_6 = arith.constant 0 : index
    %c0_7 = arith.constant 0 : index
    %9 = vector.load %arg4[%c0_6, %c0_7] : memref<128x128xbf16, #tpu.memory_space<vmem>>, vector<128x128xbf16>
    %cst_8 = arith.constant dense<0.000000e+00> : vector<512x128xf32>
    %10 = tpu.matmul %8, %9, %cst_8 {dimension_numbers = #tpu.dot_dimension_numbers<[1], [0], [0], [1], [0, 0, 1, 1], [], []>} : vector<512x128xbf16>, vector<128x128xbf16>, vector<512x128xf32> -> vector<512x128xf32>
    %c0_9 = arith.constant 0 : index
    %c0_10 = arith.constant 0 : index
    %11 = vector.load %arg5[%c0_9, %c0_10] : memref<1x128xf32, #tpu.memory_space<vmem>>, vector<1x128xf32>
    %12 = vector.broadcast %11 : vector<1x128xf32> to vector<512x128xf32>
    %13 = arith.addf %10, %12 : vector<512x128xf32>
    %cst_11 = arith.constant 0.000000e+00 : f32
    %14 = vector.broadcast %cst_11 : f32 to vector<512x128xf32>
    %15 = arith.maximumf %13, %14 : vector<512x128xf32>
    %16 = arith.truncf %15 : vector<512x128xf32> to vector<512x128xbf16>
    %c0_12 = arith.constant 0 : index
    %c0_13 = arith.constant 0 : index
    %17 = vector.load %arg6[%c0_12, %c0_13] : memref<128x128xbf16, #tpu.memory_space<vmem>>, vector<128x128xbf16>
    %cst_14 = arith.constant dense<0.000000e+00> : vector<512x128xf32>
    %18 = tpu.matmul %16, %17, %cst_14 {dimension_numbers = #tpu.dot_dimension_numbers<[1], [0], [0], [1], [0, 0, 1, 1], [], []>} : vector<512x128xbf16>, vector<128x128xbf16>, vector<512x128xf32> -> vector<512x128xf32>
    %c0_15 = arith.constant 0 : index
    %c0_16 = arith.constant 0 : index
    %19 = vector.load %arg7[%c0_15, %c0_16] : memref<1x128xf32, #tpu.memory_space<vmem>>, vector<1x128xf32>
    %20 = vector.broadcast %19 : vector<1x128xf32> to vector<512x128xf32>
    %21 = arith.addf %18, %20 : vector<512x128xf32>
    %cst_17 = arith.constant 0.000000e+00 : f32
    %22 = vector.broadcast %cst_17 : f32 to vector<512x128xf32>
    %23 = arith.maximumf %21, %22 : vector<512x128xf32>
    %24 = arith.truncf %23 : vector<512x128xf32> to vector<512x128xbf16>
    %c0_18 = arith.constant 0 : index
    %c0_19 = arith.constant 0 : index
    %25 = vector.load %arg8[%c0_18, %c0_19] : memref<128x8xbf16, #tpu.memory_space<vmem>>, vector<128x8xbf16>
    %cst_20 = arith.constant dense<0.000000e+00> : vector<512x8xf32>
    %26 = tpu.matmul %24, %25, %cst_20 {dimension_numbers = #tpu.dot_dimension_numbers<[1], [0], [0], [1], [0, 0, 1, 1], [], []>} : vector<512x128xbf16>, vector<128x8xbf16>, vector<512x8xf32> -> vector<512x8xf32>
    %c0_21 = arith.constant 0 : index
    %c0_22 = arith.constant 0 : index
    %27 = vector.load %arg9[%c0_21, %c0_22] : memref<1x8xf32, #tpu.memory_space<vmem>>, vector<1x8xf32>
    %28 = vector.broadcast %27 : vector<1x8xf32> to vector<512x8xf32>
    %29 = arith.addf %26, %28 : vector<512x8xf32>
    %c0_23 = arith.constant 0 : index
    %c0_24 = arith.constant 0 : index
    %30 = vector.load %arg10[%c0_23, %c0_24] : memref<512x8xf32, #tpu.memory_space<vmem>>, vector<512x8xf32>
    tpu.vector_store %arg10[%c0_23, %c0_24], %29 {strides = array<i32>} : memref<512x8xf32, #tpu.memory_space<vmem>>, vector<512x8xf32>,
    return
  }
  func.func @transform_0(%arg0: i32) -> (i32, i32) {
    %c0_i32 = arith.constant 0 : i32
    %c0_i32_0 = arith.constant 0 : i32
    return %arg0, %c0_i32 : i32, i32
  }
  func.func @transform_1(%arg0: i32) -> (i32, i32) {
    %c0_i32 = arith.constant 0 : i32
    %c0_i32_0 = arith.constant 0 : i32
    %c0_i32_1 = arith.constant 0 : i32
    return %c0_i32, %c0_i32_0 : i32, i32
  }
  func.func @transform_2(%arg0: i32) -> (i32, i32) {
    %c0_i32 = arith.constant 0 : i32
    %c0_i32_0 = arith.constant 0 : i32
    %c0_i32_1 = arith.constant 0 : i32
    return %c0_i32, %c0_i32_0 : i32, i32
  }
  func.func @transform_3(%arg0: i32) -> (i32, i32) {
    %c0_i32 = arith.constant 0 : i32
    %c0_i32_0 = arith.constant 0 : i32
    %c0_i32_1 = arith.constant 0 : i32
    return %c0_i32, %c0_i32_0 : i32, i32
  }
  func.func @transform_4(%arg0: i32) -> (i32, i32) {
    %c0_i32 = arith.constant 0 : i32
    %c0_i32_0 = arith.constant 0 : i32
    %c0_i32_1 = arith.constant 0 : i32
    return %c0_i32, %c0_i32_0 : i32, i32
  }
  func.func @transform_5(%arg0: i32) -> (i32, i32) {
    %c0_i32 = arith.constant 0 : i32
    %c0_i32_0 = arith.constant 0 : i32
    %c0_i32_1 = arith.constant 0 : i32
    return %c0_i32, %c0_i32_0 : i32, i32
  }
  func.func @transform_6(%arg0: i32) -> (i32, i32) {
    %c0_i32 = arith.constant 0 : i32
    %c0_i32_0 = arith.constant 0 : i32
    %c0_i32_1 = arith.constant 0 : i32
    return %c0_i32, %c0_i32_0 : i32, i32
  }
  func.func @transform_7(%arg0: i32) -> (i32, i32) {
    %c0_i32 = arith.constant 0 : i32
    %c0_i32_0 = arith.constant 0 : i32
    %c0_i32_1 = arith.constant 0 : i32
    return %c0_i32, %c0_i32_0 : i32, i32
  }
  func.func @transform_8(%arg0: i32) -> (i32, i32) {
    %c0_i32 = arith.constant 0 : i32
    %c0_i32_0 = arith.constant 0 : i32
    %c0_i32_1 = arith.constant 0 : i32
    return %c0_i32, %c0_i32_0 : i32, i32
  }
  func.func @transform_9(%arg0: i32) -> (i32, i32) {
    %c0_i32 = arith.constant 0 : i32
    %c0_i32_0 = arith.constant 0 : i32
    return %arg0, %c0_i32 : i32, i32
  }
}

module attributes {stable_mosaic.version = 11 : i64} {
  func.func @_mlp_kernel(%arg0: i32, %arg1: memref<512x16xbf16, #tpu.memory_space<vmem>>, %arg2: memref<16x128xbf16, #tpu.memory_space<vmem>>, %arg3: memref<1x128xf32, #tpu.memory_space<vmem>>, %arg4: memref<128x128xbf16, #tpu.memory_space<vmem>>, %arg5: memref<1x128xf32, #tpu.memory_space<vmem>>, %arg6: memref<128x128xbf16, #tpu.memory_space<vmem>>, %arg7: memref<1x128xf32, #tpu.memory_space<vmem>>, %arg8: memref<128x8xbf16, #tpu.memory_space<vmem>>, %arg9: memref<1x8xf32, #tpu.memory_space<vmem>>, %arg10: memref<512x8xf32, #tpu.memory_space<vmem>>) attributes {dimension_semantics = [#tpu.dimension_semantics<parallel>], iteration_bounds = array<i64: 4>, scalar_prefetch = 0 : i64, scratch_operands = 0 : i64, tpu.core_type = #tpu.core_type<tc>, window_params = [{transform_indices = @transform_0, window_bounds = array<i64: 512, 16>}, {pipeline_mode = #tpu.pipeline_mode<synchronous>, transform_indices = @transform_1, window_bounds = array<i64: 16, 128>}, {pipeline_mode = #tpu.pipeline_mode<synchronous>, transform_indices = @transform_2, window_bounds = array<i64: 1, 128>}, {pipeline_mode = #tpu.pipeline_mode<synchronous>, transform_indices = @transform_3, window_bounds = array<i64: 128, 128>}, {pipeline_mode = #tpu.pipeline_mode<synchronous>, transform_indices = @transform_4, window_bounds = array<i64: 1, 128>}, {pipeline_mode = #tpu.pipeline_mode<synchronous>, transform_indices = @transform_5, window_bounds = array<i64: 128, 128>}, {pipeline_mode = #tpu.pipeline_mode<synchronous>, transform_indices = @transform_6, window_bounds = array<i64: 1, 128>}, {pipeline_mode = #tpu.pipeline_mode<synchronous>, transform_indices = @transform_7, window_bounds = array<i64: 128, 8>}, {pipeline_mode = #tpu.pipeline_mode<synchronous>, transform_indices = @transform_8, window_bounds = array<i64: 1, 8>}, {transform_indices = @transform_9, window_bounds = array<i64: 512, 8>}]} {
    %c0 = arith.constant 0 : index
    %c0_0 = arith.constant 0 : index
    %0 = vector.load %arg1[%c0, %c0_0] : memref<512x16xbf16, #tpu.memory_space<vmem>>, vector<512x16xbf16>
    %c0_1 = arith.constant 0 : index
    %c0_2 = arith.constant 0 : index
    %1 = vector.load %arg2[%c0_1, %c0_2] : memref<16x128xbf16, #tpu.memory_space<vmem>>, vector<16x128xbf16>
    %cst = arith.constant dense<0.000000e+00> : vector<512x128xf32>
    %2 = tpu.matmul %0, %1, %cst {dimension_numbers = #tpu.dot_dimension_numbers<[1], [0], [0], [1], [0, 0, 1, 1], [], []>} : vector<512x16xbf16>, vector<16x128xbf16>, vector<512x128xf32> -> vector<512x128xf32>
    %c0_3 = arith.constant 0 : index
    %c0_4 = arith.constant 0 : index
    %3 = vector.load %arg3[%c0_3, %c0_4] : memref<1x128xf32, #tpu.memory_space<vmem>>, vector<1x128xf32>
    %4 = vector.broadcast %3 : vector<1x128xf32> to vector<512x128xf32>
    %5 = arith.addf %2, %4 : vector<512x128xf32>
    %cst_5 = arith.constant 0.000000e+00 : f32
    %6 = vector.broadcast %cst_5 : f32 to vector<512x128xf32>
    %7 = arith.maximumf %5, %6 : vector<512x128xf32>
    %8 = arith.truncf %7 : vector<512x128xf32> to vector<512x128xbf16>
    %c0_6 = arith.constant 0 : index
    %c0_7 = arith.constant 0 : index
    %9 = vector.load %arg4[%c0_6, %c0_7] : memref<128x128xbf16, #tpu.memory_space<vmem>>, vector<128x128xbf16>
    %cst_8 = arith.constant dense<0.000000e+00> : vector<512x128xf32>
    %10 = tpu.matmul %8, %9, %cst_8 {dimension_numbers = #tpu.dot_dimension_numbers<[1], [0], [0], [1], [0, 0, 1, 1], [], []>} : vector<512x128xbf16>, vector<128x128xbf16>, vector<512x128xf32> -> vector<512x128xf32>
    %c0_9 = arith.constant 0 : index
    %c0_10 = arith.constant 0 : index
    %11 = vector.load %arg5[%c0_9, %c0_10] : memref<1x128xf32, #tpu.memory_space<vmem>>, vector<1x128xf32>
    %12 = vector.broadcast %11 : vector<1x128xf32> to vector<512x128xf32>
    %13 = arith.addf %10, %12 : vector<512x128xf32>
    %cst_11 = arith.constant 0.000000e+00 : f32
    %14 = vector.broadcast %cst_11 : f32 to vector<512x128xf32>
    %15 = arith.maximumf %13, %14 : vector<512x128xf32>
    %16 = arith.truncf %15 : vector<512x128xf32> to vector<512x128xbf16>
    %c0_12 = arith.constant 0 : index
    %c0_13 = arith.constant 0 : index
    %17 = vector.load %arg6[%c0_12, %c0_13] : memref<128x128xbf16, #tpu.memory_space<vmem>>, vector<128x128xbf16>
    %cst_14 = arith.constant dense<0.000000e+00> : vector<512x128xf32>
    %18 = tpu.matmul %16, %17, %cst_14 {dimension_numbers = #tpu.dot_dimension_numbers<[1], [0], [0], [1], [0, 0, 1, 1], [], []>} : vector<512x128xbf16>, vector<128x128xbf16>, vector<512x128xf32> -> vector<512x128xf32>
    %c0_15 = arith.constant 0 : index
    %c0_16 = arith.constant 0 : index
    %19 = vector.load %arg7[%c0_15, %c0_16] : memref<1x128xf32, #tpu.memory_space<vmem>>, vector<1x128xf32>
    %20 = vector.broadcast %19 : vector<1x128xf32> to vector<512x128xf32>
    %21 = arith.addf %18, %20 : vector<512x128xf32>
    %cst_17 = arith.constant 0.000000e+00 : f32
    %22 = vector.broadcast %cst_17 : f32 to vector<512x128xf32>
    %23 = arith.maximumf %21, %22 : vector<512x128xf32>
    %24 = arith.truncf %23 : vector<512x128xf32> to vector<512x128xbf16>
    %c0_18 = arith.constant 0 : index
    %c0_19 = arith.constant 0 : index
    %25 = vector.load %arg8[%c0_18, %c0_19] : memref<128x8xbf16, #tpu.memory_space<vmem>>, vector<128x8xbf16>
    %cst_20 = arith.constant dense<0.000000e+00> : vector<512x8xf32>
    %26 = tpu.matmul %24, %25, %cst_20 {dimension_numbers = #tpu.dot_dimension_numbers<[1], [0], [0], [1], [0, 0, 1, 1], [], []>} : vector<512x128xbf16>, vector<128x8xbf16>, vector<512x8xf32> -> vector<512x8xf32>
    %c0_21 = arith.constant 0 : index
    %c0_22 = arith.constant 0 : index
    %27 = vector.load %arg9[%c0_21, %c0_22] : memref<1x8xf32, #tpu.memory_space<vmem>>, vector<1x8xf32>
    %28 = vector.broadcast %27 : vector<1x8xf32> to vector<512x8xf32>
    %29 = arith.addf %26, %28 : vector<512x8xf32>
    %c0_23 = arith.constant 0 : index
    %c0_24 = arith.constant 0 : index
    %30 = vector.load %arg10[%c0_23, %c0_24] : memref<512x8xf32, #tpu.memory_space<vmem>>, vector<512x8xf32>
    tpu.vector_store %arg10[%c0_23, %c0_24], %29 {strides = array<i32>} : memref<512x8xf32, #tpu.memory_space<vmem>>, vector<512x8xf32>,
    return
  }
  func.func @transform_0(%arg0: i32) -> (i32, i32) {
    %c0_i32 = arith.constant 0 : i32
    %c0_i32_0 = arith.constant 0 : i32
    return %arg0, %c0_i32 : i32, i32
  }
  func.func @transform_1(%arg0: i32) -> (i32, i32) {
    %c0_i32 = arith.constant 0 : i32
    %c0_i32_0 = arith.constant 0 : i32
    %c0_i32_1 = arith.constant 0 : i32
    return %c0_i32, %c0_i32_0 : i32, i32
  }
  func.func @transform_2(%arg0: i32) -> (i32, i32) {
    %c0_i32 = arith.constant 0 : i32
    %c0_i32_0 = arith.constant 0 : i32
    %c0_i32_1 = arith.constant 0 : i32
    return %c0_i32, %c0_i32_0 : i32, i32
  }
  func.func @transform_3(%arg0: i32) -> (i32, i32) {
    %c0_i32 = arith.constant 0 : i32
    %c0_i32_0 = arith.constant 0 : i32
    %c0_i32_1 = arith.constant 0 : i32
    return %c0_i32, %c0_i32_0 : i32, i32
  }
  func.func @transform_4(%arg0: i32) -> (i32, i32) {
    %c0_i32 = arith.constant 0 : i32
    %c0_i32_0 = arith.constant 0 : i32
    %c0_i32_1 = arith.constant 0 : i32
    return %c0_i32, %c0_i32_0 : i32, i32
  }
  func.func @transform_5(%arg0: i32) -> (i32, i32) {
    %c0_i32 = arith.constant 0 : i32
    %c0_i32_0 = arith.constant 0 : i32
    %c0_i32_1 = arith.constant 0 : i32
    return %c0_i32, %c0_i32_0 : i32, i32
  }
  func.func @transform_6(%arg0: i32) -> (i32, i32) {
    %c0_i32 = arith.constant 0 : i32
    %c0_i32_0 = arith.constant 0 : i32
    %c0_i32_1 = arith.constant 0 : i32
    return %c0_i32, %c0_i32_0 : i32, i32
  }
  func.func @transform_7(%arg0: i32) -> (i32, i32) {
    %c0_i32 = arith.constant 0 : i32
    %c0_i32_0 = arith.constant 0 : i32
    %c0_i32_1 = arith.constant 0 : i32
    return %c0_i32, %c0_i32_0 : i32, i32
  }
  func.func @transform_8(%arg0: i32) -> (i32, i32) {
    %c0_i32 = arith.constant 0 : i32
    %c0_i32_0 = arith.constant 0 : i32
    %c0_i32_1 = arith.constant 0 : i32
    return %c0_i32, %c0_i32_0 : i32, i32
  }
  func.func @transform_9(%arg0: i32) -> (i32, i32) {
    %c0_i32 = arith.constant 0 : i32
    %c0_i32_0 = arith.constant 0 : i32
    return %arg0, %c0_i32 : i32, i32
  }
}

</mosaic_0001>

<llo_original>
// kernel: tpu_custom_call.1
$region0: #{tpu_custom_call.1}
  #allocation0 [shape = 'u32[]', space=smem, size = 0x4, offset = 0x4, fixed_abs, tag = 'smem constant byte address 0x4 - core index']
  #allocation1 [shape = 'u32[144,128]{1,0:T(1,128)}', space=vmem, size = 0x12000, scoped, tag = 'internal scratch']
  %s0 = inlined_call_operand.vmem [shape: bf16[2048,16], index: 0, kind: input, shape index: {}]
  %s1 = inlined_call_operand.vmem [shape: bf16[16,128], index: 1, kind: input, shape index: {}]
  %s2 = inlined_call_operand.vmem [shape: f32[1,128], index: 2, kind: input, shape index: {}]
  %s3 = inlined_call_operand.vmem [shape: bf16[128,128], index: 3, kind: input, shape index: {}]
  %s4 = inlined_call_operand.vmem [shape: f32[1,128], index: 4, kind: input, shape index: {}]
  %s5 = inlined_call_operand.vmem [shape: bf16[128,128], index: 5, kind: input, shape index: {}]
  %s6 = inlined_call_operand.vmem [shape: f32[1,128], index: 6, kind: input, shape index: {}]
  %s7 = inlined_call_operand.vmem [shape: bf16[128,8], index: 7, kind: input, shape index: {}]
  %s8 = inlined_call_operand.vmem [shape: f32[1,8], index: 8, kind: input, shape index: {}]
  %s9 = inlined_call_operand.vmem [shape: f32[2048,8], index: 9, kind: output, shape index: {}]
  %s10 = sld [smem:[#allocation0]]
  $region69: #{tpu_custom_call.1} parent=0
    _
  %s12 = ssub.s32 1, %s10
  %s13 = scalar_select 0, %s12, %s10
  loop: start=0, step=1, limit=6
  $region2: #{tpu_custom_call.1} parent=0 // loop_pre_header
    _
  $region3: #{tpu_custom_call.1} parent=0 // loop_header
    %s15 = sphi 0, %s19
    %p16 = scmp.ge.s32.totalorder %s15, 6
    %s25 = sphi 0, %s27
    %s28 = sphi 0, %s25
    %s29 = sphi 0, %s28
    %s45 = sphi 0, %s29
    %s49 = sphi 0, %s49
    %s51 = sphi 0, %s49
    %s52 = sphi 0, %s51
    %s66 = sphi 0, %s52
    %s70 = sphi 0, %s70
    %s72 = sphi 0, %s70
    %s73 = sphi 0, %s72
    %s87 = sphi 0, %s73
    %s91 = sphi 0, %s91
    %s93 = sphi 0, %s91
    %s94 = sphi 0, %s93
    %s108 = sphi 0, %s94
    %s112 = sphi 0, %s112
    %s114 = sphi 0, %s112
    %s115 = sphi 0, %s114
    %s129 = sphi 0, %s115
    %s133 = sphi 0, %s133
    %s135 = sphi 0, %s133
    %s136 = sphi 0, %s135
    %s150 = sphi 0, %s136
    %s154 = sphi 0, %s154
    %s156 = sphi 0, %s154
    %s157 = sphi 0, %s156
    %s171 = sphi 0, %s157
    %s175 = sphi 0, %s175
    %s177 = sphi 0, %s175
    %s178 = sphi 0, %s177
    %s192 = sphi 0, %s178
    %s196 = sphi 0, %s196
    %s198 = sphi 0, %s196
    %s199 = sphi 0, %s198
    %s213 = sphi 0, %s199
    %s219 = sphi 0, %s221
    %s222 = sphi 0, %s219
    %s223 = sphi 0, %s222
    %s239 = sphi 0, %s223
  $region4: #{tpu_custom_call.1} parent=0 // loop_header_branch
    %18 = sbr.rel (%p16) target = $region8
  $region5: #{tpu_custom_call.1} parent=0 // loop_body
    %s20 = ssub.s32 %s15, 1
    %s21 = ssub.s32 %s15, 2
    %s22 = sadd.s32 %s15, 1
    %s23 = ssub.s32 %s15, %s22
    %p24 = scmp.eq.s32.totalorder %s23, 0
    %s26 = sadd.s32 %s25, 1
    %s27 = scalar_select %p24, %s25, %s26
    %p30 = pneg %p24
    %p31 = scmp.eq.s32.totalorder %s15, 3
    %p32 = por %p30, %p31
    %p33 = scmp.ne.s32.totalorder %s25, %s28
    %p34 = scmp.eq.s32.totalorder %s15, 0
    %p35 = por %p33, %p34
    %p36 = scmp.ne.s32.totalorder %s25, %s28
    %p37 = scmp.eq.s32.totalorder %s20, 3
    %p38 = por %p36, %p37
    %p39 = scmp.ne.s32.totalorder %s28, %s29
    %p40 = scmp.eq.s32.totalorder %s20, 0
    %p41 = por %p39, %p40
    %p42 = scmp.ne.s32.totalorder %s28, %s29
    %p43 = scmp.eq.s32.totalorder %s21, 3
    %p44 = por %p42, %p43
    %p46 = scmp.ne.s32.totalorder %s29, %s45
    %p47 = scmp.eq.s32.totalorder %s21, 0
    %p48 = por %p46, %p47
    %s50 = sadd.s32 %s49, 1
    %p53 = scmp.eq.s32.totalorder %s15, 3
    %p54 = scmp.ne.s32.totalorder %s49, %s51
    %p55 = scmp.eq.s32.totalorder %s15, 0
    %p56 = por %p54, %p55
    %p57 = scmp.ne.s32.totalorder %s49, %s51
    %p58 = scmp.eq.s32.totalorder %s20, 3
    %p59 = por %p57, %p58
    %p60 = scmp.ne.s32.totalorder %s51, %s52
    %p61 = scmp.eq.s32.totalorder %s20, 0
    %p62 = por %p60, %p61
    %p63 = scmp.ne.s32.totalorder %s51, %s52
    %p64 = scmp.eq.s32.totalorder %s21, 3
    %p65 = por %p63, %p64
    %p67 = scmp.ne.s32.totalorder %s52, %s66
    %p68 = scmp.eq.s32.totalorder %s21, 0
    %p69 = por %p67, %p68
    %s71 = sadd.s32 %s70, 1
    %p74 = scmp.eq.s32.totalorder %s15, 3
    %p75 = scmp.ne.s32.totalorder %s70, %s72
    %p76 = scmp.eq.s32.totalorder %s15, 0
    %p77 = por %p75, %p76
    %p78 = scmp.ne.s32.totalorder %s70, %s72
    %p79 = scmp.eq.s32.totalorder %s20, 3
    %p80 = por %p78, %p79
    %p81 = scmp.ne.s32.totalorder %s72, %s73
    %p82 = scmp.eq.s32.totalorder %s20, 0
    %p83 = por %p81, %p82
    %p84 = scmp.ne.s32.totalorder %s72, %s73
    %p85 = scmp.eq.s32.totalorder %s21, 3
    %p86 = por %p84, %p85
    %p88 = scmp.ne.s32.totalorder %s73, %s87
    %p89 = scmp.eq.s32.totalorder %s21, 0
    %p90 = por %p88, %p89
    %s92 = sadd.s32 %s91, 1
    %p95 = scmp.eq.s32.totalorder %s15, 3
    %p96 = scmp.ne.s32.totalorder %s91, %s93
    %p97 = scmp.eq.s32.totalorder %s15, 0
    %p98 = por %p96, %p97
    %p99 = scmp.ne.s32.totalorder %s91, %s93
    %p100 = scmp.eq.s32.totalorder %s20, 3
    %p101 = por %p99, %p100
    %p102 = scmp.ne.s32.totalorder %s93, %s94
    %p103 = scmp.eq.s32.totalorder %s20, 0
    %p104 = por %p102, %p103
    %p105 = scmp.ne.s32.totalorder %s93, %s94
    %p106 = scmp.eq.s32.totalorder %s21, 3
    %p107 = por %p105, %p106
    %p109 = scmp.ne.s32.totalorder %s94, %s108
    %p110 = scmp.eq.s32.totalorder %s21, 0
    %p111 = por %p109, %p110
    %s113 = sadd.s32 %s112, 1
    %p116 = scmp.eq.s32.totalorder %s15, 3
    %p117 = scmp.ne.s32.totalorder %s112, %s114
    %p118 = scmp.eq.s32.totalorder %s15, 0
    %p119 = por %p117, %p118
    %p120 = scmp.ne.s32.totalorder %s112, %s114
    %p121 = scmp.eq.s32.totalorder %s20, 3
    %p122 = por %p120, %p121
    %p123 = scmp.ne.s32.totalorder %s114, %s115
    %p124 = scmp.eq.s32.totalorder %s20, 0
    %p125 = por %p123, %p124
    %p126 = scmp.ne.s32.totalorder %s114, %s115
    %p127 = scmp.eq.s32.totalorder %s21, 3
    %p128 = por %p126, %p127
    %p130 = scmp.ne.s32.totalorder %s115, %s129
    %p131 = scmp.eq.s32.totalorder %s21, 0
    %p132 = por %p130, %p131
    %s134 = sadd.s32 %s133, 1
    %p137 = scmp.eq.s32.totalorder %s15, 3
    %p138 = scmp.ne.s32.totalorder %s133, %s135
    %p139 = scmp.eq.s32.totalorder %s15, 0
    %p140 = por %p138, %p139
    %p141 = scmp.ne.s32.totalorder %s133, %s135
    %p142 = scmp.eq.s32.totalorder %s20, 3
    %p143 = por %p141, %p142
    %p144 = scmp.ne.s32.totalorder %s135, %s136
    %p145 = scmp.eq.s32.totalorder %s20, 0
    %p146 = por %p144, %p145
    %p147 = scmp.ne.s32.totalorder %s135, %s136
    %p148 = scmp.eq.s32.totalorder %s21, 3
    %p149 = por %p147, %p148
    %p151 = scmp.ne.s32.totalorder %s136, %s150
    %p152 = scmp.eq.s32.totalorder %s21, 0
    %p153 = por %p151, %p152
    %s155 = sadd.s32 %s154, 1
    %p158 = scmp.eq.s32.totalorder %s15, 3
    %p159 = scmp.ne.s32.totalorder %s154, %s156
    %p160 = scmp.eq.s32.totalorder %s15, 0
    %p161 = por %p159, %p160
    %p162 = scmp.ne.s32.totalorder %s154, %s156
    %p163 = scmp.eq.s32.totalorder %s20, 3
    %p164 = por %p162, %p163
    %p165 = scmp.ne.s32.totalorder %s156, %s157
    %p166 = scmp.eq.s32.totalorder %s20, 0
    %p167 = por %p165, %p166
    %p168 = scmp.ne.s32.totalorder %s156, %s157
    %p169 = scmp.eq.s32.totalorder %s21, 3
    %p170 = por %p168, %p169
    %p172 = scmp.ne.s32.totalorder %s157, %s171
    %p173 = scmp.eq.s32.totalorder %s21, 0
    %p174 = por %p172, %p173
    %s176 = sadd.s32 %s175, 1
    %p179 = scmp.eq.s32.totalorder %s15, 3
    %p180 = scmp.ne.s32.totalorder %s175, %s177
    %p181 = scmp.eq.s32.totalorder %s15, 0
    %p182 = por %p180, %p181
    %p183 = scmp.ne.s32.totalorder %s175, %s177
    %p184 = scmp.eq.s32.totalorder %s20, 3
    %p185 = por %p183, %p184
    %p186 = scmp.ne.s32.totalorder %s177, %s178
    %p187 = scmp.eq.s32.totalorder %s20, 0
    %p188 = por %p186, %p187
    %p189 = scmp.ne.s32.totalorder %s177, %s178
    %p190 = scmp.eq.s32.totalorder %s21, 3
    %p191 = por %p189, %p190
    %p193 = scmp.ne.s32.totalorder %s178, %s192
    %p194 = scmp.eq.s32.totalorder %s21, 0
    %p195 = por %p193, %p194
    %s197 = sadd.s32 %s196, 1
    %p200 = scmp.eq.s32.totalorder %s15, 3
    %p201 = scmp.ne.s32.totalorder %s196, %s198
    %p202 = scmp.eq.s32.totalorder %s15, 0
    %p203 = por %p201, %p202
    %p204 = scmp.ne.s32.totalorder %s196, %s198
    %p205 = scmp.eq.s32.totalorder %s20, 3
    %p206 = por %p204, %p205
    %p207 = scmp.ne.s32.totalorder %s198, %s199
    %p208 = scmp.eq.s32.totalorder %s20, 0
    %p209 = por %p207, %p208
    %p210 = scmp.ne.s32.totalorder %s198, %s199
    %p211 = scmp.eq.s32.totalorder %s21, 3
    %p212 = por %p210, %p211
    %p214 = scmp.ne.s32.totalorder %s199, %s213
    %p215 = scmp.eq.s32.totalorder %s21, 0
    %p216 = por %p214, %p215
    %s217 = ssub.s32 %s15, %s22
    %p218 = scmp.eq.s32.totalorder %s217, 0
    %s220 = sadd.s32 %s219, 1
    %s221 = scalar_select %p218, %s219, %s220
    %p224 = pneg %p218
    %p225 = scmp.eq.s32.totalorder %s15, 3
    %p226 = por %p224, %p225
    %p227 = scmp.ne.s32.totalorder %s219, %s222
    %p228 = scmp.eq.s32.totalorder %s15, 0
    %p229 = por %p227, %p228
    %p230 = scmp.ne.s32.totalorder %s219, %s222
    %p231 = scmp.eq.s32.totalorder %s20, 3
    %p232 = por %p230, %p231
    %p233 = scmp.ne.s32.totalorder %s222, %s223
    %p234 = scmp.eq.s32.totalorder %s20, 0
    %p235 = por %p233, %p234
    %p236 = scmp.ne.s32.totalorder %s222, %s223
    %p237 = scmp.eq.s32.totalorder %s21, 3
    %p238 = por %p236, %p237
    %p240 = scmp.ne.s32.totalorder %s223, %s239
    %p241 = scmp.eq.s32.totalorder %s21, 0
    %p242 = por %p240, %p241
    %p243 = scmp.le.s32.totalorder 1, %s15
    %p244 = scmp.lt.s32.totalorder %s15, 5
    %p245 = pnand %p243, %p244
    %p246 = pneg %p245
    // Predicated region
    $region9: #{tpu_custom_call.1} parent=5 // pred_check
      _
    $region10: #{tpu_custom_call.1} parent=5 // pred_check_branch
      %248 = sbr.rel (%p245) target = $region12
    $region11: #{tpu_custom_call.1} parent=5 // pred_region
      %s249 = ssub.s32 %s15, 1
      // Predicated region
      $region13: #{tpu_custom_call.1} parent=11 // pred_check
        %p250 = pneg %p62
      $region14: #{tpu_custom_call.1} parent=11 // pred_check_branch
        %252 = sbr.rel (%p250) target = $region16
      $region15: #{tpu_custom_call.1} parent=11 // pred_region
        _
      $region16: #{tpu_custom_call.1} parent=11 // pred_fallthru
        _
      // Predicated region
      $region17: #{tpu_custom_call.1} parent=11 // pred_check
        %p253 = pneg %p83
      $region18: #{tpu_custom_call.1} parent=11 // pred_check_branch
        %255 = sbr.rel (%p253) target = $region20
      $region19: #{tpu_custom_call.1} parent=11 // pred_region
        _
      $region20: #{tpu_custom_call.1} parent=11 // pred_fallthru
        _
      // Predicated region
      $region21: #{tpu_custom_call.1} parent=11 // pred_check
        %p256 = pneg %p104
      $region22: #{tpu_custom_call.1} parent=11 // pred_check_branch
        %258 = sbr.rel (%p256) target = $region24
      $region23: #{tpu_custom_call.1} parent=11 // pred_region
        _
      $region24: #{tpu_custom_call.1} parent=11 // pred_fallthru
        _
      // Predicated region
      $region25: #{tpu_custom_call.1} parent=11 // pred_check
        %p259 = pneg %p125
      $region26: #{tpu_custom_call.1} parent=11 // pred_check_branch
        %261 = sbr.rel (%p259) target = $region28
      $region27: #{tpu_custom_call.1} parent=11 // pred_region
        _
      $region28: #{tpu_custom_call.1} parent=11 // pred_fallthru
        _
      // Predicated region
      $region29: #{tpu_custom_call.1} parent=11 // pred_check
        %p262 = pneg %p146
      $region30: #{tpu_custom_call.1} parent=11 // pred_check_branch
        %264 = sbr.rel (%p262) target = $region32
      $region31: #{tpu_custom_call.1} parent=11 // pred_region
        _
      $region32: #{tpu_custom_call.1} parent=11 // pred_fallthru
        _
      // Predicated region
      $region33: #{tpu_custom_call.1} parent=11 // pred_check
        %p265 = pneg %p167
      $region34: #{tpu_custom_call.1} parent=11 // pred_check_branch
        %267 = sbr.rel (%p265) target = $region36
      $region35: #{tpu_custom_call.1} parent=11 // pred_region
        _
      $region36: #{tpu_custom_call.1} parent=11 // pred_fallthru
        _
      // Predicated region
      $region37: #{tpu_custom_call.1} parent=11 // pred_check
        %p268 = pneg %p188
      $region38: #{tpu_custom_call.1} parent=11 // pred_check_branch
        %270 = sbr.rel (%p268) target = $region40
      $region39: #{tpu_custom_call.1} parent=11 // pred_region
        _
      $region40: #{tpu_custom_call.1} parent=11 // pred_fallthru
        _
      // Predicated region
      $region41: #{tpu_custom_call.1} parent=11 // pred_check
        %p271 = pneg %p209
      $region42: #{tpu_custom_call.1} parent=11 // pred_check_branch
        %273 = sbr.rel (%p271) target = $region44
      $region43: #{tpu_custom_call.1} parent=11 // pred_region
        _
      $region44: #{tpu_custom_call.1} parent=11 // pred_fallthru
        _
    $region12: #{tpu_custom_call.1} parent=5 // pred_fallthru
      _
    %p274 = scmp.lt.s32.totalorder %s15, 4
    // Predicated region
    $region45: #{tpu_custom_call.1} parent=5 // pred_check
      %p275 = pneg %p274
    $region46: #{tpu_custom_call.1} parent=5 // pred_check_branch
      %277 = sbr.rel (%p275) target = $region48
    $region47: #{tpu_custom_call.1} parent=5 // pred_region
      // Predicated region
      $region49: #{tpu_custom_call.1} parent=47 // pred_check
        %p278 = pneg %p35
      $region50: #{tpu_custom_call.1} parent=47 // pred_check_branch
        %280 = sbr.rel (%p278) target = $region52
      $region51: #{tpu_custom_call.1} parent=47 // pred_region
        %s281 = smul.u32 64, %s15
        %p282 = scmp.lt.s32.totalorder %s281, 255
        %s283 = scalar_select %p282, %s281, 255
        %s284 = smul.addr %s283, 4
        %s285 = scalar_lea.vmem %s0, %s284
        %s286 = smul.u32 64, %s15
      $region52: #{tpu_custom_call.1} parent=47 // pred_fallthru
        _
    $region48: #{tpu_custom_call.1} parent=5 // pred_fallthru
      _
    %p287 = scmp.le.s32.totalorder 1, %s15
    %p288 = scmp.lt.s32.totalorder %s15, 5
    %p289 = pnand %p287, %p288
    %p290 = pneg %p289
    // Predicated region
    $region53: #{tpu_custom_call.1} parent=5 // pred_check
      _
    $region54: #{tpu_custom_call.1} parent=5 // pred_check_branch
      %292 = sbr.rel (%p289) target = $region56
    $region55: #{tpu_custom_call.1} parent=5 // pred_region
      %s293 = ssub.s32 %s15, 1
      %s294 = smul.u32 64, %s20
      %p295 = scmp.lt.s32.totalorder %s294, 255
      %s296 = scalar_select %p295, %s294, 255
      %s297 = smul.addr %s296, 4
      %s298 = scalar_lea.vmem %s0, %s297
      %p299 = pneg %p41
      %p300 = pneg %p38
      %p301 = pneg %p62
      %p302 = pneg %p59
      %p303 = pneg %p83
      %p304 = pneg %p80
      %p305 = pneg %p104
      %p306 = pneg %p101
      %p307 = pneg %p125
      %p308 = pneg %p122
      %p309 = pneg %p146
      %p310 = pneg %p143
      %p311 = pneg %p167
      %p312 = pneg %p164
      %p313 = pneg %p188
      %p314 = pneg %p185
      %p315 = pneg %p209
      %p316 = pneg %p206
      %p317 = pneg %p235
      %p318 = pneg %p232
      %s319 = smul.u32 64, %s20
      %p320 = scmp.lt.s32.totalorder %s319, 255
      %s321 = scalar_select %p320, %s319, 255
      %s322 = smul.addr %s321, 8
      %s323 = scalar_lea.vmem %s9, %s322
      %s324 = smul.u32 64, %s20
      %p325 = scmp.lt.s32.totalorder %s324, 255
      %s326 = scalar_select %p325, %s324, 255
      %s327 = smul.addr %s326, 4
      %s328 = scalar_lea.vmem %s0, %s327
      %s329 = smul.u32 64, %s20
      %s330 = smul.u32 64, %s20
      %p331 = scmp.lt.s32.totalorder %s330, 255
      %s332 = scalar_select %p331, %s330, 255
      %s333 = smul.addr %s332, 8
      %s334 = scalar_lea.vmem %s9, %s333
      %s335 = smul.u32 64, %s20
      %v337 = vld [vmem:[%s328] sm:$0xf]
      %v338 = vld [vmem:[%s328 + $0x4] sm:$0xf]
      %v339 = vld [vmem:[%s328 + $0x8] sm:$0xf]
      %v340 = vld [vmem:[%s328 + $0xc] sm:$0xf]
      %v341 = vld [vmem:[%s328 + $0x10] sm:$0xf]
      %v342 = vld [vmem:[%s328 + $0x14] sm:$0xf]
      %v343 = vld [vmem:[%s328 + $0x18] sm:$0xf]
      %v344 = vld [vmem:[%s328 + $0x1c] sm:$0xf]
      %v345 = vld [vmem:[%s328 + $0x20] sm:$0xf]
      %v346 = vld [vmem:[%s328 + $0x24] sm:$0xf]
      %v347 = vld [vmem:[%s328 + $0x28] sm:$0xf]
      %v348 = vld [vmem:[%s328 + $0x2c] sm:$0xf]
      %v349 = vld [vmem:[%s328 + $0x30] sm:$0xf]
      %v350 = vld [vmem:[%s328 + $0x34] sm:$0xf]
      %v351 = vld [vmem:[%s328 + $0x38] sm:$0xf]
      %v352 = vld [vmem:[%s328 + $0x3c] sm:$0xf]
      %v353 = vld [vmem:[%s328 + $0x40] sm:$0xf]
      %v354 = vld [vmem:[%s328 + $0x44] sm:$0xf]
      %v355 = vld [vmem:[%s328 + $0x48] sm:$0xf]
      %v356 = vld [vmem:[%s328 + $0x4c] sm:$0xf]
      %v357 = vld [vmem:[%s328 + $0x50] sm:$0xf]
      %v358 = vld [vmem:[%s328 + $0x54] sm:$0xf]
      %v359 = vld [vmem:[%s328 + $0x58] sm:$0xf]
      %v360 = vld [vmem:[%s328 + $0x5c] sm:$0xf]
      %v361 = vld [vmem:[%s328 + $0x60] sm:$0xf]
      %v362 = vld [vmem:[%s328 + $0x64] sm:$0xf]
      %v363 = vld [vmem:[%s328 + $0x68] sm:$0xf]
      %v364 = vld [vmem:[%s328 + $0x6c] sm:$0xf]
      %v365 = vld [vmem:[%s328 + $0x70] sm:$0xf]
      %v366 = vld [vmem:[%s328 + $0x74] sm:$0xf]
      %v367 = vld [vmem:[%s328 + $0x78] sm:$0xf]
      %v368 = vld [vmem:[%s328 + $0x7c] sm:$0xf]
      %v369 = vld [vmem:[%s328 + $0x80] sm:$0xf]
      %v370 = vld [vmem:[%s328 + $0x84] sm:$0xf]
      %v371 = vld [vmem:[%s328 + $0x88] sm:$0xf]
      %v372 = vld [vmem:[%s328 + $0x8c] sm:$0xf]
      %v373 = vld [vmem:[%s328 + $0x90] sm:$0xf]
      %v374 = vld [vmem:[%s328 + $0x94] sm:$0xf]
      %v375 = vld [vmem:[%s328 + $0x98] sm:$0xf]
      %v376 = vld [vmem:[%s328 + $0x9c] sm:$0xf]
      %v377 = vld [vmem:[%s328 + $0xa0] sm:$0xf]
      %v378 = vld [vmem:[%s328 + $0xa4] sm:$0xf]
      %v379 = vld [vmem:[%s328 + $0xa8] sm:$0xf]
      %v380 = vld [vmem:[%s328 + $0xac] sm:$0xf]
      %v381 = vld [vmem:[%s328 + $0xb0] sm:$0xf]
      %v382 = vld [vmem:[%s328 + $0xb4] sm:$0xf]
      %v383 = vld [vmem:[%s328 + $0xb8] sm:$0xf]
      %v384 = vld [vmem:[%s328 + $0xbc] sm:$0xf]
      %v385 = vld [vmem:[%s328 + $0xc0] sm:$0xf]
      %v386 = vld [vmem:[%s328 + $0xc4] sm:$0xf]
      %v387 = vld [vmem:[%s328 + $0xc8] sm:$0xf]
      %v388 = vld [vmem:[%s328 + $0xcc] sm:$0xf]
      %v389 = vld [vmem:[%s328 + $0xd0] sm:$0xf]
      %v390 = vld [vmem:[%s328 + $0xd4] sm:$0xf]
      %v391 = vld [vmem:[%s328 + $0xd8] sm:$0xf]
      %v392 = vld [vmem:[%s328 + $0xdc] sm:$0xf]
      %v393 = vld [vmem:[%s328 + $0xe0] sm:$0xf]
      %v394 = vld [vmem:[%s328 + $0xe4] sm:$0xf]
      %v395 = vld [vmem:[%s328 + $0xe8] sm:$0xf]
      %v396 = vld [vmem:[%s328 + $0xec] sm:$0xf]
      %v397 = vld [vmem:[%s328 + $0xf0] sm:$0xf]
      %v398 = vld [vmem:[%s328 + $0xf4] sm:$0xf]
      %v399 = vld [vmem:[%s328 + $0xf8] sm:$0xf]
      %v400 = vld [vmem:[%s328 + $0xfc] sm:$0xf]
      %v401 = vld [vmem:[%s1] sm:$0xf]
      %v402 = vld [vmem:[%s1 + $0x4] sm:$0xf]
      %v403 = vld [vmem:[%s2] sm:$0x1]
      %v405 = vlaneseq
      %v406 = vshrl.u32 %v405, 7
      %v407 = vsub.s32 0, %v406
      %v408 = vrot.slane %v403, %v407
      %v474 = vunpack.c.l.b16 %v337
      %v475 = vunpack.c.l.b16 %v338
      %v476 = vunpack.c.l.b16 %v339
      %v477 = vunpack.c.l.b16 %v340
      %v478 = vunpack.c.l.b16 %v341
      %v479 = vunpack.c.l.b16 %v342
      %v480 = vunpack.c.l.b16 %v343
      %v481 = vunpack.c.l.b16 %v344
      %v482 = vunpack.c.l.b16 %v345
      %v483 = vunpack.c.l.b16 %v346
      %v484 = vunpack.c.l.b16 %v347
      %v485 = vunpack.c.l.b16 %v348
      %v486 = vunpack.c.l.b16 %v349
      %v487 = vunpack.c.l.b16 %v350
      %v488 = vunpack.c.l.b16 %v351
      %v489 = vunpack.c.l.b16 %v352
      %v490 = vunpack.c.l.b16 %v353
      %v491 = vunpack.c.l.b16 %v354
      %v492 = vunpack.c.l.b16 %v355
      %v493 = vunpack.c.l.b16 %v356
      %v494 = vunpack.c.l.b16 %v357
      %v495 = vunpack.c.l.b16 %v358
      %v496 = vunpack.c.l.b16 %v359
      %v497 = vunpack.c.l.b16 %v360
      %v498 = vunpack.c.l.b16 %v361
      %v499 = vunpack.c.l.b16 %v362
      %v500 = vunpack.c.l.b16 %v363
      %v501 = vunpack.c.l.b16 %v364
      %v502 = vunpack.c.l.b16 %v365
      %v503 = vunpack.c.l.b16 %v366
      %v504 = vunpack.c.l.b16 %v367
      %v505 = vunpack.c.l.b16 %v368
      %v506 = vunpack.c.l.b16 %v369
      %v507 = vunpack.c.l.b16 %v370
      %v508 = vunpack.c.l.b16 %v371
      %v509 = vunpack.c.l.b16 %v372
      %v510 = vunpack.c.l.b16 %v373
      %v511 = vunpack.c.l.b16 %v374
      %v512 = vunpack.c.l.b16 %v375
      %v513 = vunpack.c.l.b16 %v376
      %v514 = vunpack.c.l.b16 %v377
      %v515 = vunpack.c.l.b16 %v378
      %v516 = vunpack.c.l.b16 %v379
      %v517 = vunpack.c.l.b16 %v380
      %v518 = vunpack.c.l.b16 %v381
      %v519 = vunpack.c.l.b16 %v382
      %v520 = vunpack.c.l.b16 %v383
      %v521 = vunpack.c.l.b16 %v384
      %v522 = vunpack.c.l.b16 %v385
      %v523 = vunpack.c.l.b16 %v386
      %v524 = vunpack.c.l.b16 %v387
      %v525 = vunpack.c.l.b16 %v388
      %v526 = vunpack.c.l.b16 %v389
      %v527 = vunpack.c.l.b16 %v390
      %v528 = vunpack.c.l.b16 %v391
      %v529 = vunpack.c.l.b16 %v392
      %v530 = vunpack.c.l.b16 %v393
      %v531 = vunpack.c.l.b16 %v394
      %v532 = vunpack.c.l.b16 %v395
      %v533 = vunpack.c.l.b16 %v396
      %v534 = vunpack.c.l.b16 %v397
      %v535 = vunpack.c.l.b16 %v398
      %v536 = vunpack.c.l.b16 %v399
      %v537 = vunpack.c.l.b16 %v400
      %v538 = vpack.c.b16 %v475, %v474
      %v539 = vpack.c.b16 %v477, %v476
      %v540 = vpack.c.b16 %v479, %v478
      %v541 = vpack.c.b16 %v481, %v480
      %v542 = vpack.c.b16 %v483, %v482
      %v543 = vpack.c.b16 %v485, %v484
      %v544 = vpack.c.b16 %v487, %v486
      %v545 = vpack.c.b16 %v489, %v488
      %v546 = vpack.c.b16 %v491, %v490
      %v547 = vpack.c.b16 %v493, %v492
      %v548 = vpack.c.b16 %v495, %v494
      %v549 = vpack.c.b16 %v497, %v496
      %v550 = vpack.c.b16 %v499, %v498
      %v551 = vpack.c.b16 %v501, %v500
      %v552 = vpack.c.b16 %v503, %v502
      %v553 = vpack.c.b16 %v505, %v504
      %v554 = vpack.c.b16 %v507, %v506
      %v555 = vpack.c.b16 %v509, %v508
      %v556 = vpack.c.b16 %v511, %v510
      %v557 = vpack.c.b16 %v513, %v512
      %v558 = vpack.c.b16 %v515, %v514
      %v559 = vpack.c.b16 %v517, %v516
      %v560 = vpack.c.b16 %v519, %v518
      %v561 = vpack.c.b16 %v521, %v520
      %v562 = vpack.c.b16 %v523, %v522
      %v563 = vpack.c.b16 %v525, %v524
      %v564 = vpack.c.b16 %v527, %v526
      %v565 = vpack.c.b16 %v529, %v528
      %v566 = vpack.c.b16 %v531, %v530
      %v567 = vpack.c.b16 %v533, %v532
      %v568 = vpack.c.b16 %v535, %v534
      %v569 = vpack.c.b16 %v537, %v536
      %v572 = vunpack.c.l.b16 %v401
      %v573 = vunpack.c.l.b16 %v402
      %v574 = vpack.c.b16 %v573, %v572
      %vm576 = vcmask 130048
      %v578 = vsel %vm576, %v538, 0
      %v581 = vsel %vm576, %v539, 0
      %v584 = vsel %vm576, %v540, 0
      %v587 = vsel %vm576, %v541, 0
      %v590 = vsel %vm576, %v542, 0
      %v593 = vsel %vm576, %v543, 0
      %v596 = vsel %vm576, %v544, 0
      %v599 = vsel %vm576, %v545, 0
      %v602 = vsel %vm576, %v546, 0
      %v605 = vsel %vm576, %v547, 0
      %v608 = vsel %vm576, %v548, 0
      %v611 = vsel %vm576, %v549, 0
      %v614 = vsel %vm576, %v550, 0
      %v617 = vsel %vm576, %v551, 0
      %v620 = vsel %vm576, %v552, 0
      %v623 = vsel %vm576, %v553, 0
      %v626 = vsel %vm576, %v554, 0
      %v629 = vsel %vm576, %v555, 0
      %v632 = vsel %vm576, %v556, 0
      %v635 = vsel %vm576, %v557, 0
      %v638 = vsel %vm576, %v558, 0
      %v641 = vsel %vm576, %v559, 0
      %v644 = vsel %vm576, %v560, 0
      %v647 = vsel %vm576, %v561, 0
      %v650 = vsel %vm576, %v562, 0
      %v653 = vsel %vm576, %v563, 0
      %v656 = vsel %vm576, %v564, 0
      %v659 = vsel %vm576, %v565, 0
      %v662 = vsel %vm576, %v566, 0
      %v665 = vsel %vm576, %v567, 0
      %v668 = vsel %vm576, %v568, 0
      %v671 = vsel %vm576, %v569, 0
      %673 = vmatprep.subr.bf16.mxu0 0
      %674 = vmatpush1.bf16.msra.mxu0 %v574
      %675 = vmatprep.subr.bf16.mxu0 0
      %676 = vmatpush1.bf16.msra.mxu0 0
      %677 = vmatprep.subr.bf16.mxu0 0
      %678 = vmatpush1.bf16.msra.mxu0 0
      %679 = vmatprep.subr.bf16.mxu0 0
      %680 = vmatpush1.bf16.msra.mxu0 0
      %681 = vmatprep.subr.bf16.mxu0 0
      %682 = vmatpush1.bf16.msra.mxu0 0
      %683 = vmatprep.subr.bf16.mxu0 0
      %684 = vmatpush1.bf16.msra.mxu0 0
      %685 = vmatprep.subr.bf16.mxu0 0
      %686 = vmatpush1.bf16.msra.mxu0 0
      %687 = vmatprep.subr.bf16.mxu0 0
      %688 = vmatpush1.bf16.msra.mxu0 0
      %689 = vmatprep.subr.bf16.mxu0 0
      %690 = vmatpush1.bf16.msra.mxu0 0
      %691 = vmatprep.subr.bf16.mxu0 0
      %692 = vmatpush1.bf16.msra.mxu0 0
      %693 = vmatprep.subr.bf16.mxu0 0
      %694 = vmatpush1.bf16.msra.mxu0 0
      %695 = vmatprep.subr.bf16.mxu0 0
      %696 = vmatpush1.bf16.msra.mxu0 0
      %697 = vmatprep.subr.bf16.mxu0 0
      %698 = vmatpush1.bf16.msra.mxu0 0
      %699 = vmatprep.subr.bf16.mxu0 0
      %700 = vmatpush1.bf16.msra.mxu0 0
      %701 = vmatprep.subr.bf16.mxu0 0
      %702 = vmatpush1.bf16.msra.mxu0 0
      %703 = vmatprep.subr.bf16.mxu0 0
      %704 = vmatpush1.bf16.msra.mxu0 0
      %705 = vmatprep.mubr.bf16.mxu0 0
      %706 = vmatmul.mubr.bf16.gmra.mrb[0].mxu0 %v578
      %v707 = vpop.f32.mrb[0].mxu0
      %v708 = vadd.f32 %v408, %v707
      %v709 = vpop.f32.mrb[0].mxu0
      %v710 = vpop.f32.mrb[0].mxu0
      %v711 = vadd.f32 %v408, %v710
      %v712 = vpop.f32.mrb[0].mxu0
      %713 = vmatprep.mubr.bf16.mxu0 0
      %714 = vmatmul.mubr.bf16.gmra.mrb[0].mxu0 %v581
      %v715 = vpop.f32.mrb[0].mxu0
      %v716 = vadd.f32 %v408, %v715
      %v717 = vpop.f32.mrb[0].mxu0
      %v718 = vpop.f32.mrb[0].mxu0
      %v719 = vadd.f32 %v408, %v718
      %v720 = vpop.f32.mrb[0].mxu0
      %721 = vmatprep.mubr.bf16.mxu0 0
      %722 = vmatmul.mubr.bf16.gmra.mrb[0].mxu0 %v584
      %v723 = vpop.f32.mrb[0].mxu0
      %v724 = vadd.f32 %v408, %v723
      %v725 = vpop.f32.mrb[0].mxu0
      %v726 = vpop.f32.mrb[0].mxu0
      %v727 = vadd.f32 %v408, %v726
      %v728 = vpop.f32.mrb[0].mxu0
      %729 = vmatprep.mubr.bf16.mxu0 0
      %730 = vmatmul.mubr.bf16.gmra.mrb[0].mxu0 %v587
      %v731 = vpop.f32.mrb[0].mxu0
      %v732 = vadd.f32 %v408, %v731
      %v733 = vpop.f32.mrb[0].mxu0
      %v734 = vpop.f32.mrb[0].mxu0
      %v735 = vadd.f32 %v408, %v734
      %v736 = vpop.f32.mrb[0].mxu0
      %737 = vmatprep.mubr.bf16.mxu0 0
      %738 = vmatmul.mubr.bf16.gmra.mrb[0].mxu0 %v590
      %v739 = vpop.f32.mrb[0].mxu0
      %v740 = vadd.f32 %v408, %v739
      %v741 = vpop.f32.mrb[0].mxu0
      %v742 = vpop.f32.mrb[0].mxu0
      %v743 = vadd.f32 %v408, %v742
      %v744 = vpop.f32.mrb[0].mxu0
      %745 = vmatprep.mubr.bf16.mxu0 0
      %746 = vmatmul.mubr.bf16.gmra.mrb[0].mxu0 %v593
      %v747 = vpop.f32.mrb[0].mxu0
      %v748 = vadd.f32 %v408, %v747
      %v749 = vpop.f32.mrb[0].mxu0
      %v750 = vpop.f32.mrb[0].mxu0
      %v751 = vadd.f32 %v408, %v750
      %v752 = vpop.f32.mrb[0].mxu0
      %753 = vmatprep.mubr.bf16.mxu0 0
      %754 = vmatmul.mubr.bf16.gmra.mrb[0].mxu0 %v596
      %v755 = vpop.f32.mrb[0].mxu0
      %v756 = vadd.f32 %v408, %v755
      %v757 = vpop.f32.mrb[0].mxu0
      %v758 = vpop.f32.mrb[0].mxu0
      %v759 = vadd.f32 %v408, %v758
      %v760 = vpop.f32.mrb[0].mxu0
      %761 = vmatprep.mubr.bf16.mxu0 0
      %762 = vmatmul.mubr.bf16.gmra.mrb[0].mxu0 %v599
      %v763 = vpop.f32.mrb[0].mxu0
      %v764 = vadd.f32 %v408, %v763
      %v765 = vpop.f32.mrb[0].mxu0
      %v766 = vpop.f32.mrb[0].mxu0
      %v767 = vadd.f32 %v408, %v766
      %v768 = vpop.f32.mrb[0].mxu0
      %769 = vmatprep.mubr.bf16.mxu0 0
      %770 = vmatmul.mubr.bf16.gmra.mrb[0].mxu0 %v602
      %v771 = vpop.f32.mrb[0].mxu0
      %v772 = vadd.f32 %v408, %v771
      %v773 = vpop.f32.mrb[0].mxu0
      %v774 = vpop.f32.mrb[0].mxu0
      %v775 = vadd.f32 %v408, %v774
      %v776 = vpop.f32.mrb[0].mxu0
      %777 = vmatprep.mubr.bf16.mxu0 0
      %778 = vmatmul.mubr.bf16.gmra.mrb[0].mxu0 %v605
      %v779 = vpop.f32.mrb[0].mxu0
      %v780 = vadd.f32 %v408, %v779
      %v781 = vpop.f32.mrb[0].mxu0
      %v782 = vpop.f32.mrb[0].mxu0
      %v783 = vadd.f32 %v408, %v782
      %v784 = vpop.f32.mrb[0].mxu0
      %785 = vmatprep.mubr.bf16.mxu0 0
      %786 = vmatmul.mubr.bf16.gmra.mrb[0].mxu0 %v608
      %v787 = vpop.f32.mrb[0].mxu0
      %v788 = vadd.f32 %v408, %v787
      %v789 = vpop.f32.mrb[0].mxu0
      %v790 = vpop.f32.mrb[0].mxu0
      %v791 = vadd.f32 %v408, %v790
      %v792 = vpop.f32.mrb[0].mxu0
      %793 = vmatprep.mubr.bf16.mxu0 0
      %794 = vmatmul.mubr.bf16.gmra.mrb[0].mxu0 %v611
      %v795 = vpop.f32.mrb[0].mxu0
      %v796 = vadd.f32 %v408, %v795
      %v797 = vpop.f32.mrb[0].mxu0
      %v798 = vpop.f32.mrb[0].mxu0
      %v799 = vadd.f32 %v408, %v798
      %v800 = vpop.f32.mrb[0].mxu0
      %801 = vmatprep.mubr.bf16.mxu0 0
      %802 = vmatmul.mubr.bf16.gmra.mrb[0].mxu0 %v614
      %v803 = vpop.f32.mrb[0].mxu0
      %v804 = vadd.f32 %v408, %v803
      %v805 = vpop.f32.mrb[0].mxu0
      %v806 = vpop.f32.mrb[0].mxu0
      %v807 = vadd.f32 %v408, %v806
      %v808 = vpop.f32.mrb[0].mxu0
      %809 = vmatprep.mubr.bf16.mxu0 0
      %810 = vmatmul.mubr.bf16.gmra.mrb[0].mxu0 %v617
      %v811 = vpop.f32.mrb[0].mxu0
      %v812 = vadd.f32 %v408, %v811
      %v813 = vpop.f32.mrb[0].mxu0
      %v814 = vpop.f32.mrb[0].mxu0
      %v815 = vadd.f32 %v408, %v814
      %v816 = vpop.f32.mrb[0].mxu0
      %817 = vmatprep.mubr.bf16.mxu0 0
      %818 = vmatmul.mubr.bf16.gmra.mrb[0].mxu0 %v620
      %v819 = vpop.f32.mrb[0].mxu0
      %v820 = vadd.f32 %v408, %v819
      %v821 = vpop.f32.mrb[0].mxu0
      %v822 = vpop.f32.mrb[0].mxu0
      %v823 = vadd.f32 %v408, %v822
      %v824 = vpop.f32.mrb[0].mxu0
      %825 = vmatprep.mubr.bf16.mxu0 0
      %826 = vmatmul.mubr.bf16.gmra.mrb[0].mxu0 %v623
      %v827 = vpop.f32.mrb[0].mxu0
      %v828 = vadd.f32 %v408, %v827
      %v829 = vpop.f32.mrb[0].mxu0
      %v830 = vpop.f32.mrb[0].mxu0
      %v831 = vadd.f32 %v408, %v830
      %v832 = vpop.f32.mrb[0].mxu0
      %833 = vmatprep.mubr.bf16.mxu0 0
      %834 = vmatmul.mubr.bf16.gmra.mrb[0].mxu0 %v626
      %v835 = vpop.f32.mrb[0].mxu0
      %v836 = vadd.f32 %v408, %v835
      %v837 = vpop.f32.mrb[0].mxu0
      %v838 = vpop.f32.mrb[0].mxu0
      %v839 = vadd.f32 %v408, %v838
      %v840 = vpop.f32.mrb[0].mxu0
      %841 = vmatprep.mubr.bf16.mxu0 0
      %842 = vmatmul.mubr.bf16.gmra.mrb[0].mxu0 %v629
      %v843 = vpop.f32.mrb[0].mxu0
      %v844 = vadd.f32 %v408, %v843
      %v845 = vpop.f32.mrb[0].mxu0
      %v846 = vpop.f32.mrb[0].mxu0
      %v847 = vadd.f32 %v408, %v846
      %v848 = vpop.f32.mrb[0].mxu0
      %849 = vmatprep.mubr.bf16.mxu0 0
      %850 = vmatmul.mubr.bf16.gmra.mrb[0].mxu0 %v632
      %v851 = vpop.f32.mrb[0].mxu0
      %v852 = vadd.f32 %v408, %v851
      %v853 = vpop.f32.mrb[0].mxu0
      %v854 = vpop.f32.mrb[0].mxu0
      %v855 = vadd.f32 %v408, %v854
      %v856 = vpop.f32.mrb[0].mxu0
      %857 = vmatprep.mubr.bf16.mxu0 0
      %858 = vmatmul.mubr.bf16.gmra.mrb[0].mxu0 %v635
      %v859 = vpop.f32.mrb[0].mxu0
      %v860 = vadd.f32 %v408, %v859
      %v861 = vpop.f32.mrb[0].mxu0
      %v862 = vpop.f32.mrb[0].mxu0
      %v863 = vadd.f32 %v408, %v862
      %v864 = vpop.f32.mrb[0].mxu0
      %865 = vmatprep.mubr.bf16.mxu0 0
      %866 = vmatmul.mubr.bf16.gmra.mrb[0].mxu0 %v638
      %v867 = vpop.f32.mrb[0].mxu0
      %v868 = vadd.f32 %v408, %v867
      %v869 = vpop.f32.mrb[0].mxu0
      %v870 = vpop.f32.mrb[0].mxu0
      %v871 = vadd.f32 %v408, %v870
      %v872 = vpop.f32.mrb[0].mxu0
      %873 = vmatprep.mubr.bf16.mxu0 0
      %874 = vmatmul.mubr.bf16.gmra.mrb[0].mxu0 %v641
      %v875 = vpop.f32.mrb[0].mxu0
      %v876 = vadd.f32 %v408, %v875
      %v877 = vpop.f32.mrb[0].mxu0
      %v878 = vpop.f32.mrb[0].mxu0
      %v879 = vadd.f32 %v408, %v878
      %v880 = vpop.f32.mrb[0].mxu0
      %881 = vmatprep.mubr.bf16.mxu0 0
      %882 = vmatmul.mubr.bf16.gmra.mrb[0].mxu0 %v644
      %v883 = vpop.f32.mrb[0].mxu0
      %v884 = vadd.f32 %v408, %v883
      %v885 = vpop.f32.mrb[0].mxu0
      %v886 = vpop.f32.mrb[0].mxu0
      %v887 = vadd.f32 %v408, %v886
      %v888 = vpop.f32.mrb[0].mxu0
      %889 = vmatprep.mubr.bf16.mxu0 0
      %890 = vmatmul.mubr.bf16.gmra.mrb[0].mxu0 %v647
      %v891 = vpop.f32.mrb[0].mxu0
      %v892 = vadd.f32 %v408, %v891
      %v893 = vpop.f32.mrb[0].mxu0
      %v894 = vpop.f32.mrb[0].mxu0
      %v895 = vadd.f32 %v408, %v894
      %v896 = vpop.f32.mrb[0].mxu0
      %897 = vmatprep.mubr.bf16.mxu0 0
      %898 = vmatmul.mubr.bf16.gmra.mrb[0].mxu0 %v650
      %v899 = vpop.f32.mrb[0].mxu0
      %v900 = vadd.f32 %v408, %v899
      %v901 = vpop.f32.mrb[0].mxu0
      %v902 = vpop.f32.mrb[0].mxu0
      %v903 = vadd.f32 %v408, %v902
      %v904 = vpop.f32.mrb[0].mxu0
      %905 = vmatprep.mubr.bf16.mxu0 0
      %906 = vmatmul.mubr.bf16.gmra.mrb[0].mxu0 %v653
      %v907 = vpop.f32.mrb[0].mxu0
      %v908 = vadd.f32 %v408, %v907
      %v909 = vpop.f32.mrb[0].mxu0
      %v910 = vpop.f32.mrb[0].mxu0
      %v911 = vadd.f32 %v408, %v910
      %v912 = vpop.f32.mrb[0].mxu0
      %913 = vmatprep.mubr.bf16.mxu0 0
      %914 = vmatmul.mubr.bf16.gmra.mrb[0].mxu0 %v656
      %v915 = vpop.f32.mrb[0].mxu0
      %v916 = vadd.f32 %v408, %v915
      %v917 = vpop.f32.mrb[0].mxu0
      %v918 = vpop.f32.mrb[0].mxu0
      %v919 = vadd.f32 %v408, %v918
      %v920 = vpop.f32.mrb[0].mxu0
      %921 = vmatprep.mubr.bf16.mxu0 0
      %922 = vmatmul.mubr.bf16.gmra.mrb[0].mxu0 %v659
      %v923 = vpop.f32.mrb[0].mxu0
      %v924 = vadd.f32 %v408, %v923
      %v925 = vpop.f32.mrb[0].mxu0
      %v926 = vpop.f32.mrb[0].mxu0
      %v927 = vadd.f32 %v408, %v926
      %v928 = vpop.f32.mrb[0].mxu0
      %929 = vmatprep.mubr.bf16.mxu0 0
      %930 = vmatmul.mubr.bf16.gmra.mrb[0].mxu0 %v662
      %v931 = vpop.f32.mrb[0].mxu0
      %v932 = vadd.f32 %v408, %v931
      %v933 = vpop.f32.mrb[0].mxu0
      %v934 = vpop.f32.mrb[0].mxu0
      %v935 = vadd.f32 %v408, %v934
      %v936 = vpop.f32.mrb[0].mxu0
      %937 = vmatprep.mubr.bf16.mxu0 0
      %938 = vmatmul.mubr.bf16.gmra.mrb[0].mxu0 %v665
      %v939 = vpop.f32.mrb[0].mxu0
      %v940 = vadd.f32 %v408, %v939
      %v941 = vpop.f32.mrb[0].mxu0
      %v942 = vpop.f32.mrb[0].mxu0
      %v943 = vadd.f32 %v408, %v942
      %v944 = vpop.f32.mrb[0].mxu0
      %945 = vmatprep.mubr.bf16.mxu0 0
      %946 = vmatmul.mubr.bf16.gmra.mrb[0].mxu0 %v668
      %v947 = vpop.f32.mrb[0].mxu0
      %v948 = vadd.f32 %v408, %v947
      %v949 = vpop.f32.mrb[0].mxu0
      %v950 = vpop.f32.mrb[0].mxu0
      %v951 = vadd.f32 %v408, %v950
      %v952 = vpop.f32.mrb[0].mxu0
      %953 = vmatprep.mubr.bf16.mxu0 0
      %954 = vmatmul.mubr.bf16.gmra.mrb[0].mxu0 %v671
      %v955 = vpop.f32.mrb[0].mxu0
      %v956 = vadd.f32 %v408, %v955
      %v957 = vpop.f32.mrb[0].mxu0
      %v958 = vpop.f32.mrb[0].mxu0
      %v959 = vadd.f32 %v408, %v958
      %v960 = vpop.f32.mrb[0].mxu0
      %961 = vdwg.mxu0
      %v962 = vmax.f32 %v708, 0.0
      %v963 = vmax.f32 %v711, 0.0
      %v964 = vmax.f32 %v716, 0.0
      %v965 = vmax.f32 %v719, 0.0
      %v966 = vmax.f32 %v724, 0.0
      %v967 = vmax.f32 %v727, 0.0
      %v968 = vmax.f32 %v732, 0.0
      %v969 = vmax.f32 %v735, 0.0
      %v970 = vmax.f32 %v740, 0.0
      %v971 = vmax.f32 %v743, 0.0
      %v972 = vmax.f32 %v748, 0.0
      %v973 = vmax.f32 %v751, 0.0
      %v974 = vmax.f32 %v756, 0.0
      %v975 = vmax.f32 %v759, 0.0
      %v976 = vmax.f32 %v764, 0.0
      %v977 = vmax.f32 %v767, 0.0
      %v978 = vmax.f32 %v772, 0.0
      %v979 = vmax.f32 %v775, 0.0
      %v980 = vmax.f32 %v780, 0.0
      %v981 = vmax.f32 %v783, 0.0
      %v982 = vmax.f32 %v788, 0.0
      %v983 = vmax.f32 %v791, 0.0
      %v984 = vmax.f32 %v796, 0.0
      %v985 = vmax.f32 %v799, 0.0
      %v986 = vmax.f32 %v804, 0.0
      %v987 = vmax.f32 %v807, 0.0
      %v988 = vmax.f32 %v812, 0.0
      %v989 = vmax.f32 %v815, 0.0
      %v990 = vmax.f32 %v820, 0.0
      %v991 = vmax.f32 %v823, 0.0
      %v992 = vmax.f32 %v828, 0.0
      %v993 = vmax.f32 %v831, 0.0
      %v994 = vmax.f32 %v836, 0.0
      %v995 = vmax.f32 %v839, 0.0
      %v996 = vmax.f32 %v844, 0.0
      %v997 = vmax.f32 %v847, 0.0
      %v998 = vmax.f32 %v852, 0.0
      %v999 = vmax.f32 %v855, 0.0
      %v1000 = vmax.f32 %v860, 0.0
      %v1001 = vmax.f32 %v863, 0.0
      %v1002 = vmax.f32 %v868, 0.0
      %v1003 = vmax.f32 %v871, 0.0
      %v1004 = vmax.f32 %v876, 0.0
      %v1005 = vmax.f32 %v879, 0.0
      %v1006 = vmax.f32 %v884, 0.0
      %v1007 = vmax.f32 %v887, 0.0
      %v1008 = vmax.f32 %v892, 0.0
      %v1009 = vmax.f32 %v895, 0.0
      %v1010 = vmax.f32 %v900, 0.0
      %v1011 = vmax.f32 %v903, 0.0
      %v1012 = vmax.f32 %v908, 0.0
      %v1013 = vmax.f32 %v911, 0.0
      %v1014 = vmax.f32 %v916, 0.0
      %v1015 = vmax.f32 %v919, 0.0
      %v1016 = vmax.f32 %v924, 0.0
      %v1017 = vmax.f32 %v927, 0.0
      %v1018 = vmax.f32 %v932, 0.0
      %v1019 = vmax.f32 %v935, 0.0
      %v1020 = vmax.f32 %v940, 0.0
      %v1021 = vmax.f32 %v943, 0.0
      %v1022 = vmax.f32 %v948, 0.0
      %v1023 = vmax.f32 %v951, 0.0
      %v1024 = vmax.f32 %v956, 0.0
      %v1025 = vmax.f32 %v959, 0.0
      %v1026 = vpack.c.bf16 %v963, %v962
      %v1027 = vpack.c.bf16 %v965, %v964
      %v1028 = vpack.c.bf16 %v967, %v966
      %v1029 = vpack.c.bf16 %v969, %v968
      %v1030 = vpack.c.bf16 %v971, %v970
      %v1031 = vpack.c.bf16 %v973, %v972
      %v1032 = vpack.c.bf16 %v975, %v974
      %v1033 = vpack.c.bf16 %v977, %v976
      %v1034 = vpack.c.bf16 %v979, %v978
      %v1035 = vpack.c.bf16 %v981, %v980
      %v1036 = vpack.c.bf16 %v983, %v982
      %v1037 = vpack.c.bf16 %v985, %v984
      %v1038 = vpack.c.bf16 %v987, %v986
      %v1039 = vpack.c.bf16 %v989, %v988
      %v1040 = vpack.c.bf16 %v991, %v990
      %v1041 = vpack.c.bf16 %v993, %v992
      %v1042 = vpack.c.bf16 %v995, %v994
      %v1043 = vpack.c.bf16 %v997, %v996
      %v1044 = vpack.c.bf16 %v999, %v998
      %v1045 = vpack.c.bf16 %v1001, %v1000
      %v1046 = vpack.c.bf16 %v1003, %v1002
      %v1047 = vpack.c.bf16 %v1005, %v1004
      %v1048 = vpack.c.bf16 %v1007, %v1006
      %v1049 = vpack.c.bf16 %v1009, %v1008
      %v1050 = vpack.c.bf16 %v1011, %v1010
      %v1051 = vpack.c.bf16 %v1013, %v1012
      %v1052 = vpack.c.bf16 %v1015, %v1014
      %v1053 = vpack.c.bf16 %v1017, %v1016
      %v1054 = vpack.c.bf16 %v1019, %v1018
      %v1055 = vpack.c.bf16 %v1021, %v1020
      %v1056 = vpack.c.bf16 %v1023, %v1022
      %v1057 = vpack.c.bf16 %v1025, %v1024
      %v1058 = vld [vmem:[%s3] sm:$0xf]
      %v1059 = vld [vmem:[%s3 + $0x4] sm:$0xf]
      %v1060 = vld [vmem:[%s3 + $0x8] sm:$0xf]
      %v1061 = vld [vmem:[%s3 + $0xc] sm:$0xf]
      %v1062 = vld [vmem:[%s3 + $0x10] sm:$0xf]
      %v1063 = vld [vmem:[%s3 + $0x14] sm:$0xf]
      %v1064 = vld [vmem:[%s3 + $0x18] sm:$0xf]
      %v1065 = vld [vmem:[%s3 + $0x1c] sm:$0xf]
      %v1066 = vld [vmem:[%s3 + $0x20] sm:$0xf]
      %v1067 = vld [vmem:[%s3 + $0x24] sm:$0xf]
      %v1068 = vld [vmem:[%s3 + $0x28] sm:$0xf]
      %v1069 = vld [vmem:[%s3 + $0x2c] sm:$0xf]
      %v1070 = vld [vmem:[%s3 + $0x30] sm:$0xf]
      %v1071 = vld [vmem:[%s3 + $0x34] sm:$0xf]
      %v1072 = vld [vmem:[%s3 + $0x38] sm:$0xf]
      %v1073 = vld [vmem:[%s3 + $0x3c] sm:$0xf]
      %v1074 = vld [vmem:[%s4] sm:$0x1]
      %v1076 = vlaneseq
      %v1077 = vshrl.u32 %v1076, 7
      %v1078 = vsub.s32 0, %v1077
      %v1079 = vrot.slane %v1074, %v1078
      %v1097 = vunpack.c.l.b16 %v1058
      %v1098 = vunpack.c.l.b16 %v1059
      %v1099 = vunpack.c.l.b16 %v1060
      %v1100 = vunpack.c.l.b16 %v1061
      %v1101 = vunpack.c.l.b16 %v1062
      %v1102 = vunpack.c.l.b16 %v1063
      %v1103 = vunpack.c.l.b16 %v1064
      %v1104 = vunpack.c.l.b16 %v1065
      %v1105 = vunpack.c.l.b16 %v1066
      %v1106 = vunpack.c.l.b16 %v1067
      %v1107 = vunpack.c.l.b16 %v1068
      %v1108 = vunpack.c.l.b16 %v1069
      %v1109 = vunpack.c.l.b16 %v1070
      %v1110 = vunpack.c.l.b16 %v1071
      %v1111 = vunpack.c.l.b16 %v1072
      %v1112 = vunpack.c.l.b16 %v1073
      %v1113 = vpack.c.b16 %v1098, %v1097
      %v1114 = vpack.c.b16 %v1100, %v1099
      %v1115 = vpack.c.b16 %v1102, %v1101
      %v1116 = vpack.c.b16 %v1104, %v1103
      %v1117 = vpack.c.b16 %v1106, %v1105
      %v1118 = vpack.c.b16 %v1108, %v1107
      %v1119 = vpack.c.b16 %v1110, %v1109
      %v1120 = vpack.c.b16 %v1112, %v1111
      %1129 = vmatprep.subr.bf16.mxu0 0
      %1130 = vmatpush1.bf16.msra.mxu0 %v1113
      %1131 = vmatprep.subr.bf16.mxu0 0
      %1132 = vmatpush1.bf16.msra.mxu0 %v1114
      %1133 = vmatprep.subr.bf16.mxu0 0
      %1134 = vmatpush1.bf16.msra.mxu0 %v1115
      %1135 = vmatprep.subr.bf16.mxu0 0
      %1136 = vmatpush1.bf16.msra.mxu0 %v1116
      %1137 = vmatprep.subr.bf16.mxu0 0
      %1138 = vmatpush1.bf16.msra.mxu0 %v1117
      %1139 = vmatprep.subr.bf16.mxu0 0
      %1140 = vmatpush1.bf16.msra.mxu0 %v1118
      %1141 = vmatprep.subr.bf16.mxu0 0
      %1142 = vmatpush1.bf16.msra.mxu0 %v1119
      %1143 = vmatprep.subr.bf16.mxu0 0
      %1144 = vmatpush1.bf16.msra.mxu0 %v1120
      %1145 = vmatprep.subr.bf16.mxu0 0
      %1146 = vmatpush1.bf16.msra.mxu0 0
      %1147 = vmatprep.subr.bf16.mxu0 0
      %1148 = vmatpush1.bf16.msra.mxu0 0
      %1149 = vmatprep.subr.bf16.mxu0 0
      %1150 = vmatpush1.bf16.msra.mxu0 0
      %1151 = vmatprep.subr.bf16.mxu0 0
      %1152 = vmatpush1.bf16.msra.mxu0 0
      %1153 = vmatprep.subr.bf16.mxu0 0
      %1154 = vmatpush1.bf16.msra.mxu0 0
      %1155 = vmatprep.subr.bf16.mxu0 0
      %1156 = vmatpush1.bf16.msra.mxu0 0
      %1157 = vmatprep.subr.bf16.mxu0 0
      %1158 = vmatpush1.bf16.msra.mxu0 0
      %1159 = vmatprep.subr.bf16.mxu0 0
      %1160 = vmatpush1.bf16.msra.mxu0 0
      %1161 = vmatprep.mubr.bf16.mxu0 0
      %1162 = vmatmul.mubr.bf16.gmra.mrb[0].mxu0 %v1026
      %v1163 = vpop.f32.mrb[0].mxu0
      %v1164 = vadd.f32 %v1079, %v1163
      %v1165 = vpop.f32.mrb[0].mxu0
      %v1166 = vpop.f32.mrb[0].mxu0
      %v1167 = vadd.f32 %v1079, %v1166
      %v1168 = vpop.f32.mrb[0].mxu0
      %1169 = vmatprep.mubr.bf16.mxu0 0
      %1170 = vmatmul.mubr.bf16.gmra.mrb[0].mxu0 %v1027
      %v1171 = vpop.f32.mrb[0].mxu0
      %v1172 = vadd.f32 %v1079, %v1171
      %v1173 = vpop.f32.mrb[0].mxu0
      %v1174 = vpop.f32.mrb[0].mxu0
      %v1175 = vadd.f32 %v1079, %v1174
      %v1176 = vpop.f32.mrb[0].mxu0
      %1177 = vmatprep.mubr.bf16.mxu0 0
      %1178 = vmatmul.mubr.bf16.gmra.mrb[0].mxu0 %v1028
      %v1179 = vpop.f32.mrb[0].mxu0
      %v1180 = vadd.f32 %v1079, %v1179
      %v1181 = vpop.f32.mrb[0].mxu0
      %v1182 = vpop.f32.mrb[0].mxu0
      %v1183 = vadd.f32 %v1079, %v1182
      %v1184 = vpop.f32.mrb[0].mxu0
      %1185 = vmatprep.mubr.bf16.mxu0 0
      %1186 = vmatmul.mubr.bf16.gmra.mrb[0].mxu0 %v1029
      %v1187 = vpop.f32.mrb[0].mxu0
      %v1188 = vadd.f32 %v1079, %v1187
      %v1189 = vpop.f32.mrb[0].mxu0
      %v1190 = vpop.f32.mrb[0].mxu0
      %v1191 = vadd.f32 %v1079, %v1190
      %v1192 = vpop.f32.mrb[0].mxu0
      %1193 = vmatprep.mubr.bf16.mxu0 0
      %1194 = vmatmul.mubr.bf16.gmra.mrb[0].mxu0 %v1030
      %v1195 = vpop.f32.mrb[0].mxu0
      %v1196 = vadd.f32 %v1079, %v1195
      %v1197 = vpop.f32.mrb[0].mxu0
      %v1198 = vpop.f32.mrb[0].mxu0
      %v1199 = vadd.f32 %v1079, %v1198
      %v1200 = vpop.f32.mrb[0].mxu0
      %1201 = vmatprep.mubr.bf16.mxu0 0
      %1202 = vmatmul.mubr.bf16.gmra.mrb[0].mxu0 %v1031
      %v1203 = vpop.f32.mrb[0].mxu0
      %v1204 = vadd.f32 %v1079, %v1203
      %v1205 = vpop.f32.mrb[0].mxu0
      %v1206 = vpop.f32.mrb[0].mxu0
      %v1207 = vadd.f32 %v1079, %v1206
      %v1208 = vpop.f32.mrb[0].mxu0
      %1209 = vmatprep.mubr.bf16.mxu0 0
      %1210 = vmatmul.mubr.bf16.gmra.mrb[0].mxu0 %v1032
      %v1211 = vpop.f32.mrb[0].mxu0
      %v1212 = vadd.f32 %v1079, %v1211
      %v1213 = vpop.f32.mrb[0].mxu0
      %v1214 = vpop.f32.mrb[0].mxu0
      %v1215 = vadd.f32 %v1079, %v1214
      %v1216 = vpop.f32.mrb[0].mxu0
      %1217 = vmatprep.mubr.bf16.mxu0 0
      %1218 = vmatmul.mubr.bf16.gmra.mrb[0].mxu0 %v1033
      %v1219 = vpop.f32.mrb[0].mxu0
      %v1220 = vadd.f32 %v1079, %v1219
      %v1221 = vpop.f32.mrb[0].mxu0
      %v1222 = vpop.f32.mrb[0].mxu0
      %v1223 = vadd.f32 %v1079, %v1222
      %v1224 = vpop.f32.mrb[0].mxu0
      %1225 = vmatprep.mubr.bf16.mxu0 0
      %1226 = vmatmul.mubr.bf16.gmra.mrb[0].mxu0 %v1034
      %v1227 = vpop.f32.mrb[0].mxu0
      %v1228 = vadd.f32 %v1079, %v1227
      %v1229 = vpop.f32.mrb[0].mxu0
      %v1230 = vpop.f32.mrb[0].mxu0
      %v1231 = vadd.f32 %v1079, %v1230
      %v1232 = vpop.f32.mrb[0].mxu0
      %1233 = vmatprep.mubr.bf16.mxu0 0
      %1234 = vmatmul.mubr.bf16.gmra.mrb[0].mxu0 %v1035
      %v1235 = vpop.f32.mrb[0].mxu0
      %v1236 = vadd.f32 %v1079, %v1235
      %v1237 = vpop.f32.mrb[0].mxu0
      %v1238 = vpop.f32.mrb[0].mxu0
      %v1239 = vadd.f32 %v1079, %v1238
      %v1240 = vpop.f32.mrb[0].mxu0
      %1241 = vmatprep.mubr.bf16.mxu0 0
      %1242 = vmatmul.mubr.bf16.gmra.mrb[0].mxu0 %v1036
      %v1243 = vpop.f32.mrb[0].mxu0
      %v1244 = vadd.f32 %v1079, %v1243
      %v1245 = vpop.f32.mrb[0].mxu0
      %v1246 = vpop.f32.mrb[0].mxu0
      %v1247 = vadd.f32 %v1079, %v1246
      %v1248 = vpop.f32.mrb[0].mxu0
      %1249 = vmatprep.mubr.bf16.mxu0 0
      %1250 = vmatmul.mubr.bf16.gmra.mrb[0].mxu0 %v1037
      %v1251 = vpop.f32.mrb[0].mxu0
      %v1252 = vadd.f32 %v1079, %v1251
      %v1253 = vpop.f32.mrb[0].mxu0
      %v1254 = vpop.f32.mrb[0].mxu0
      %v1255 = vadd.f32 %v1079, %v1254
      %v1256 = vpop.f32.mrb[0].mxu0
      %1257 = vmatprep.mubr.bf16.mxu0 0
      %1258 = vmatmul.mubr.bf16.gmra.mrb[0].mxu0 %v1038
      %v1259 = vpop.f32.mrb[0].mxu0
      %v1260 = vadd.f32 %v1079, %v1259
      %v1261 = vpop.f32.mrb[0].mxu0
      %v1262 = vpop.f32.mrb[0].mxu0
      %v1263 = vadd.f32 %v1079, %v1262
      %v1264 = vpop.f32.mrb[0].mxu0
      %1265 = vmatprep.mubr.bf16.mxu0 0
      %1266 = vmatmul.mubr.bf16.gmra.mrb[0].mxu0 %v1039
      %v1267 = vpop.f32.mrb[0].mxu0
      %v1268 = vadd.f32 %v1079, %v1267
      %v1269 = vpop.f32.mrb[0].mxu0
      %v1270 = vpop.f32.mrb[0].mxu0
      %v1271 = vadd.f32 %v1079, %v1270
      %v1272 = vpop.f32.mrb[0].mxu0
      %1273 = vmatprep.mubr.bf16.mxu0 0
      %1274 = vmatmul.mubr.bf16.gmra.mrb[0].mxu0 %v1040
      %v1275 = vpop.f32.mrb[0].mxu0
      %v1276 = vadd.f32 %v1079, %v1275
      %v1277 = vpop.f32.mrb[0].mxu0
      %v1278 = vpop.f32.mrb[0].mxu0
      %v1279 = vadd.f32 %v1079, %v1278
      %v1280 = vpop.f32.mrb[0].mxu0
      %1281 = vmatprep.mubr.bf16.mxu0 0
      %1282 = vmatmul.mubr.bf16.gmra.mrb[0].mxu0 %v1041
      %v1283 = vpop.f32.mrb[0].mxu0
      %v1284 = vadd.f32 %v1079, %v1283
      %v1285 = vpop.f32.mrb[0].mxu0
      %v1286 = vpop.f32.mrb[0].mxu0
      %v1287 = vadd.f32 %v1079, %v1286
      %v1288 = vpop.f32.mrb[0].mxu0
      %1289 = vmatprep.mubr.bf16.mxu0 0
      %1290 = vmatmul.mubr.bf16.gmra.mrb[0].mxu0 %v1042
      %v1291 = vpop.f32.mrb[0].mxu0
      %v1292 = vadd.f32 %v1079, %v1291
      %v1293 = vpop.f32.mrb[0].mxu0
      %v1294 = vpop.f32.mrb[0].mxu0
      %v1295 = vadd.f32 %v1079, %v1294
      %v1296 = vpop.f32.mrb[0].mxu0
      %1297 = vmatprep.mubr.bf16.mxu0 0
      %1298 = vmatmul.mubr.bf16.gmra.mrb[0].mxu0 %v1043
      %v1299 = vpop.f32.mrb[0].mxu0
      %v1300 = vadd.f32 %v1079, %v1299
      %v1301 = vpop.f32.mrb[0].mxu0
      %v1302 = vpop.f32.mrb[0].mxu0
      %v1303 = vadd.f32 %v1079, %v1302
      %v1304 = vpop.f32.mrb[0].mxu0
      %1305 = vmatprep.mubr.bf16.mxu0 0
      %1306 = vmatmul.mubr.bf16.gmra.mrb[0].mxu0 %v1044
      %v1307 = vpop.f32.mrb[0].mxu0
      %v1308 = vadd.f32 %v1079, %v1307
      %v1309 = vpop.f32.mrb[0].mxu0
      %v1310 = vpop.f32.mrb[0].mxu0
      %v1311 = vadd.f32 %v1079, %v1310
      %v1312 = vpop.f32.mrb[0].mxu0
      %1313 = vmatprep.mubr.bf16.mxu0 0
      %1314 = vmatmul.mubr.bf16.gmra.mrb[0].mxu0 %v1045
      %v1315 = vpop.f32.mrb[0].mxu0
      %v1316 = vadd.f32 %v1079, %v1315
      %v1317 = vpop.f32.mrb[0].mxu0
      %v1318 = vpop.f32.mrb[0].mxu0
      %v1319 = vadd.f32 %v1079, %v1318
      %v1320 = vpop.f32.mrb[0].mxu0
      %1321 = vmatprep.mubr.bf16.mxu0 0
      %1322 = vmatmul.mubr.bf16.gmra.mrb[0].mxu0 %v1046
      %v1323 = vpop.f32.mrb[0].mxu0
      %v1324 = vadd.f32 %v1079, %v1323
      %v1325 = vpop.f32.mrb[0].mxu0
      %v1326 = vpop.f32.mrb[0].mxu0
      %v1327 = vadd.f32 %v1079, %v1326
      %v1328 = vpop.f32.mrb[0].mxu0
      %1329 = vmatprep.mubr.bf16.mxu0 0
      %1330 = vmatmul.mubr.bf16.gmra.mrb[0].mxu0 %v1047
      %v1331 = vpop.f32.mrb[0].mxu0
      %v1332 = vadd.f32 %v1079, %v1331
      %v1333 = vpop.f32.mrb[0].mxu0
      %v1334 = vpop.f32.mrb[0].mxu0
      %v1335 = vadd.f32 %v1079, %v1334
      %v1336 = vpop.f32.mrb[0].mxu0
      %1337 = vmatprep.mubr.bf16.mxu0 0
      %1338 = vmatmul.mubr.bf16.gmra.mrb[0].mxu0 %v1048
      %v1339 = vpop.f32.mrb[0].mxu0
      %v1340 = vadd.f32 %v1079, %v1339
      %v1341 = vpop.f32.mrb[0].mxu0
      %v1342 = vpop.f32.mrb[0].mxu0
      %v1343 = vadd.f32 %v1079, %v1342
      %v1344 = vpop.f32.mrb[0].mxu0
      %1345 = vmatprep.mubr.bf16.mxu0 0
      %1346 = vmatmul.mubr.bf16.gmra.mrb[0].mxu0 %v1049
      %v1347 = vpop.f32.mrb[0].mxu0
      %v1348 = vadd.f32 %v1079, %v1347
      %v1349 = vpop.f32.mrb[0].mxu0
      %v1350 = vpop.f32.mrb[0].mxu0
      %v1351 = vadd.f32 %v1079, %v1350
      %v1352 = vpop.f32.mrb[0].mxu0
      %1353 = vmatprep.mubr.bf16.mxu0 0
      %1354 = vmatmul.mubr.bf16.gmra.mrb[0].mxu0 %v1050
      %v1355 = vpop.f32.mrb[0].mxu0
      %v1356 = vadd.f32 %v1079, %v1355
      %v1357 = vpop.f32.mrb[0].mxu0
      %v1358 = vpop.f32.mrb[0].mxu0
      %v1359 = vadd.f32 %v1079, %v1358
      %v1360 = vpop.f32.mrb[0].mxu0
      %1361 = vmatprep.mubr.bf16.mxu0 0
      %1362 = vmatmul.mubr.bf16.gmra.mrb[0].mxu0 %v1051
      %v1363 = vpop.f32.mrb[0].mxu0
      %v1364 = vadd.f32 %v1079, %v1363
      %v1365 = vpop.f32.mrb[0].mxu0
      %v1366 = vpop.f32.mrb[0].mxu0
      %v1367 = vadd.f32 %v1079, %v1366
      %v1368 = vpop.f32.mrb[0].mxu0
      %1369 = vmatprep.mubr.bf16.mxu0 0
      %1370 = vmatmul.mubr.bf16.gmra.mrb[0].mxu0 %v1052
      %v1371 = vpop.f32.mrb[0].mxu0
      %v1372 = vadd.f32 %v1079, %v1371
      %v1373 = vpop.f32.mrb[0].mxu0
      %v1374 = vpop.f32.mrb[0].mxu0
      %v1375 = vadd.f32 %v1079, %v1374
      %v1376 = vpop.f32.mrb[0].mxu0
      %1377 = vmatprep.mubr.bf16.mxu0 0
      %1378 = vmatmul.mubr.bf16.gmra.mrb[0].mxu0 %v1053
      %v1379 = vpop.f32.mrb[0].mxu0
      %v1380 = vadd.f32 %v1079, %v1379
      %v1381 = vpop.f32.mrb[0].mxu0
      %v1382 = vpop.f32.mrb[0].mxu0
      %v1383 = vadd.f32 %v1079, %v1382
      %v1384 = vpop.f32.mrb[0].mxu0
      %1385 = vmatprep.mubr.bf16.mxu0 0
      %1386 = vmatmul.mubr.bf16.gmra.mrb[0].mxu0 %v1054
      %v1387 = vpop.f32.mrb[0].mxu0
      %v1388 = vadd.f32 %v1079, %v1387
      %v1389 = vpop.f32.mrb[0].mxu0
      %v1390 = vpop.f32.mrb[0].mxu0
      %v1391 = vadd.f32 %v1079, %v1390
      %v1392 = vpop.f32.mrb[0].mxu0
      %1393 = vmatprep.mubr.bf16.mxu0 0
      %1394 = vmatmul.mubr.bf16.gmra.mrb[0].mxu0 %v1055
      %v1395 = vpop.f32.mrb[0].mxu0
      %v1396 = vadd.f32 %v1079, %v1395
      %v1397 = vpop.f32.mrb[0].mxu0
      %v1398 = vpop.f32.mrb[0].mxu0
      %v1399 = vadd.f32 %v1079, %v1398
      %v1400 = vpop.f32.mrb[0].mxu0
      %1401 = vmatprep.mubr.bf16.mxu0 0
      %1402 = vmatmul.mubr.bf16.gmra.mrb[0].mxu0 %v1056
      %v1403 = vpop.f32.mrb[0].mxu0
      %v1404 = vadd.f32 %v1079, %v1403
      %v1405 = vpop.f32.mrb[0].mxu0
      %v1406 = vpop.f32.mrb[0].mxu0
      %v1407 = vadd.f32 %v1079, %v1406
      %v1408 = vpop.f32.mrb[0].mxu0
      %1409 = vmatprep.mubr.bf16.mxu0 0
      %1410 = vmatmul.mubr.bf16.gmra.mrb[0].mxu0 %v1057
      %v1411 = vpop.f32.mrb[0].mxu0
      %v1412 = vadd.f32 %v1079, %v1411
      %v1413 = vpop.f32.mrb[0].mxu0
      %v1414 = vpop.f32.mrb[0].mxu0
      %v1415 = vadd.f32 %v1079, %v1414
      %v1416 = vpop.f32.mrb[0].mxu0
      %1417 = vdwg.mxu0
      %v1418 = vmax.f32 %v1164, 0.0
      %v1419 = vmax.f32 %v1167, 0.0
      %v1420 = vmax.f32 %v1172, 0.0
      %v1421 = vmax.f32 %v1175, 0.0
      %v1422 = vmax.f32 %v1180, 0.0
      %v1423 = vmax.f32 %v1183, 0.0
      %v1424 = vmax.f32 %v1188, 0.0
      %v1425 = vmax.f32 %v1191, 0.0
      %v1426 = vmax.f32 %v1196, 0.0
      %v1427 = vmax.f32 %v1199, 0.0
      %v1428 = vmax.f32 %v1204, 0.0
      %v1429 = vmax.f32 %v1207, 0.0
      %v1430 = vmax.f32 %v1212, 0.0
      %v1431 = vmax.f32 %v1215, 0.0
      %v1432 = vmax.f32 %v1220, 0.0
      %v1433 = vmax.f32 %v1223, 0.0
      %v1434 = vmax.f32 %v1228, 0.0
      %v1435 = vmax.f32 %v1231, 0.0
      %v1436 = vmax.f32 %v1236, 0.0
      %v1437 = vmax.f32 %v1239, 0.0
      %v1438 = vmax.f32 %v1244, 0.0
      %v1439 = vmax.f32 %v1247, 0.0
      %v1440 = vmax.f32 %v1252, 0.0
      %v1441 = vmax.f32 %v1255, 0.0
      %v1442 = vmax.f32 %v1260, 0.0
      %v1443 = vmax.f32 %v1263, 0.0
      %v1444 = vmax.f32 %v1268, 0.0
      %v1445 = vmax.f32 %v1271, 0.0
      %v1446 = vmax.f32 %v1276, 0.0
      %v1447 = vmax.f32 %v1279, 0.0
      %v1448 = vmax.f32 %v1284, 0.0
      %v1449 = vmax.f32 %v1287, 0.0
      %v1450 = vmax.f32 %v1292, 0.0
      %v1451 = vmax.f32 %v1295, 0.0
      %v1452 = vmax.f32 %v1300, 0.0
      %v1453 = vmax.f32 %v1303, 0.0
      %v1454 = vmax.f32 %v1308, 0.0
      %v1455 = vmax.f32 %v1311, 0.0
      %v1456 = vmax.f32 %v1316, 0.0
      %v1457 = vmax.f32 %v1319, 0.0
      %v1458 = vmax.f32 %v1324, 0.0
      %v1459 = vmax.f32 %v1327, 0.0
      %v1460 = vmax.f32 %v1332, 0.0
      %v1461 = vmax.f32 %v1335, 0.0
      %v1462 = vmax.f32 %v1340, 0.0
      %v1463 = vmax.f32 %v1343, 0.0
      %v1464 = vmax.f32 %v1348, 0.0
      %v1465 = vmax.f32 %v1351, 0.0
      %v1466 = vmax.f32 %v1356, 0.0
      %v1467 = vmax.f32 %v1359, 0.0
      %v1468 = vmax.f32 %v1364, 0.0
      %v1469 = vmax.f32 %v1367, 0.0
      %v1470 = vmax.f32 %v1372, 0.0
      %v1471 = vmax.f32 %v1375, 0.0
      %v1472 = vmax.f32 %v1380, 0.0
      %v1473 = vmax.f32 %v1383, 0.0
      %v1474 = vmax.f32 %v1388, 0.0
      %v1475 = vmax.f32 %v1391, 0.0
      %v1476 = vmax.f32 %v1396, 0.0
      %v1477 = vmax.f32 %v1399, 0.0
      %v1478 = vmax.f32 %v1404, 0.0
      %v1479 = vmax.f32 %v1407, 0.0
      %v1480 = vmax.f32 %v1412, 0.0
      %v1481 = vmax.f32 %v1415, 0.0
      %v1482 = vpack.c.bf16 %v1419, %v1418
      %v1483 = vpack.c.bf16 %v1421, %v1420
      %v1484 = vpack.c.bf16 %v1423, %v1422
      %v1485 = vpack.c.bf16 %v1425, %v1424
      %v1486 = vpack.c.bf16 %v1427, %v1426
      %v1487 = vpack.c.bf16 %v1429, %v1428
      %v1488 = vpack.c.bf16 %v1431, %v1430
      %v1489 = vpack.c.bf16 %v1433, %v1432
      %v1490 = vpack.c.bf16 %v1435, %v1434
      %v1491 = vpack.c.bf16 %v1437, %v1436
      %v1492 = vpack.c.bf16 %v1439, %v1438
      %v1493 = vpack.c.bf16 %v1441, %v1440
      %v1494 = vpack.c.bf16 %v1443, %v1442
      %v1495 = vpack.c.bf16 %v1445, %v1444
      %v1496 = vpack.c.bf16 %v1447, %v1446
      %v1497 = vpack.c.bf16 %v1449, %v1448
      %v1498 = vpack.c.bf16 %v1451, %v1450
      %v1499 = vpack.c.bf16 %v1453, %v1452
      %v1500 = vpack.c.bf16 %v1455, %v1454
      %v1501 = vpack.c.bf16 %v1457, %v1456
      %v1502 = vpack.c.bf16 %v1459, %v1458
      %v1503 = vpack.c.bf16 %v1461, %v1460
      %v1504 = vpack.c.bf16 %v1463, %v1462
      %v1505 = vpack.c.bf16 %v1465, %v1464
      %v1506 = vpack.c.bf16 %v1467, %v1466
      %v1507 = vpack.c.bf16 %v1469, %v1468
      %v1508 = vpack.c.bf16 %v1471, %v1470
      %v1509 = vpack.c.bf16 %v1473, %v1472
      %v1510 = vpack.c.bf16 %v1475, %v1474
      %v1511 = vpack.c.bf16 %v1477, %v1476
      %v1512 = vpack.c.bf16 %v1479, %v1478
      %v1513 = vpack.c.bf16 %v1481, %v1480
      %v1514 = vld [vmem:[%s5] sm:$0xf]
      %v1515 = vld [vmem:[%s5 + $0x4] sm:$0xf]
      %v1516 = vld [vmem:[%s5 + $0x8] sm:$0xf]
      %v1517 = vld [vmem:[%s5 + $0xc] sm:$0xf]
      %v1518 = vld [vmem:[%s5 + $0x10] sm:$0xf]
      %v1519 = vld [vmem:[%s5 + $0x14] sm:$0xf]
      %v1520 = vld [vmem:[%s5 + $0x18] sm:$0xf]
      %v1521 = vld [vmem:[%s5 + $0x1c] sm:$0xf]
      %v1522 = vld [vmem:[%s5 + $0x20] sm:$0xf]
      %v1523 = vld [vmem:[%s5 + $0x24] sm:$0xf]
      %v1524 = vld [vmem:[%s5 + $0x28] sm:$0xf]
      %v1525 = vld [vmem:[%s5 + $0x2c] sm:$0xf]
      %v1526 = vld [vmem:[%s5 + $0x30] sm:$0xf]
      %v1527 = vld [vmem:[%s5 + $0x34] sm:$0xf]
      %v1528 = vld [vmem:[%s5 + $0x38] sm:$0xf]
      %v1529 = vld [vmem:[%s5 + $0x3c] sm:$0xf]
      %v1530 = vld [vmem:[%s6] sm:$0x1]
      %v1532 = vlaneseq
      %v1533 = vshrl.u32 %v1532, 7
      %v1534 = vsub.s32 0, %v1533
      %v1535 = vrot.slane %v1530, %v1534
      %v1553 = vunpack.c.l.b16 %v1514
      %v1554 = vunpack.c.l.b16 %v1515
      %v1555 = vunpack.c.l.b16 %v1516
      %v1556 = vunpack.c.l.b16 %v1517
      %v1557 = vunpack.c.l.b16 %v1518
      %v1558 = vunpack.c.l.b16 %v1519
      %v1559 = vunpack.c.l.b16 %v1520
      %v1560 = vunpack.c.l.b16 %v1521
      %v1561 = vunpack.c.l.b16 %v1522
      %v1562 = vunpack.c.l.b16 %v1523
      %v1563 = vunpack.c.l.b16 %v1524
      %v1564 = vunpack.c.l.b16 %v1525
      %v1565 = vunpack.c.l.b16 %v1526
      %v1566 = vunpack.c.l.b16 %v1527
      %v1567 = vunpack.c.l.b16 %v1528
      %v1568 = vunpack.c.l.b16 %v1529
      %v1569 = vpack.c.b16 %v1554, %v1553
      %v1570 = vpack.c.b16 %v1556, %v1555
      %v1571 = vpack.c.b16 %v1558, %v1557
      %v1572 = vpack.c.b16 %v1560, %v1559
      %v1573 = vpack.c.b16 %v1562, %v1561
      %v1574 = vpack.c.b16 %v1564, %v1563
      %v1575 = vpack.c.b16 %v1566, %v1565
      %v1576 = vpack.c.b16 %v1568, %v1567
      %1585 = vmatprep.subr.bf16.mxu0 0
      %1586 = vmatpush1.bf16.msra.mxu0 %v1569
      %1587 = vmatprep.subr.bf16.mxu0 0
      %1588 = vmatpush1.bf16.msra.mxu0 %v1570
      %1589 = vmatprep.subr.bf16.mxu0 0
      %1590 = vmatpush1.bf16.msra.mxu0 %v1571
      %1591 = vmatprep.subr.bf16.mxu0 0
      %1592 = vmatpush1.bf16.msra.mxu0 %v1572
      %1593 = vmatprep.subr.bf16.mxu0 0
      %1594 = vmatpush1.bf16.msra.mxu0 %v1573
      %1595 = vmatprep.subr.bf16.mxu0 0
      %1596 = vmatpush1.bf16.msra.mxu0 %v1574
      %1597 = vmatprep.subr.bf16.mxu0 0
      %1598 = vmatpush1.bf16.msra.mxu0 %v1575
      %1599 = vmatprep.subr.bf16.mxu0 0
      %1600 = vmatpush1.bf16.msra.mxu0 %v1576
      %1601 = vmatprep.subr.bf16.mxu0 0
      %1602 = vmatpush1.bf16.msra.mxu0 0
      %1603 = vmatprep.subr.bf16.mxu0 0
      %1604 = vmatpush1.bf16.msra.mxu0 0
      %1605 = vmatprep.subr.bf16.mxu0 0
      %1606 = vmatpush1.bf16.msra.mxu0 0
      %1607 = vmatprep.subr.bf16.mxu0 0
      %1608 = vmatpush1.bf16.msra.mxu0 0
      %1609 = vmatprep.subr.bf16.mxu0 0
      %1610 = vmatpush1.bf16.msra.mxu0 0
      %1611 = vmatprep.subr.bf16.mxu0 0
      %1612 = vmatpush1.bf16.msra.mxu0 0
      %1613 = vmatprep.subr.bf16.mxu0 0
      %1614 = vmatpush1.bf16.msra.mxu0 0
      %1615 = vmatprep.subr.bf16.mxu0 0
      %1616 = vmatpush1.bf16.msra.mxu0 0
      %1617 = vmatprep.mubr.bf16.mxu0 0
      %1618 = vmatmul.mubr.bf16.gmra.mrb[0].mxu0 %v1482
      %v1619 = vpop.f32.mrb[0].mxu0
      %v1620 = vadd.f32 %v1535, %v1619
      %v1621 = vpop.f32.mrb[0].mxu0
      %v1622 = vpop.f32.mrb[0].mxu0
      %v1623 = vadd.f32 %v1535, %v1622
      %v1624 = vpop.f32.mrb[0].mxu0
      %1625 = vmatprep.mubr.bf16.mxu0 0
      %1626 = vmatmul.mubr.bf16.gmra.mrb[0].mxu0 %v1483
      %v1627 = vpop.f32.mrb[0].mxu0
      %v1628 = vadd.f32 %v1535, %v1627
      %v1629 = vpop.f32.mrb[0].mxu0
      %v1630 = vpop.f32.mrb[0].mxu0
      %v1631 = vadd.f32 %v1535, %v1630
      %v1632 = vpop.f32.mrb[0].mxu0
      %1633 = vmatprep.mubr.bf16.mxu0 0
      %1634 = vmatmul.mubr.bf16.gmra.mrb[0].mxu0 %v1484
      %v1635 = vpop.f32.mrb[0].mxu0
      %v1636 = vadd.f32 %v1535, %v1635
      %v1637 = vpop.f32.mrb[0].mxu0
      %v1638 = vpop.f32.mrb[0].mxu0
      %v1639 = vadd.f32 %v1535, %v1638
      %v1640 = vpop.f32.mrb[0].mxu0
      %1641 = vmatprep.mubr.bf16.mxu0 0
      %1642 = vmatmul.mubr.bf16.gmra.mrb[0].mxu0 %v1485
      %v1643 = vpop.f32.mrb[0].mxu0
      %v1644 = vadd.f32 %v1535, %v1643
      %v1645 = vpop.f32.mrb[0].mxu0
      %v1646 = vpop.f32.mrb[0].mxu0
      %v1647 = vadd.f32 %v1535, %v1646
      %v1648 = vpop.f32.mrb[0].mxu0
      %1649 = vmatprep.mubr.bf16.mxu0 0
      %1650 = vmatmul.mubr.bf16.gmra.mrb[0].mxu0 %v1486
      %v1651 = vpop.f32.mrb[0].mxu0
      %v1652 = vadd.f32 %v1535, %v1651
      %v1653 = vpop.f32.mrb[0].mxu0
      %v1654 = vpop.f32.mrb[0].mxu0
      %v1655 = vadd.f32 %v1535, %v1654
      %v1656 = vpop.f32.mrb[0].mxu0
      %1657 = vmatprep.mubr.bf16.mxu0 0
      %1658 = vmatmul.mubr.bf16.gmra.mrb[0].mxu0 %v1487
      %v1659 = vpop.f32.mrb[0].mxu0
      %v1660 = vadd.f32 %v1535, %v1659
      %v1661 = vpop.f32.mrb[0].mxu0
      %v1662 = vpop.f32.mrb[0].mxu0
      %v1663 = vadd.f32 %v1535, %v1662
      %v1664 = vpop.f32.mrb[0].mxu0
      %1665 = vmatprep.mubr.bf16.mxu0 0
      %1666 = vmatmul.mubr.bf16.gmra.mrb[0].mxu0 %v1488
      %v1667 = vpop.f32.mrb[0].mxu0
      %v1668 = vadd.f32 %v1535, %v1667
      %v1669 = vpop.f32.mrb[0].mxu0
      %v1670 = vpop.f32.mrb[0].mxu0
      %v1671 = vadd.f32 %v1535, %v1670
      %v1672 = vpop.f32.mrb[0].mxu0
      %1673 = vmatprep.mubr.bf16.mxu0 0
      %1674 = vmatmul.mubr.bf16.gmra.mrb[0].mxu0 %v1489
      %v1675 = vpop.f32.mrb[0].mxu0
      %v1676 = vadd.f32 %v1535, %v1675
      %v1677 = vpop.f32.mrb[0].mxu0
      %v1678 = vpop.f32.mrb[0].mxu0
      %v1679 = vadd.f32 %v1535, %v1678
      %v1680 = vpop.f32.mrb[0].mxu0
      %1681 = vmatprep.mubr.bf16.mxu0 0
      %1682 = vmatmul.mubr.bf16.gmra.mrb[0].mxu0 %v1490
      %v1683 = vpop.f32.mrb[0].mxu0
      %v1684 = vadd.f32 %v1535, %v1683
      %v1685 = vpop.f32.mrb[0].mxu0
      %v1686 = vpop.f32.mrb[0].mxu0
      %v1687 = vadd.f32 %v1535, %v1686
      %v1688 = vpop.f32.mrb[0].mxu0
      %1689 = vmatprep.mubr.bf16.mxu0 0
      %1690 = vmatmul.mubr.bf16.gmra.mrb[0].mxu0 %v1491
      %v1691 = vpop.f32.mrb[0].mxu0
      %v1692 = vadd.f32 %v1535, %v1691
      %v1693 = vpop.f32.mrb[0].mxu0
      %v1694 = vpop.f32.mrb[0].mxu0
      %v1695 = vadd.f32 %v1535, %v1694
      %v1696 = vpop.f32.mrb[0].mxu0
      %1697 = vmatprep.mubr.bf16.mxu0 0
      %1698 = vmatmul.mubr.bf16.gmra.mrb[0].mxu0 %v1492
      %v1699 = vpop.f32.mrb[0].mxu0
      %v1700 = vadd.f32 %v1535, %v1699
      %v1701 = vpop.f32.mrb[0].mxu0
      %v1702 = vpop.f32.mrb[0].mxu0
      %v1703 = vadd.f32 %v1535, %v1702
      %v1704 = vpop.f32.mrb[0].mxu0
      %1705 = vmatprep.mubr.bf16.mxu0 0
      %1706 = vmatmul.mubr.bf16.gmra.mrb[0].mxu0 %v1493
      %v1707 = vpop.f32.mrb[0].mxu0
      %v1708 = vadd.f32 %v1535, %v1707
      %v1709 = vpop.f32.mrb[0].mxu0
      %v1710 = vpop.f32.mrb[0].mxu0
      %v1711 = vadd.f32 %v1535, %v1710
      %v1712 = vpop.f32.mrb[0].mxu0
      %1713 = vmatprep.mubr.bf16.mxu0 0
      %1714 = vmatmul.mubr.bf16.gmra.mrb[0].mxu0 %v1494
      %v1715 = vpop.f32.mrb[0].mxu0
      %v1716 = vadd.f32 %v1535, %v1715
      %v1717 = vpop.f32.mrb[0].mxu0
      %v1718 = vpop.f32.mrb[0].mxu0
      %v1719 = vadd.f32 %v1535, %v1718
      %v1720 = vpop.f32.mrb[0].mxu0
      %1721 = vmatprep.mubr.bf16.mxu0 0
      %1722 = vmatmul.mubr.bf16.gmra.mrb[0].mxu0 %v1495
      %v1723 = vpop.f32.mrb[0].mxu0
      %v1724 = vadd.f32 %v1535, %v1723
      %v1725 = vpop.f32.mrb[0].mxu0
      %v1726 = vpop.f32.mrb[0].mxu0
      %v1727 = vadd.f32 %v1535, %v1726
      %v1728 = vpop.f32.mrb[0].mxu0
      %1729 = vmatprep.mubr.bf16.mxu0 0
      %1730 = vmatmul.mubr.bf16.gmra.mrb[0].mxu0 %v1496
      %v1731 = vpop.f32.mrb[0].mxu0
      %v1732 = vadd.f32 %v1535, %v1731
      %v1733 = vpop.f32.mrb[0].mxu0
      %v1734 = vpop.f32.mrb[0].mxu0
      %v1735 = vadd.f32 %v1535, %v1734
      %v1736 = vpop.f32.mrb[0].mxu0
      %1737 = vmatprep.mubr.bf16.mxu0 0
      %1738 = vmatmul.mubr.bf16.gmra.mrb[0].mxu0 %v1497
      %v1739 = vpop.f32.mrb[0].mxu0
      %v1740 = vadd.f32 %v1535, %v1739
      %v1741 = vpop.f32.mrb[0].mxu0
      %v1742 = vpop.f32.mrb[0].mxu0
      %v1743 = vadd.f32 %v1535, %v1742
      %v1744 = vpop.f32.mrb[0].mxu0
      %1745 = vmatprep.mubr.bf16.mxu0 0
      %1746 = vmatmul.mubr.bf16.gmra.mrb[0].mxu0 %v1498
      %v1747 = vpop.f32.mrb[0].mxu0
      %v1748 = vadd.f32 %v1535, %v1747
      %v1749 = vpop.f32.mrb[0].mxu0
      %v1750 = vpop.f32.mrb[0].mxu0
      %v1751 = vadd.f32 %v1535, %v1750
      %v1752 = vpop.f32.mrb[0].mxu0
      %1753 = vmatprep.mubr.bf16.mxu0 0
      %1754 = vmatmul.mubr.bf16.gmra.mrb[0].mxu0 %v1499
      %v1755 = vpop.f32.mrb[0].mxu0
      %v1756 = vadd.f32 %v1535, %v1755
      %v1757 = vpop.f32.mrb[0].mxu0
      %v1758 = vpop.f32.mrb[0].mxu0
      %v1759 = vadd.f32 %v1535, %v1758
      %v1760 = vpop.f32.mrb[0].mxu0
      %1761 = vmatprep.mubr.bf16.mxu0 0
      %1762 = vmatmul.mubr.bf16.gmra.mrb[0].mxu0 %v1500
      %v1763 = vpop.f32.mrb[0].mxu0
      %v1764 = vadd.f32 %v1535, %v1763
      %v1765 = vpop.f32.mrb[0].mxu0
      %v1766 = vpop.f32.mrb[0].mxu0
      %v1767 = vadd.f32 %v1535, %v1766
      %v1768 = vpop.f32.mrb[0].mxu0
      %1769 = vmatprep.mubr.bf16.mxu0 0
      %1770 = vmatmul.mubr.bf16.gmra.mrb[0].mxu0 %v1501
      %v1771 = vpop.f32.mrb[0].mxu0
      %v1772 = vadd.f32 %v1535, %v1771
      %v1773 = vpop.f32.mrb[0].mxu0
      %v1774 = vpop.f32.mrb[0].mxu0
      %v1775 = vadd.f32 %v1535, %v1774
      %v1776 = vpop.f32.mrb[0].mxu0
      %1777 = vmatprep.mubr.bf16.mxu0 0
      %1778 = vmatmul.mubr.bf16.gmra.mrb[0].mxu0 %v1502
      %v1779 = vpop.f32.mrb[0].mxu0
      %v1780 = vadd.f32 %v1535, %v1779
      %v1781 = vpop.f32.mrb[0].mxu0
      %v1782 = vpop.f32.mrb[0].mxu0
      %v1783 = vadd.f32 %v1535, %v1782
      %v1784 = vpop.f32.mrb[0].mxu0
      %1785 = vmatprep.mubr.bf16.mxu0 0
      %1786 = vmatmul.mubr.bf16.gmra.mrb[0].mxu0 %v1503
      %v1787 = vpop.f32.mrb[0].mxu0
      %v1788 = vadd.f32 %v1535, %v1787
      %v1789 = vpop.f32.mrb[0].mxu0
      %v1790 = vpop.f32.mrb[0].mxu0
      %v1791 = vadd.f32 %v1535, %v1790
      %v1792 = vpop.f32.mrb[0].mxu0
      %1793 = vmatprep.mubr.bf16.mxu0 0
      %1794 = vmatmul.mubr.bf16.gmra.mrb[0].mxu0 %v1504
      %v1795 = vpop.f32.mrb[0].mxu0
      %v1796 = vadd.f32 %v1535, %v1795
      %v1797 = vpop.f32.mrb[0].mxu0
      %v1798 = vpop.f32.mrb[0].mxu0
      %v1799 = vadd.f32 %v1535, %v1798
      %v1800 = vpop.f32.mrb[0].mxu0
      %1801 = vmatprep.mubr.bf16.mxu0 0
      %1802 = vmatmul.mubr.bf16.gmra.mrb[0].mxu0 %v1505
      %v1803 = vpop.f32.mrb[0].mxu0
      %v1804 = vadd.f32 %v1535, %v1803
      %v1805 = vpop.f32.mrb[0].mxu0
      %v1806 = vpop.f32.mrb[0].mxu0
      %v1807 = vadd.f32 %v1535, %v1806
      %v1808 = vpop.f32.mrb[0].mxu0
      %1809 = vmatprep.mubr.bf16.mxu0 0
      %1810 = vmatmul.mubr.bf16.gmra.mrb[0].mxu0 %v1506
      %v1811 = vpop.f32.mrb[0].mxu0
      %v1812 = vadd.f32 %v1535, %v1811
      %v1813 = vpop.f32.mrb[0].mxu0
      %v1814 = vpop.f32.mrb[0].mxu0
      %v1815 = vadd.f32 %v1535, %v1814
      %v1816 = vpop.f32.mrb[0].mxu0
      %1817 = vmatprep.mubr.bf16.mxu0 0
      %1818 = vmatmul.mubr.bf16.gmra.mrb[0].mxu0 %v1507
      %v1819 = vpop.f32.mrb[0].mxu0
      %v1820 = vadd.f32 %v1535, %v1819
      %v1821 = vpop.f32.mrb[0].mxu0
      %v1822 = vpop.f32.mrb[0].mxu0
      %v1823 = vadd.f32 %v1535, %v1822
      %v1824 = vpop.f32.mrb[0].mxu0
      %1825 = vmatprep.mubr.bf16.mxu0 0
      %1826 = vmatmul.mubr.bf16.gmra.mrb[0].mxu0 %v1508
      %v1827 = vpop.f32.mrb[0].mxu0
      %v1828 = vadd.f32 %v1535, %v1827
      %v1829 = vpop.f32.mrb[0].mxu0
      %v1830 = vpop.f32.mrb[0].mxu0
      %v1831 = vadd.f32 %v1535, %v1830
      %v1832 = vpop.f32.mrb[0].mxu0
      %1833 = vmatprep.mubr.bf16.mxu0 0
      %1834 = vmatmul.mubr.bf16.gmra.mrb[0].mxu0 %v1509
      %v1835 = vpop.f32.mrb[0].mxu0
      %v1836 = vadd.f32 %v1535, %v1835
      %v1837 = vpop.f32.mrb[0].mxu0
      %v1838 = vpop.f32.mrb[0].mxu0
      %v1839 = vadd.f32 %v1535, %v1838
      %v1840 = vpop.f32.mrb[0].mxu0
      %1841 = vmatprep.mubr.bf16.mxu0 0
      %1842 = vmatmul.mubr.bf16.gmra.mrb[0].mxu0 %v1510
      %v1843 = vpop.f32.mrb[0].mxu0
      %v1844 = vadd.f32 %v1535, %v1843
      %v1845 = vpop.f32.mrb[0].mxu0
      %v1846 = vpop.f32.mrb[0].mxu0
      %v1847 = vadd.f32 %v1535, %v1846
      %v1848 = vpop.f32.mrb[0].mxu0
      %1849 = vmatprep.mubr.bf16.mxu0 0
      %1850 = vmatmul.mubr.bf16.gmra.mrb[0].mxu0 %v1511
      %v1851 = vpop.f32.mrb[0].mxu0
      %v1852 = vadd.f32 %v1535, %v1851
      %v1853 = vpop.f32.mrb[0].mxu0
      %v1854 = vpop.f32.mrb[0].mxu0
      %v1855 = vadd.f32 %v1535, %v1854
      %v1856 = vpop.f32.mrb[0].mxu0
      %1857 = vmatprep.mubr.bf16.mxu0 0
      %1858 = vmatmul.mubr.bf16.gmra.mrb[0].mxu0 %v1512
      %v1859 = vpop.f32.mrb[0].mxu0
      %v1860 = vadd.f32 %v1535, %v1859
      %v1861 = vpop.f32.mrb[0].mxu0
      %v1862 = vpop.f32.mrb[0].mxu0
      %v1863 = vadd.f32 %v1535, %v1862
      %v1864 = vpop.f32.mrb[0].mxu0
      %1865 = vmatprep.mubr.bf16.mxu0 0
      %1866 = vmatmul.mubr.bf16.gmra.mrb[0].mxu0 %v1513
      %v1867 = vpop.f32.mrb[0].mxu0
      %v1868 = vadd.f32 %v1535, %v1867
      %v1869 = vpop.f32.mrb[0].mxu0
      %v1870 = vpop.f32.mrb[0].mxu0
      %v1871 = vadd.f32 %v1535, %v1870
      %v1872 = vpop.f32.mrb[0].mxu0
      %1873 = vdwg.mxu0
      %v1874 = vmax.f32 %v1620, 0.0
      %v1875 = vmax.f32 %v1623, 0.0
      %v1876 = vmax.f32 %v1628, 0.0
      %v1877 = vmax.f32 %v1631, 0.0
      %v1878 = vmax.f32 %v1636, 0.0
      %v1879 = vmax.f32 %v1639, 0.0
      %v1880 = vmax.f32 %v1644, 0.0
      %v1881 = vmax.f32 %v1647, 0.0
      %v1882 = vmax.f32 %v1652, 0.0
      %v1883 = vmax.f32 %v1655, 0.0
      %v1884 = vmax.f32 %v1660, 0.0
      %v1885 = vmax.f32 %v1663, 0.0
      %v1886 = vmax.f32 %v1668, 0.0
      %v1887 = vmax.f32 %v1671, 0.0
      %v1888 = vmax.f32 %v1676, 0.0
      %v1889 = vmax.f32 %v1679, 0.0
      %v1890 = vmax.f32 %v1684, 0.0
      %v1891 = vmax.f32 %v1687, 0.0
      %v1892 = vmax.f32 %v1692, 0.0
      %v1893 = vmax.f32 %v1695, 0.0
      %v1894 = vmax.f32 %v1700, 0.0
      %v1895 = vmax.f32 %v1703, 0.0
      %v1896 = vmax.f32 %v1708, 0.0
      %v1897 = vmax.f32 %v1711, 0.0
      %v1898 = vmax.f32 %v1716, 0.0
      %v1899 = vmax.f32 %v1719, 0.0
      %v1900 = vmax.f32 %v1724, 0.0
      %v1901 = vmax.f32 %v1727, 0.0
      %v1902 = vmax.f32 %v1732, 0.0
      %v1903 = vmax.f32 %v1735, 0.0
      %v1904 = vmax.f32 %v1740, 0.0
      %v1905 = vmax.f32 %v1743, 0.0
      %v1906 = vmax.f32 %v1748, 0.0
      %v1907 = vmax.f32 %v1751, 0.0
      %v1908 = vmax.f32 %v1756, 0.0
      %v1909 = vmax.f32 %v1759, 0.0
      %v1910 = vmax.f32 %v1764, 0.0
      %v1911 = vmax.f32 %v1767, 0.0
      %v1912 = vmax.f32 %v1772, 0.0
      %v1913 = vmax.f32 %v1775, 0.0
      %v1914 = vmax.f32 %v1780, 0.0
      %v1915 = vmax.f32 %v1783, 0.0
      %v1916 = vmax.f32 %v1788, 0.0
      %v1917 = vmax.f32 %v1791, 0.0
      %v1918 = vmax.f32 %v1796, 0.0
      %v1919 = vmax.f32 %v1799, 0.0
      %v1920 = vmax.f32 %v1804, 0.0
      %v1921 = vmax.f32 %v1807, 0.0
      %v1922 = vmax.f32 %v1812, 0.0
      %v1923 = vmax.f32 %v1815, 0.0
      %v1924 = vmax.f32 %v1820, 0.0
      %v1925 = vmax.f32 %v1823, 0.0
      %v1926 = vmax.f32 %v1828, 0.0
      %v1927 = vmax.f32 %v1831, 0.0
      %v1928 = vmax.f32 %v1836, 0.0
      %v1929 = vmax.f32 %v1839, 0.0
      %v1930 = vmax.f32 %v1844, 0.0
      %v1931 = vmax.f32 %v1847, 0.0
      %v1932 = vmax.f32 %v1852, 0.0
      %v1933 = vmax.f32 %v1855, 0.0
      %v1934 = vmax.f32 %v1860, 0.0
      %v1935 = vmax.f32 %v1863, 0.0
      %v1936 = vmax.f32 %v1868, 0.0
      %v1937 = vmax.f32 %v1871, 0.0
      %v1938 = vpack.c.bf16 %v1875, %v1874
      %v1939 = vpack.c.bf16 %v1877, %v1876
      %v1940 = vpack.c.bf16 %v1879, %v1878
      %v1941 = vpack.c.bf16 %v1881, %v1880
      %v1942 = vpack.c.bf16 %v1883, %v1882
      %v1943 = vpack.c.bf16 %v1885, %v1884
      %v1944 = vpack.c.bf16 %v1887, %v1886
      %v1945 = vpack.c.bf16 %v1889, %v1888
      %v1946 = vpack.c.bf16 %v1891, %v1890
      %v1947 = vpack.c.bf16 %v1893, %v1892
      %v1948 = vpack.c.bf16 %v1895, %v1894
      %v1949 = vpack.c.bf16 %v1897, %v1896
      %v1950 = vpack.c.bf16 %v1899, %v1898
      %v1951 = vpack.c.bf16 %v1901, %v1900
      %v1952 = vpack.c.bf16 %v1903, %v1902
      %v1953 = vpack.c.bf16 %v1905, %v1904
      %v1954 = vpack.c.bf16 %v1907, %v1906
      %v1955 = vpack.c.bf16 %v1909, %v1908
      %v1956 = vpack.c.bf16 %v1911, %v1910
      %v1957 = vpack.c.bf16 %v1913, %v1912
      %v1958 = vpack.c.bf16 %v1915, %v1914
      %v1959 = vpack.c.bf16 %v1917, %v1916
      %v1960 = vpack.c.bf16 %v1919, %v1918
      %v1961 = vpack.c.bf16 %v1921, %v1920
      %v1962 = vpack.c.bf16 %v1923, %v1922
      %v1963 = vpack.c.bf16 %v1925, %v1924
      %v1964 = vpack.c.bf16 %v1927, %v1926
      %v1965 = vpack.c.bf16 %v1929, %v1928
      %v1966 = vpack.c.bf16 %v1931, %v1930
      %v1967 = vpack.c.bf16 %v1933, %v1932
      %v1968 = vpack.c.bf16 %v1935, %v1934
      %v1969 = vpack.c.bf16 %v1937, %v1936
      %v1970 = vld [vmem:[%s7] sm:$0xf]
      %v1971 = vld [vmem:[%s7 + $0x4] sm:$0xf]
      %v1972 = vld [vmem:[%s7 + $0x8] sm:$0xf]
      %v1973 = vld [vmem:[%s7 + $0xc] sm:$0xf]
      %v1974 = vld [vmem:[%s7 + $0x10] sm:$0xf]
      %v1975 = vld [vmem:[%s7 + $0x14] sm:$0xf]
      %v1976 = vld [vmem:[%s7 + $0x18] sm:$0xf]
      %v1977 = vld [vmem:[%s7 + $0x1c] sm:$0xf]
      %v1978 = vld [vmem:[%s7 + $0x20] sm:$0xf]
      %v1979 = vld [vmem:[%s7 + $0x24] sm:$0xf]
      %v1980 = vld [vmem:[%s7 + $0x28] sm:$0xf]
      %v1981 = vld [vmem:[%s7 + $0x2c] sm:$0xf]
      %v1982 = vld [vmem:[%s7 + $0x30] sm:$0xf]
      %v1983 = vld [vmem:[%s7 + $0x34] sm:$0xf]
      %v1984 = vld [vmem:[%s7 + $0x38] sm:$0xf]
      %v1985 = vld [vmem:[%s7 + $0x3c] sm:$0xf]
      %v1986 = vld [vmem:[%s8] sm:$0x1]
      %v1988 = vlaneseq
      %v1989 = vshrl.u32 %v1988, 7
      %v1990 = vsub.s32 0, %v1989
      %v1991 = vrot.slane %v1986, %v1990
      %v2009 = vunpack.c.l.b16 %v1970
      %v2010 = vunpack.c.l.b16 %v1971
      %v2011 = vunpack.c.l.b16 %v1972
      %v2012 = vunpack.c.l.b16 %v1973
      %v2013 = vunpack.c.l.b16 %v1974
      %v2014 = vunpack.c.l.b16 %v1975
      %v2015 = vunpack.c.l.b16 %v1976
      %v2016 = vunpack.c.l.b16 %v1977
      %v2017 = vunpack.c.l.b16 %v1978
      %v2018 = vunpack.c.l.b16 %v1979
      %v2019 = vunpack.c.l.b16 %v1980
      %v2020 = vunpack.c.l.b16 %v1981
      %v2021 = vunpack.c.l.b16 %v1982
      %v2022 = vunpack.c.l.b16 %v1983
      %v2023 = vunpack.c.l.b16 %v1984
      %v2024 = vunpack.c.l.b16 %v1985
      %v2025 = vpack.c.b16 %v2010, %v2009
      %v2026 = vpack.c.b16 %v2012, %v2011
      %v2027 = vpack.c.b16 %v2014, %v2013
      %v2028 = vpack.c.b16 %v2016, %v2015
      %v2029 = vpack.c.b16 %v2018, %v2017
      %v2030 = vpack.c.b16 %v2020, %v2019
      %v2031 = vpack.c.b16 %v2022, %v2021
      %v2032 = vpack.c.b16 %v2024, %v2023
      %2041 = vmatprep.subr.bf16.mxu0 0
      %2042 = vmatpush1.bf16.msra.mxu0 %v2025
      %2043 = vmatprep.subr.bf16.mxu0 0
      %2044 = vmatpush1.bf16.msra.mxu0 %v2026
      %2045 = vmatprep.subr.bf16.mxu0 0
      %2046 = vmatpush1.bf16.msra.mxu0 %v2027
      %2047 = vmatprep.subr.bf16.mxu0 0
      %2048 = vmatpush1.bf16.msra.mxu0 %v2028
      %2049 = vmatprep.subr.bf16.mxu0 0
      %2050 = vmatpush1.bf16.msra.mxu0 %v2029
      %2051 = vmatprep.subr.bf16.mxu0 0
      %2052 = vmatpush1.bf16.msra.mxu0 %v2030
      %2053 = vmatprep.subr.bf16.mxu0 0
      %2054 = vmatpush1.bf16.msra.mxu0 %v2031
      %2055 = vmatprep.subr.bf16.mxu0 0
      %2056 = vmatpush1.bf16.msra.mxu0 %v2032
      %2057 = vmatprep.subr.bf16.mxu0 0
      %2058 = vmatpush1.bf16.msra.mxu0 0
      %2059 = vmatprep.subr.bf16.mxu0 0
      %2060 = vmatpush1.bf16.msra.mxu0 0
      %2061 = vmatprep.subr.bf16.mxu0 0
      %2062 = vmatpush1.bf16.msra.mxu0 0
      %2063 = vmatprep.subr.bf16.mxu0 0
      %2064 = vmatpush1.bf16.msra.mxu0 0
      %2065 = vmatprep.subr.bf16.mxu0 0
      %2066 = vmatpush1.bf16.msra.mxu0 0
      %2067 = vmatprep.subr.bf16.mxu0 0
      %2068 = vmatpush1.bf16.msra.mxu0 0
      %2069 = vmatprep.subr.bf16.mxu0 0
      %2070 = vmatpush1.bf16.msra.mxu0 0
      %2071 = vmatprep.subr.bf16.mxu0 0
      %2072 = vmatpush1.bf16.msra.mxu0 0
      %2073 = vmatprep.mubr.bf16.mxu0 0
      %2074 = vmatmul.mubr.bf16.gmra.mrb[0].mxu0 %v1938
      %v2075 = vpop.f32.mrb[0].mxu0
      %v2076 = vadd.f32 %v1991, %v2075
      %v2077 = vpop.f32.mrb[0].mxu0
      %v2078 = vpop.f32.mrb[0].mxu0
      %v2079 = vadd.f32 %v1991, %v2078
      %v2080 = vpop.f32.mrb[0].mxu0
      %2081 = vmatprep.mubr.bf16.mxu0 0
      %2082 = vmatmul.mubr.bf16.gmra.mrb[0].mxu0 %v1939
      %v2083 = vpop.f32.mrb[0].mxu0
      %v2084 = vadd.f32 %v1991, %v2083
      %v2085 = vpop.f32.mrb[0].mxu0
      %v2086 = vpop.f32.mrb[0].mxu0
      %v2087 = vadd.f32 %v1991, %v2086
      %v2088 = vpop.f32.mrb[0].mxu0
      %2089 = vmatprep.mubr.bf16.mxu0 0
      %2090 = vmatmul.mubr.bf16.gmra.mrb[0].mxu0 %v1940
      %v2091 = vpop.f32.mrb[0].mxu0
      %v2092 = vadd.f32 %v1991, %v2091
      %v2093 = vpop.f32.mrb[0].mxu0
      %v2094 = vpop.f32.mrb[0].mxu0
      %v2095 = vadd.f32 %v1991, %v2094
      %v2096 = vpop.f32.mrb[0].mxu0
      %2097 = vmatprep.mubr.bf16.mxu0 0
      %2098 = vmatmul.mubr.bf16.gmra.mrb[0].mxu0 %v1941
      %v2099 = vpop.f32.mrb[0].mxu0
      %v2100 = vadd.f32 %v1991, %v2099
      %v2101 = vpop.f32.mrb[0].mxu0
      %v2102 = vpop.f32.mrb[0].mxu0
      %v2103 = vadd.f32 %v1991, %v2102
      %v2104 = vpop.f32.mrb[0].mxu0
      %2105 = vmatprep.mubr.bf16.mxu0 0
      %2106 = vmatmul.mubr.bf16.gmra.mrb[0].mxu0 %v1942
      %v2107 = vpop.f32.mrb[0].mxu0
      %v2108 = vadd.f32 %v1991, %v2107
      %v2109 = vpop.f32.mrb[0].mxu0
      %v2110 = vpop.f32.mrb[0].mxu0
      %v2111 = vadd.f32 %v1991, %v2110
      %v2112 = vpop.f32.mrb[0].mxu0
      %2113 = vmatprep.mubr.bf16.mxu0 0
      %2114 = vmatmul.mubr.bf16.gmra.mrb[0].mxu0 %v1943
      %v2115 = vpop.f32.mrb[0].mxu0
      %v2116 = vadd.f32 %v1991, %v2115
      %v2117 = vpop.f32.mrb[0].mxu0
      %v2118 = vpop.f32.mrb[0].mxu0
      %v2119 = vadd.f32 %v1991, %v2118
      %v2120 = vpop.f32.mrb[0].mxu0
      %2121 = vmatprep.mubr.bf16.mxu0 0
      %2122 = vmatmul.mubr.bf16.gmra.mrb[0].mxu0 %v1944
      %v2123 = vpop.f32.mrb[0].mxu0
      %v2124 = vadd.f32 %v1991, %v2123
      %v2125 = vpop.f32.mrb[0].mxu0
      %v2126 = vpop.f32.mrb[0].mxu0
      %v2127 = vadd.f32 %v1991, %v2126
      %v2128 = vpop.f32.mrb[0].mxu0
      %2129 = vmatprep.mubr.bf16.mxu0 0
      %2130 = vmatmul.mubr.bf16.gmra.mrb[0].mxu0 %v1945
      %v2131 = vpop.f32.mrb[0].mxu0
      %v2132 = vadd.f32 %v1991, %v2131
      %v2133 = vpop.f32.mrb[0].mxu0
      %v2134 = vpop.f32.mrb[0].mxu0
      %v2135 = vadd.f32 %v1991, %v2134
      %v2136 = vpop.f32.mrb[0].mxu0
      %2137 = vmatprep.mubr.bf16.mxu0 0
      %2138 = vmatmul.mubr.bf16.gmra.mrb[0].mxu0 %v1946
      %v2139 = vpop.f32.mrb[0].mxu0
      %v2140 = vadd.f32 %v1991, %v2139
      %v2141 = vpop.f32.mrb[0].mxu0
      %v2142 = vpop.f32.mrb[0].mxu0
      %v2143 = vadd.f32 %v1991, %v2142
      %v2144 = vpop.f32.mrb[0].mxu0
      %2145 = vmatprep.mubr.bf16.mxu0 0
      %2146 = vmatmul.mubr.bf16.gmra.mrb[0].mxu0 %v1947
      %v2147 = vpop.f32.mrb[0].mxu0
      %v2148 = vadd.f32 %v1991, %v2147
      %v2149 = vpop.f32.mrb[0].mxu0
      %v2150 = vpop.f32.mrb[0].mxu0
      %v2151 = vadd.f32 %v1991, %v2150
      %v2152 = vpop.f32.mrb[0].mxu0
      %2153 = vmatprep.mubr.bf16.mxu0 0
      %2154 = vmatmul.mubr.bf16.gmra.mrb[0].mxu0 %v1948
      %v2155 = vpop.f32.mrb[0].mxu0
      %v2156 = vadd.f32 %v1991, %v2155
      %v2157 = vpop.f32.mrb[0].mxu0
      %v2158 = vpop.f32.mrb[0].mxu0
      %v2159 = vadd.f32 %v1991, %v2158
      %v2160 = vpop.f32.mrb[0].mxu0
      %2161 = vmatprep.mubr.bf16.mxu0 0
      %2162 = vmatmul.mubr.bf16.gmra.mrb[0].mxu0 %v1949
      %v2163 = vpop.f32.mrb[0].mxu0
      %v2164 = vadd.f32 %v1991, %v2163
      %v2165 = vpop.f32.mrb[0].mxu0
      %v2166 = vpop.f32.mrb[0].mxu0
      %v2167 = vadd.f32 %v1991, %v2166
      %v2168 = vpop.f32.mrb[0].mxu0
      %2169 = vmatprep.mubr.bf16.mxu0 0
      %2170 = vmatmul.mubr.bf16.gmra.mrb[0].mxu0 %v1950
      %v2171 = vpop.f32.mrb[0].mxu0
      %v2172 = vadd.f32 %v1991, %v2171
      %v2173 = vpop.f32.mrb[0].mxu0
      %v2174 = vpop.f32.mrb[0].mxu0
      %v2175 = vadd.f32 %v1991, %v2174
      %v2176 = vpop.f32.mrb[0].mxu0
      %2177 = vmatprep.mubr.bf16.mxu0 0
      %2178 = vmatmul.mubr.bf16.gmra.mrb[0].mxu0 %v1951
      %v2179 = vpop.f32.mrb[0].mxu0
      %v2180 = vadd.f32 %v1991, %v2179
      %v2181 = vpop.f32.mrb[0].mxu0
      %v2182 = vpop.f32.mrb[0].mxu0
      %v2183 = vadd.f32 %v1991, %v2182
      %v2184 = vpop.f32.mrb[0].mxu0
      %2185 = vmatprep.mubr.bf16.mxu0 0
      %2186 = vmatmul.mubr.bf16.gmra.mrb[0].mxu0 %v1952
      %v2187 = vpop.f32.mrb[0].mxu0
      %v2188 = vadd.f32 %v1991, %v2187
      %v2189 = vpop.f32.mrb[0].mxu0
      %v2190 = vpop.f32.mrb[0].mxu0
      %v2191 = vadd.f32 %v1991, %v2190
      %v2192 = vpop.f32.mrb[0].mxu0
      %2193 = vmatprep.mubr.bf16.mxu0 0
      %2194 = vmatmul.mubr.bf16.gmra.mrb[0].mxu0 %v1953
      %v2195 = vpop.f32.mrb[0].mxu0
      %v2196 = vadd.f32 %v1991, %v2195
      %v2197 = vpop.f32.mrb[0].mxu0
      %v2198 = vpop.f32.mrb[0].mxu0
      %v2199 = vadd.f32 %v1991, %v2198
      %v2200 = vpop.f32.mrb[0].mxu0
      %2201 = vmatprep.mubr.bf16.mxu0 0
      %2202 = vmatmul.mubr.bf16.gmra.mrb[0].mxu0 %v1954
      %v2203 = vpop.f32.mrb[0].mxu0
      %v2204 = vadd.f32 %v1991, %v2203
      %v2205 = vpop.f32.mrb[0].mxu0
      %v2206 = vpop.f32.mrb[0].mxu0
      %v2207 = vadd.f32 %v1991, %v2206
      %v2208 = vpop.f32.mrb[0].mxu0
      %2209 = vmatprep.mubr.bf16.mxu0 0
      %2210 = vmatmul.mubr.bf16.gmra.mrb[0].mxu0 %v1955
      %v2211 = vpop.f32.mrb[0].mxu0
      %v2212 = vadd.f32 %v1991, %v2211
      %v2213 = vpop.f32.mrb[0].mxu0
      %v2214 = vpop.f32.mrb[0].mxu0
      %v2215 = vadd.f32 %v1991, %v2214
      %v2216 = vpop.f32.mrb[0].mxu0
      %2217 = vmatprep.mubr.bf16.mxu0 0
      %2218 = vmatmul.mubr.bf16.gmra.mrb[0].mxu0 %v1956
      %v2219 = vpop.f32.mrb[0].mxu0
      %v2220 = vadd.f32 %v1991, %v2219
      %v2221 = vpop.f32.mrb[0].mxu0
      %v2222 = vpop.f32.mrb[0].mxu0
      %v2223 = vadd.f32 %v1991, %v2222
      %v2224 = vpop.f32.mrb[0].mxu0
      %2225 = vmatprep.mubr.bf16.mxu0 0
      %2226 = vmatmul.mubr.bf16.gmra.mrb[0].mxu0 %v1957
      %v2227 = vpop.f32.mrb[0].mxu0
      %v2228 = vadd.f32 %v1991, %v2227
      %v2229 = vpop.f32.mrb[0].mxu0
      %v2230 = vpop.f32.mrb[0].mxu0
      %v2231 = vadd.f32 %v1991, %v2230
      %v2232 = vpop.f32.mrb[0].mxu0
      %2233 = vmatprep.mubr.bf16.mxu0 0
      %2234 = vmatmul.mubr.bf16.gmra.mrb[0].mxu0 %v1958
      %v2235 = vpop.f32.mrb[0].mxu0
      %v2236 = vadd.f32 %v1991, %v2235
      %v2237 = vpop.f32.mrb[0].mxu0
      %v2238 = vpop.f32.mrb[0].mxu0
      %v2239 = vadd.f32 %v1991, %v2238
      %v2240 = vpop.f32.mrb[0].mxu0
      %2241 = vmatprep.mubr.bf16.mxu0 0
      %2242 = vmatmul.mubr.bf16.gmra.mrb[0].mxu0 %v1959
      %v2243 = vpop.f32.mrb[0].mxu0
      %v2244 = vadd.f32 %v1991, %v2243
      %v2245 = vpop.f32.mrb[0].mxu0
      %v2246 = vpop.f32.mrb[0].mxu0
      %v2247 = vadd.f32 %v1991, %v2246
      %v2248 = vpop.f32.mrb[0].mxu0
      %2249 = vmatprep.mubr.bf16.mxu0 0
      %2250 = vmatmul.mubr.bf16.gmra.mrb[0].mxu0 %v1960
      %v2251 = vpop.f32.mrb[0].mxu0
      %v2252 = vadd.f32 %v1991, %v2251
      %v2253 = vpop.f32.mrb[0].mxu0
      %v2254 = vpop.f32.mrb[0].mxu0
      %v2255 = vadd.f32 %v1991, %v2254
      %v2256 = vpop.f32.mrb[0].mxu0
      %2257 = vmatprep.mubr.bf16.mxu0 0
      %2258 = vmatmul.mubr.bf16.gmra.mrb[0].mxu0 %v1961
      %v2259 = vpop.f32.mrb[0].mxu0
      %v2260 = vadd.f32 %v1991, %v2259
      %v2261 = vpop.f32.mrb[0].mxu0
      %v2262 = vpop.f32.mrb[0].mxu0
      %v2263 = vadd.f32 %v1991, %v2262
      %v2264 = vpop.f32.mrb[0].mxu0
      %2265 = vmatprep.mubr.bf16.mxu0 0
      %2266 = vmatmul.mubr.bf16.gmra.mrb[0].mxu0 %v1962
      %v2267 = vpop.f32.mrb[0].mxu0
      %v2268 = vadd.f32 %v1991, %v2267
      %v2269 = vpop.f32.mrb[0].mxu0
      %v2270 = vpop.f32.mrb[0].mxu0
      %v2271 = vadd.f32 %v1991, %v2270
      %v2272 = vpop.f32.mrb[0].mxu0
      %2273 = vmatprep.mubr.bf16.mxu0 0
      %2274 = vmatmul.mubr.bf16.gmra.mrb[0].mxu0 %v1963
      %v2275 = vpop.f32.mrb[0].mxu0
      %v2276 = vadd.f32 %v1991, %v2275
      %v2277 = vpop.f32.mrb[0].mxu0
      %v2278 = vpop.f32.mrb[0].mxu0
      %v2279 = vadd.f32 %v1991, %v2278
      %v2280 = vpop.f32.mrb[0].mxu0
      %2281 = vmatprep.mubr.bf16.mxu0 0
      %2282 = vmatmul.mubr.bf16.gmra.mrb[0].mxu0 %v1964
      %v2283 = vpop.f32.mrb[0].mxu0
      %v2284 = vadd.f32 %v1991, %v2283
      %v2285 = vpop.f32.mrb[0].mxu0
      %v2286 = vpop.f32.mrb[0].mxu0
      %v2287 = vadd.f32 %v1991, %v2286
      %v2288 = vpop.f32.mrb[0].mxu0
      %2289 = vmatprep.mubr.bf16.mxu0 0
      %2290 = vmatmul.mubr.bf16.gmra.mrb[0].mxu0 %v1965
      %v2291 = vpop.f32.mrb[0].mxu0
      %v2292 = vadd.f32 %v1991, %v2291
      %v2293 = vpop.f32.mrb[0].mxu0
      %v2294 = vpop.f32.mrb[0].mxu0
      %v2295 = vadd.f32 %v1991, %v2294
      %v2296 = vpop.f32.mrb[0].mxu0
      %2297 = vmatprep.mubr.bf16.mxu0 0
      %2298 = vmatmul.mubr.bf16.gmra.mrb[0].mxu0 %v1966
      %v2299 = vpop.f32.mrb[0].mxu0
      %v2300 = vadd.f32 %v1991, %v2299
      %v2301 = vpop.f32.mrb[0].mxu0
      %v2302 = vpop.f32.mrb[0].mxu0
      %v2303 = vadd.f32 %v1991, %v2302
      %v2304 = vpop.f32.mrb[0].mxu0
      %2305 = vmatprep.mubr.bf16.mxu0 0
      %2306 = vmatmul.mubr.bf16.gmra.mrb[0].mxu0 %v1967
      %v2307 = vpop.f32.mrb[0].mxu0
      %v2308 = vadd.f32 %v1991, %v2307
      %v2309 = vpop.f32.mrb[0].mxu0
      %v2310 = vpop.f32.mrb[0].mxu0
      %v2311 = vadd.f32 %v1991, %v2310
      %v2312 = vpop.f32.mrb[0].mxu0
      %2313 = vmatprep.mubr.bf16.mxu0 0
      %2314 = vmatmul.mubr.bf16.gmra.mrb[0].mxu0 %v1968
      %v2315 = vpop.f32.mrb[0].mxu0
      %v2316 = vadd.f32 %v1991, %v2315
      %v2317 = vpop.f32.mrb[0].mxu0
      %v2318 = vpop.f32.mrb[0].mxu0
      %v2319 = vadd.f32 %v1991, %v2318
      %v2320 = vpop.f32.mrb[0].mxu0
      %2321 = vmatprep.mubr.bf16.mxu0 0
      %2322 = vmatmul.mubr.bf16.gmra.mrb[0].mxu0 %v1969
      %v2323 = vpop.f32.mrb[0].mxu0
      %v2324 = vadd.f32 %v1991, %v2323
      %v2325 = vpop.f32.mrb[0].mxu0
      %v2326 = vpop.f32.mrb[0].mxu0
      %v2327 = vadd.f32 %v1991, %v2326
      %v2328 = vpop.f32.mrb[0].mxu0
      %2329 = vdwg.mxu0
      %vm2330 = vcmask 64512
      %2331 = vst.msk [vmem:[%s334] sm:$0xff] %vm2330, %v2076
      %2332 = vst.msk [vmem:[%s334 + $0x8] sm:$0xff] %vm2330, %v2079
      %2333 = vst.msk [vmem:[%s334 + $0x10] sm:$0xff] %vm2330, %v2084
      %2334 = vst.msk [vmem:[%s334 + $0x18] sm:$0xff] %vm2330, %v2087
      %2335 = vst.msk [vmem:[%s334 + $0x20] sm:$0xff] %vm2330, %v2092
      %2336 = vst.msk [vmem:[%s334 + $0x28] sm:$0xff] %vm2330, %v2095
      %2337 = vst.msk [vmem:[%s334 + $0x30] sm:$0xff] %vm2330, %v2100
      %2338 = vst.msk [vmem:[%s334 + $0x38] sm:$0xff] %vm2330, %v2103
      %2339 = vst.msk [vmem:[%s334 + $0x40] sm:$0xff] %vm2330, %v2108
      %2340 = vst.msk [vmem:[%s334 + $0x48] sm:$0xff] %vm2330, %v2111
      %2341 = vst.msk [vmem:[%s334 + $0x50] sm:$0xff] %vm2330, %v2116
      %2342 = vst.msk [vmem:[%s334 + $0x58] sm:$0xff] %vm2330, %v2119
      %2343 = vst.msk [vmem:[%s334 + $0x60] sm:$0xff] %vm2330, %v2124
      %2344 = vst.msk [vmem:[%s334 + $0x68] sm:$0xff] %vm2330, %v2127
      %2345 = vst.msk [vmem:[%s334 + $0x70] sm:$0xff] %vm2330, %v2132
      %2346 = vst.msk [vmem:[%s334 + $0x78] sm:$0xff] %vm2330, %v2135
      %2347 = vst.msk [vmem:[%s334 + $0x80] sm:$0xff] %vm2330, %v2140
      %2348 = vst.msk [vmem:[%s334 + $0x88] sm:$0xff] %vm2330, %v2143
      %2349 = vst.msk [vmem:[%s334 + $0x90] sm:$0xff] %vm2330, %v2148
      %2350 = vst.msk [vmem:[%s334 + $0x98] sm:$0xff] %vm2330, %v2151
      %2351 = vst.msk [vmem:[%s334 + $0xa0] sm:$0xff] %vm2330, %v2156
      %2352 = vst.msk [vmem:[%s334 + $0xa8] sm:$0xff] %vm2330, %v2159
      %2353 = vst.msk [vmem:[%s334 + $0xb0] sm:$0xff] %vm2330, %v2164
      %2354 = vst.msk [vmem:[%s334 + $0xb8] sm:$0xff] %vm2330, %v2167
      %2355 = vst.msk [vmem:[%s334 + $0xc0] sm:$0xff] %vm2330, %v2172
      %2356 = vst.msk [vmem:[%s334 + $0xc8] sm:$0xff] %vm2330, %v2175
      %2357 = vst.msk [vmem:[%s334 + $0xd0] sm:$0xff] %vm2330, %v2180
      %2358 = vst.msk [vmem:[%s334 + $0xd8] sm:$0xff] %vm2330, %v2183
      %2359 = vst.msk [vmem:[%s334 + $0xe0] sm:$0xff] %vm2330, %v2188
      %2360 = vst.msk [vmem:[%s334 + $0xe8] sm:$0xff] %vm2330, %v2191
      %2361 = vst.msk [vmem:[%s334 + $0xf0] sm:$0xff] %vm2330, %v2196
      %2362 = vst.msk [vmem:[%s334 + $0xf8] sm:$0xff] %vm2330, %v2199
      %2363 = vst.msk [vmem:[%s334 + $0x100] sm:$0xff] %vm2330, %v2204
      %2364 = vst.msk [vmem:[%s334 + $0x108] sm:$0xff] %vm2330, %v2207
      %2365 = vst.msk [vmem:[%s334 + $0x110] sm:$0xff] %vm2330, %v2212
      %2366 = vst.msk [vmem:[%s334 + $0x118] sm:$0xff] %vm2330, %v2215
      %2367 = vst.msk [vmem:[%s334 + $0x120] sm:$0xff] %vm2330, %v2220
      %2368 = vst.msk [vmem:[%s334 + $0x128] sm:$0xff] %vm2330, %v2223
      %2369 = vst.msk [vmem:[%s334 + $0x130] sm:$0xff] %vm2330, %v2228
      %2370 = vst.msk [vmem:[%s334 + $0x138] sm:$0xff] %vm2330, %v2231
      %2371 = vst.msk [vmem:[%s334 + $0x140] sm:$0xff] %vm2330, %v2236
      %2372 = vst.msk [vmem:[%s334 + $0x148] sm:$0xff] %vm2330, %v2239
      %2373 = vst.msk [vmem:[%s334 + $0x150] sm:$0xff] %vm2330, %v2244
      %2374 = vst.msk [vmem:[%s334 + $0x158] sm:$0xff] %vm2330, %v2247
      %2375 = vst.msk [vmem:[%s334 + $0x160] sm:$0xff] %vm2330, %v2252
      %2376 = vst.msk [vmem:[%s334 + $0x168] sm:$0xff] %vm2330, %v2255
      %2377 = vst.msk [vmem:[%s334 + $0x170] sm:$0xff] %vm2330, %v2260
      %2378 = vst.msk [vmem:[%s334 + $0x178] sm:$0xff] %vm2330, %v2263
      %2379 = vst.msk [vmem:[%s334 + $0x180] sm:$0xff] %vm2330, %v2268
      %2380 = vst.msk [vmem:[%s334 + $0x188] sm:$0xff] %vm2330, %v2271
      %2381 = vst.msk [vmem:[%s334 + $0x190] sm:$0xff] %vm2330, %v2276
      %2382 = vst.msk [vmem:[%s334 + $0x198] sm:$0xff] %vm2330, %v2279
      %2383 = vst.msk [vmem:[%s334 + $0x1a0] sm:$0xff] %vm2330, %v2284
      %2384 = vst.msk [vmem:[%s334 + $0x1a8] sm:$0xff] %vm2330, %v2287
      %2385 = vst.msk [vmem:[%s334 + $0x1b0] sm:$0xff] %vm2330, %v2292
      %2386 = vst.msk [vmem:[%s334 + $0x1b8] sm:$0xff] %vm2330, %v2295
      %2387 = vst.msk [vmem:[%s334 + $0x1c0] sm:$0xff] %vm2330, %v2300
      %2388 = vst.msk [vmem:[%s334 + $0x1c8] sm:$0xff] %vm2330, %v2303
      %2389 = vst.msk [vmem:[%s334 + $0x1d0] sm:$0xff] %vm2330, %v2308
      %2390 = vst.msk [vmem:[%s334 + $0x1d8] sm:$0xff] %vm2330, %v2311
      %2391 = vst.msk [vmem:[%s334 + $0x1e0] sm:$0xff] %vm2330, %v2316
      %2392 = vst.msk [vmem:[%s334 + $0x1e8] sm:$0xff] %vm2330, %v2319
      %2393 = vst.msk [vmem:[%s334 + $0x1f0] sm:$0xff] %vm2330, %v2324
      %2394 = vst.msk [vmem:[%s334 + $0x1f8] sm:$0xff] %vm2330, %v2327
      %s2395 = smul.u32 64, %s20
      %p2396 = scmp.lt.s32.totalorder %s2395, 255
      %s2397 = scalar_select %p2396, %s2395, 255
      %s2398 = smul.addr %s2397, 8
      %s2399 = scalar_lea.vmem %s9, %s2398
      // Predicated region
      $region57: #{tpu_custom_call.1} parent=55 // pred_check
        %p2400 = pneg %p232
      $region58: #{tpu_custom_call.1} parent=55 // pred_check_branch
        %2402 = sbr.rel (%p2400) target = $region60
      $region59: #{tpu_custom_call.1} parent=55 // pred_region
        %s2403 = smul.u32 64, %s20
      $region60: #{tpu_custom_call.1} parent=55 // pred_fallthru
        _
    $region56: #{tpu_custom_call.1} parent=5 // pred_fallthru
      _
    %p2404 = scmp.le.s32.totalorder 2, %s15
    // Predicated region
    $region61: #{tpu_custom_call.1} parent=5 // pred_check
      %p2405 = pneg %p2404
    $region62: #{tpu_custom_call.1} parent=5 // pred_check_branch
      %2407 = sbr.rel (%p2405) target = $region64
    $region63: #{tpu_custom_call.1} parent=5 // pred_region
      %s2408 = ssub.s32 %s15, 2
      // Predicated region
      $region65: #{tpu_custom_call.1} parent=63 // pred_check
        %p2409 = pneg %p238
      $region66: #{tpu_custom_call.1} parent=63 // pred_check_branch
        %2411 = sbr.rel (%p2409) target = $region68
      $region67: #{tpu_custom_call.1} parent=63 // pred_region
        %s2412 = smul.u32 64, %s21
        %p2413 = scmp.lt.s32.totalorder %s2412, 255
        %s2414 = scalar_select %p2413, %s2412, 255
        %s2415 = smul.addr %s2414, 8
        %s2416 = scalar_lea.vmem %s9, %s2415
      $region68: #{tpu_custom_call.1} parent=63 // pred_fallthru
        _
    $region64: #{tpu_custom_call.1} parent=5 // pred_fallthru
      _
  $region6: #{tpu_custom_call.1} parent=0 // loop_footer
    %s19 = sadd.s32 1, %s15
  $region7: #{tpu_custom_call.1} parent=0 // loop_footer_branch
    %14 = sbr.rel target = $region3
  $region8: #{tpu_custom_call.1} parent=0 // loop_exit
    _

// kernel: tpu_custom_call.1
$region0: #{tpu_custom_call.1}
  #allocation0 [shape = 'u32[]', space=smem, size = 0x4, offset = 0x4, fixed_abs, tag = 'smem constant byte address 0x4 - core index']
  #allocation1 [shape = 'u32[144,128]{1,0:T(1,128)}', space=vmem, size = 0x12000, scoped, tag = 'internal scratch']
  %s0 = inlined_call_operand.vmem [shape: bf16[2048,16], index: 0, kind: input, shape index: {}]
  %s1 = inlined_call_operand.vmem [shape: bf16[16,128], index: 1, kind: input, shape index: {}]
  %s2 = inlined_call_operand.vmem [shape: f32[1,128], index: 2, kind: input, shape index: {}]
  %s3 = inlined_call_operand.vmem [shape: bf16[128,128], index: 3, kind: input, shape index: {}]
  %s4 = inlined_call_operand.vmem [shape: f32[1,128], index: 4, kind: input, shape index: {}]
  %s5 = inlined_call_operand.vmem [shape: bf16[128,128], index: 5, kind: input, shape index: {}]
  %s6 = inlined_call_operand.vmem [shape: f32[1,128], index: 6, kind: input, shape index: {}]
  %s7 = inlined_call_operand.vmem [shape: bf16[128,8], index: 7, kind: input, shape index: {}]
  %s8 = inlined_call_operand.vmem [shape: f32[1,8], index: 8, kind: input, shape index: {}]
  %s9 = inlined_call_operand.vmem [shape: f32[2048,8], index: 9, kind: output, shape index: {}]
  %s10 = sld [smem:[#allocation0]]
  $region69: #{tpu_custom_call.1} parent=0
    _
  %s12 = ssub.s32 1, %s10
  %s13 = scalar_select 0, %s12, %s10
  loop: start=0, step=1, limit=6
  $region2: #{tpu_custom_call.1} parent=0 // loop_pre_header
    _
  $region3: #{tpu_custom_call.1} parent=0 // loop_header
    %s15 = sphi 0, %s19
    %p16 = scmp.ge.s32.totalorder %s15, 6
    %s25 = sphi 0, %s27
    %s28 = sphi 0, %s25
    %s29 = sphi 0, %s28
    %s45 = sphi 0, %s29
    %s49 = sphi 0, %s49
    %s51 = sphi 0, %s49
    %s52 = sphi 0, %s51
    %s66 = sphi 0, %s52
    %s70 = sphi 0, %s70
    %s72 = sphi 0, %s70
    %s73 = sphi 0, %s72
    %s87 = sphi 0, %s73
    %s91 = sphi 0, %s91
    %s93 = sphi 0, %s91
    %s94 = sphi 0, %s93
    %s108 = sphi 0, %s94
    %s112 = sphi 0, %s112
    %s114 = sphi 0, %s112
    %s115 = sphi 0, %s114
    %s129 = sphi 0, %s115
    %s133 = sphi 0, %s133
    %s135 = sphi 0, %s133
    %s136 = sphi 0, %s135
    %s150 = sphi 0, %s136
    %s154 = sphi 0, %s154
    %s156 = sphi 0, %s154
    %s157 = sphi 0, %s156
    %s171 = sphi 0, %s157
    %s175 = sphi 0, %s175
    %s177 = sphi 0, %s175
    %s178 = sphi 0, %s177
    %s192 = sphi 0, %s178
    %s196 = sphi 0, %s196
    %s198 = sphi 0, %s196
    %s199 = sphi 0, %s198
    %s213 = sphi 0, %s199
    %s219 = sphi 0, %s221
    %s222 = sphi 0, %s219
    %s223 = sphi 0, %s222
    %s239 = sphi 0, %s223
  $region4: #{tpu_custom_call.1} parent=0 // loop_header_branch
    %18 = sbr.rel (%p16) target = $region8
  $region5: #{tpu_custom_call.1} parent=0 // loop_body
    %s20 = ssub.s32 %s15, 1
    %s21 = ssub.s32 %s15, 2
    %s22 = sadd.s32 %s15, 1
    %s23 = ssub.s32 %s15, %s22
    %p24 = scmp.eq.s32.totalorder %s23, 0
    %s26 = sadd.s32 %s25, 1
    %s27 = scalar_select %p24, %s25, %s26
    %p30 = pneg %p24
    %p31 = scmp.eq.s32.totalorder %s15, 3
    %p32 = por %p30, %p31
    %p33 = scmp.ne.s32.totalorder %s25, %s28
    %p34 = scmp.eq.s32.totalorder %s15, 0
    %p35 = por %p33, %p34
    %p36 = scmp.ne.s32.totalorder %s25, %s28
    %p37 = scmp.eq.s32.totalorder %s20, 3
    %p38 = por %p36, %p37
    %p39 = scmp.ne.s32.totalorder %s28, %s29
    %p40 = scmp.eq.s32.totalorder %s20, 0
    %p41 = por %p39, %p40
    %p42 = scmp.ne.s32.totalorder %s28, %s29
    %p43 = scmp.eq.s32.totalorder %s21, 3
    %p44 = por %p42, %p43
    %p46 = scmp.ne.s32.totalorder %s29, %s45
    %p47 = scmp.eq.s32.totalorder %s21, 0
    %p48 = por %p46, %p47
    %s50 = sadd.s32 %s49, 1
    %p53 = scmp.eq.s32.totalorder %s15, 3
    %p54 = scmp.ne.s32.totalorder %s49, %s51
    %p55 = scmp.eq.s32.totalorder %s15, 0
    %p56 = por %p54, %p55
    %p57 = scmp.ne.s32.totalorder %s49, %s51
    %p58 = scmp.eq.s32.totalorder %s20, 3
    %p59 = por %p57, %p58
    %p60 = scmp.ne.s32.totalorder %s51, %s52
    %p61 = scmp.eq.s32.totalorder %s20, 0
    %p62 = por %p60, %p61
    %p63 = scmp.ne.s32.totalorder %s51, %s52
    %p64 = scmp.eq.s32.totalorder %s21, 3
    %p65 = por %p63, %p64
    %p67 = scmp.ne.s32.totalorder %s52, %s66
    %p68 = scmp.eq.s32.totalorder %s21, 0
    %p69 = por %p67, %p68
    %s71 = sadd.s32 %s70, 1
    %p74 = scmp.eq.s32.totalorder %s15, 3
    %p75 = scmp.ne.s32.totalorder %s70, %s72
    %p76 = scmp.eq.s32.totalorder %s15, 0
    %p77 = por %p75, %p76
    %p78 = scmp.ne.s32.totalorder %s70, %s72
    %p79 = scmp.eq.s32.totalorder %s20, 3
    %p80 = por %p78, %p79
    %p81 = scmp.ne.s32.totalorder %s72, %s73
    %p82 = scmp.eq.s32.totalorder %s20, 0
    %p83 = por %p81, %p82
    %p84 = scmp.ne.s32.totalorder %s72, %s73
    %p85 = scmp.eq.s32.totalorder %s21, 3
    %p86 = por %p84, %p85
    %p88 = scmp.ne.s32.totalorder %s73, %s87
    %p89 = scmp.eq.s32.totalorder %s21, 0
    %p90 = por %p88, %p89
    %s92 = sadd.s32 %s91, 1
    %p95 = scmp.eq.s32.totalorder %s15, 3
    %p96 = scmp.ne.s32.totalorder %s91, %s93
    %p97 = scmp.eq.s32.totalorder %s15, 0
    %p98 = por %p96, %p97
    %p99 = scmp.ne.s32.totalorder %s91, %s93
    %p100 = scmp.eq.s32.totalorder %s20, 3
    %p101 = por %p99, %p100
    %p102 = scmp.ne.s32.totalorder %s93, %s94
    %p103 = scmp.eq.s32.totalorder %s20, 0
    %p104 = por %p102, %p103
    %p105 = scmp.ne.s32.totalorder %s93, %s94
    %p106 = scmp.eq.s32.totalorder %s21, 3
    %p107 = por %p105, %p106
    %p109 = scmp.ne.s32.totalorder %s94, %s108
    %p110 = scmp.eq.s32.totalorder %s21, 0
    %p111 = por %p109, %p110
    %s113 = sadd.s32 %s112, 1
    %p116 = scmp.eq.s32.totalorder %s15, 3
    %p117 = scmp.ne.s32.totalorder %s112, %s114
    %p118 = scmp.eq.s32.totalorder %s15, 0
    %p119 = por %p117, %p118
    %p120 = scmp.ne.s32.totalorder %s112, %s114
    %p121 = scmp.eq.s32.totalorder %s20, 3
    %p122 = por %p120, %p121
    %p123 = scmp.ne.s32.totalorder %s114, %s115
    %p124 = scmp.eq.s32.totalorder %s20, 0
    %p125 = por %p123, %p124
    %p126 = scmp.ne.s32.totalorder %s114, %s115
    %p127 = scmp.eq.s32.totalorder %s21, 3
    %p128 = por %p126, %p127
    %p130 = scmp.ne.s32.totalorder %s115, %s129
    %p131 = scmp.eq.s32.totalorder %s21, 0
    %p132 = por %p130, %p131
    %s134 = sadd.s32 %s133, 1
    %p137 = scmp.eq.s32.totalorder %s15, 3
    %p138 = scmp.ne.s32.totalorder %s133, %s135
    %p139 = scmp.eq.s32.totalorder %s15, 0
    %p140 = por %p138, %p139
    %p141 = scmp.ne.s32.totalorder %s133, %s135
    %p142 = scmp.eq.s32.totalorder %s20, 3
    %p143 = por %p141, %p142
    %p144 = scmp.ne.s32.totalorder %s135, %s136
    %p145 = scmp.eq.s32.totalorder %s20, 0
    %p146 = por %p144, %p145
    %p147 = scmp.ne.s32.totalorder %s135, %s136
    %p148 = scmp.eq.s32.totalorder %s21, 3
    %p149 = por %p147, %p148
    %p151 = scmp.ne.s32.totalorder %s136, %s150
    %p152 = scmp.eq.s32.totalorder %s21, 0
    %p153 = por %p151, %p152
    %s155 = sadd.s32 %s154, 1
    %p158 = scmp.eq.s32.totalorder %s15, 3
    %p159 = scmp.ne.s32.totalorder %s154, %s156
    %p160 = scmp.eq.s32.totalorder %s15, 0
    %p161 = por %p159, %p160
    %p162 = scmp.ne.s32.totalorder %s154, %s156
    %p163 = scmp.eq.s32.totalorder %s20, 3
    %p164 = por %p162, %p163
    %p165 = scmp.ne.s32.totalorder %s156, %s157
    %p166 = scmp.eq.s32.totalorder %s20, 0
    %p167 = por %p165, %p166
    %p168 = scmp.ne.s32.totalorder %s156, %s157
    %p169 = scmp.eq.s32.totalorder %s21, 3
    %p170 = por %p168, %p169
    %p172 = scmp.ne.s32.totalorder %s157, %s171
    %p173 = scmp.eq.s32.totalorder %s21, 0
    %p174 = por %p172, %p173
    %s176 = sadd.s32 %s175, 1
    %p179 = scmp.eq.s32.totalorder %s15, 3
    %p180 = scmp.ne.s32.totalorder %s175, %s177
    %p181 = scmp.eq.s32.totalorder %s15, 0
    %p182 = por %p180, %p181
    %p183 = scmp.ne.s32.totalorder %s175, %s177
    %p184 = scmp.eq.s32.totalorder %s20, 3
    %p185 = por %p183, %p184
    %p186 = scmp.ne.s32.totalorder %s177, %s178
    %p187 = scmp.eq.s32.totalorder %s20, 0
    %p188 = por %p186, %p187
    %p189 = scmp.ne.s32.totalorder %s177, %s178
    %p190 = scmp.eq.s32.totalorder %s21, 3
    %p191 = por %p189, %p190
    %p193 = scmp.ne.s32.totalorder %s178, %s192
    %p194 = scmp.eq.s32.totalorder %s21, 0
    %p195 = por %p193, %p194
    %s197 = sadd.s32 %s196, 1
    %p200 = scmp.eq.s32.totalorder %s15, 3
    %p201 = scmp.ne.s32.totalorder %s196, %s198
    %p202 = scmp.eq.s32.totalorder %s15, 0
    %p203 = por %p201, %p202
    %p204 = scmp.ne.s32.totalorder %s196, %s198
    %p205 = scmp.eq.s32.totalorder %s20, 3
    %p206 = por %p204, %p205
    %p207 = scmp.ne.s32.totalorder %s198, %s199
    %p208 = scmp.eq.s32.totalorder %s20, 0
    %p209 = por %p207, %p208
    %p210 = scmp.ne.s32.totalorder %s198, %s199
    %p211 = scmp.eq.s32.totalorder %s21, 3
    %p212 = por %p210, %p211
    %p214 = scmp.ne.s32.totalorder %s199, %s213
    %p215 = scmp.eq.s32.totalorder %s21, 0
    %p216 = por %p214, %p215
    %s217 = ssub.s32 %s15, %s22
    %p218 = scmp.eq.s32.totalorder %s217, 0
    %s220 = sadd.s32 %s219, 1
    %s221 = scalar_select %p218, %s219, %s220
    %p224 = pneg %p218
    %p225 = scmp.eq.s32.totalorder %s15, 3
    %p226 = por %p224, %p225
    %p227 = scmp.ne.s32.totalorder %s219, %s222
    %p228 = scmp.eq.s32.totalorder %s15, 0
    %p229 = por %p227, %p228
    %p230 = scmp.ne.s32.totalorder %s219, %s222
    %p231 = scmp.eq.s32.totalorder %s20, 3
    %p232 = por %p230, %p231
    %p233 = scmp.ne.s32.totalorder %s222, %s223
    %p234 = scmp.eq.s32.totalorder %s20, 0
    %p235 = por %p233, %p234
    %p236 = scmp.ne.s32.totalorder %s222, %s223
    %p237 = scmp.eq.s32.totalorder %s21, 3
    %p238 = por %p236, %p237
    %p240 = scmp.ne.s32.totalorder %s223, %s239
    %p241 = scmp.eq.s32.totalorder %s21, 0
    %p242 = por %p240, %p241
    %p243 = scmp.le.s32.totalorder 1, %s15
    %p244 = scmp.lt.s32.totalorder %s15, 5
    %p245 = pnand %p243, %p244
    %p246 = pneg %p245
    // Predicated region
    $region9: #{tpu_custom_call.1} parent=5 // pred_check
      _
    $region10: #{tpu_custom_call.1} parent=5 // pred_check_branch
      %248 = sbr.rel (%p245) target = $region12
    $region11: #{tpu_custom_call.1} parent=5 // pred_region
      %s249 = ssub.s32 %s15, 1
      // Predicated region
      $region13: #{tpu_custom_call.1} parent=11 // pred_check
        %p250 = pneg %p62
      $region14: #{tpu_custom_call.1} parent=11 // pred_check_branch
        %252 = sbr.rel (%p250) target = $region16
      $region15: #{tpu_custom_call.1} parent=11 // pred_region
        _
      $region16: #{tpu_custom_call.1} parent=11 // pred_fallthru
        _
      // Predicated region
      $region17: #{tpu_custom_call.1} parent=11 // pred_check
        %p253 = pneg %p83
      $region18: #{tpu_custom_call.1} parent=11 // pred_check_branch
        %255 = sbr.rel (%p253) target = $region20
      $region19: #{tpu_custom_call.1} parent=11 // pred_region
        _
      $region20: #{tpu_custom_call.1} parent=11 // pred_fallthru
        _
      // Predicated region
      $region21: #{tpu_custom_call.1} parent=11 // pred_check
        %p256 = pneg %p104
      $region22: #{tpu_custom_call.1} parent=11 // pred_check_branch
        %258 = sbr.rel (%p256) target = $region24
      $region23: #{tpu_custom_call.1} parent=11 // pred_region
        _
      $region24: #{tpu_custom_call.1} parent=11 // pred_fallthru
        _
      // Predicated region
      $region25: #{tpu_custom_call.1} parent=11 // pred_check
        %p259 = pneg %p125
      $region26: #{tpu_custom_call.1} parent=11 // pred_check_branch
        %261 = sbr.rel (%p259) target = $region28
      $region27: #{tpu_custom_call.1} parent=11 // pred_region
        _
      $region28: #{tpu_custom_call.1} parent=11 // pred_fallthru
        _
      // Predicated region
      $region29: #{tpu_custom_call.1} parent=11 // pred_check
        %p262 = pneg %p146
      $region30: #{tpu_custom_call.1} parent=11 // pred_check_branch
        %264 = sbr.rel (%p262) target = $region32
      $region31: #{tpu_custom_call.1} parent=11 // pred_region
        _
      $region32: #{tpu_custom_call.1} parent=11 // pred_fallthru
        _
      // Predicated region
      $region33: #{tpu_custom_call.1} parent=11 // pred_check
        %p265 = pneg %p167
      $region34: #{tpu_custom_call.1} parent=11 // pred_check_branch
        %267 = sbr.rel (%p265) target = $region36
      $region35: #{tpu_custom_call.1} parent=11 // pred_region
        _
      $region36: #{tpu_custom_call.1} parent=11 // pred_fallthru
        _
      // Predicated region
      $region37: #{tpu_custom_call.1} parent=11 // pred_check
        %p268 = pneg %p188
      $region38: #{tpu_custom_call.1} parent=11 // pred_check_branch
        %270 = sbr.rel (%p268) target = $region40
      $region39: #{tpu_custom_call.1} parent=11 // pred_region
        _
      $region40: #{tpu_custom_call.1} parent=11 // pred_fallthru
        _
      // Predicated region
      $region41: #{tpu_custom_call.1} parent=11 // pred_check
        %p271 = pneg %p209
      $region42: #{tpu_custom_call.1} parent=11 // pred_check_branch
        %273 = sbr.rel (%p271) target = $region44
      $region43: #{tpu_custom_call.1} parent=11 // pred_region
        _
      $region44: #{tpu_custom_call.1} parent=11 // pred_fallthru
        _
    $region12: #{tpu_custom_call.1} parent=5 // pred_fallthru
      _
    %p274 = scmp.lt.s32.totalorder %s15, 4
    // Predicated region
    $region45: #{tpu_custom_call.1} parent=5 // pred_check
      %p275 = pneg %p274
    $region46: #{tpu_custom_call.1} parent=5 // pred_check_branch
      %277 = sbr.rel (%p275) target = $region48
    $region47: #{tpu_custom_call.1} parent=5 // pred_region
      // Predicated region
      $region49: #{tpu_custom_call.1} parent=47 // pred_check
        %p278 = pneg %p35
      $region50: #{tpu_custom_call.1} parent=47 // pred_check_branch
        %280 = sbr.rel (%p278) target = $region52
      $region51: #{tpu_custom_call.1} parent=47 // pred_region
        %s281 = smul.u32 64, %s15
        %p282 = scmp.lt.s32.totalorder %s281, 255
        %s283 = scalar_select %p282, %s281, 255
        %s284 = smul.addr %s283, 4
        %s285 = scalar_lea.vmem %s0, %s284
        %s286 = smul.u32 64, %s15
      $region52: #{tpu_custom_call.1} parent=47 // pred_fallthru
        _
    $region48: #{tpu_custom_call.1} parent=5 // pred_fallthru
      _
    %p287 = scmp.le.s32.totalorder 1, %s15
    %p288 = scmp.lt.s32.totalorder %s15, 5
    %p289 = pnand %p287, %p288
    %p290 = pneg %p289
    // Predicated region
    $region53: #{tpu_custom_call.1} parent=5 // pred_check
      _
    $region54: #{tpu_custom_call.1} parent=5 // pred_check_branch
      %292 = sbr.rel (%p289) target = $region56
    $region55: #{tpu_custom_call.1} parent=5 // pred_region
      %s293 = ssub.s32 %s15, 1
      %s294 = smul.u32 64, %s20
      %p295 = scmp.lt.s32.totalorder %s294, 255
      %s296 = scalar_select %p295, %s294, 255
      %s297 = smul.addr %s296, 4
      %s298 = scalar_lea.vmem %s0, %s297
      %p299 = pneg %p41
      %p300 = pneg %p38
      %p301 = pneg %p62
      %p302 = pneg %p59
      %p303 = pneg %p83
      %p304 = pneg %p80
      %p305 = pneg %p104
      %p306 = pneg %p101
      %p307 = pneg %p125
      %p308 = pneg %p122
      %p309 = pneg %p146
      %p310 = pneg %p143
      %p311 = pneg %p167
      %p312 = pneg %p164
      %p313 = pneg %p188
      %p314 = pneg %p185
      %p315 = pneg %p209
      %p316 = pneg %p206
      %p317 = pneg %p235
      %p318 = pneg %p232
      %s319 = smul.u32 64, %s20
      %p320 = scmp.lt.s32.totalorder %s319, 255
      %s321 = scalar_select %p320, %s319, 255
      %s322 = smul.addr %s321, 8
      %s323 = scalar_lea.vmem %s9, %s322
      %s324 = smul.u32 64, %s20
      %p325 = scmp.lt.s32.totalorder %s324, 255
      %s326 = scalar_select %p325, %s324, 255
      %s327 = smul.addr %s326, 4
      %s328 = scalar_lea.vmem %s0, %s327
      %s329 = smul.u32 64, %s20
      %s330 = smul.u32 64, %s20
      %p331 = scmp.lt.s32.totalorder %s330, 255
      %s332 = scalar_select %p331, %s330, 255
      %s333 = smul.addr %s332, 8
      %s334 = scalar_lea.vmem %s9, %s333
      %s335 = smul.u32 64, %s20
      %v337 = vld [vmem:[%s328] sm:$0xf]
      %v338 = vld [vmem:[%s328 + $0x4] sm:$0xf]
      %v339 = vld [vmem:[%s328 + $0x8] sm:$0xf]
      %v340 = vld [vmem:[%s328 + $0xc] sm:$0xf]
      %v341 = vld [vmem:[%s328 + $0x10] sm:$0xf]
      %v342 = vld [vmem:[%s328 + $0x14] sm:$0xf]
      %v343 = vld [vmem:[%s328 + $0x18] sm:$0xf]
      %v344 = vld [vmem:[%s328 + $0x1c] sm:$0xf]
      %v345 = vld [vmem:[%s328 + $0x20] sm:$0xf]
      %v346 = vld [vmem:[%s328 + $0x24] sm:$0xf]
      %v347 = vld [vmem:[%s328 + $0x28] sm:$0xf]
      %v348 = vld [vmem:[%s328 + $0x2c] sm:$0xf]
      %v349 = vld [vmem:[%s328 + $0x30] sm:$0xf]
      %v350 = vld [vmem:[%s328 + $0x34] sm:$0xf]
      %v351 = vld [vmem:[%s328 + $0x38] sm:$0xf]
      %v352 = vld [vmem:[%s328 + $0x3c] sm:$0xf]
      %v353 = vld [vmem:[%s328 + $0x40] sm:$0xf]
      %v354 = vld [vmem:[%s328 + $0x44] sm:$0xf]
      %v355 = vld [vmem:[%s328 + $0x48] sm:$0xf]
      %v356 = vld [vmem:[%s328 + $0x4c] sm:$0xf]
      %v357 = vld [vmem:[%s328 + $0x50] sm:$0xf]
      %v358 = vld [vmem:[%s328 + $0x54] sm:$0xf]
      %v359 = vld [vmem:[%s328 + $0x58] sm:$0xf]
      %v360 = vld [vmem:[%s328 + $0x5c] sm:$0xf]
      %v361 = vld [vmem:[%s328 + $0x60] sm:$0xf]
      %v362 = vld [vmem:[%s328 + $0x64] sm:$0xf]
      %v363 = vld [vmem:[%s328 + $0x68] sm:$0xf]
      %v364 = vld [vmem:[%s328 + $0x6c] sm:$0xf]
      %v365 = vld [vmem:[%s328 + $0x70] sm:$0xf]
      %v366 = vld [vmem:[%s328 + $0x74] sm:$0xf]
      %v367 = vld [vmem:[%s328 + $0x78] sm:$0xf]
      %v368 = vld [vmem:[%s328 + $0x7c] sm:$0xf]
      %v369 = vld [vmem:[%s328 + $0x80] sm:$0xf]
      %v370 = vld [vmem:[%s328 + $0x84] sm:$0xf]
      %v371 = vld [vmem:[%s328 + $0x88] sm:$0xf]
      %v372 = vld [vmem:[%s328 + $0x8c] sm:$0xf]
      %v373 = vld [vmem:[%s328 + $0x90] sm:$0xf]
      %v374 = vld [vmem:[%s328 + $0x94] sm:$0xf]
      %v375 = vld [vmem:[%s328 + $0x98] sm:$0xf]
      %v376 = vld [vmem:[%s328 + $0x9c] sm:$0xf]
      %v377 = vld [vmem:[%s328 + $0xa0] sm:$0xf]
      %v378 = vld [vmem:[%s328 + $0xa4] sm:$0xf]
      %v379 = vld [vmem:[%s328 + $0xa8] sm:$0xf]
      %v380 = vld [vmem:[%s328 + $0xac] sm:$0xf]
      %v381 = vld [vmem:[%s328 + $0xb0] sm:$0xf]
      %v382 = vld [vmem:[%s328 + $0xb4] sm:$0xf]
      %v383 = vld [vmem:[%s328 + $0xb8] sm:$0xf]
      %v384 = vld [vmem:[%s328 + $0xbc] sm:$0xf]
      %v385 = vld [vmem:[%s328 + $0xc0] sm:$0xf]
      %v386 = vld [vmem:[%s328 + $0xc4] sm:$0xf]
      %v387 = vld [vmem:[%s328 + $0xc8] sm:$0xf]
      %v388 = vld [vmem:[%s328 + $0xcc] sm:$0xf]
      %v389 = vld [vmem:[%s328 + $0xd0] sm:$0xf]
      %v390 = vld [vmem:[%s328 + $0xd4] sm:$0xf]
      %v391 = vld [vmem:[%s328 + $0xd8] sm:$0xf]
      %v392 = vld [vmem:[%s328 + $0xdc] sm:$0xf]
      %v393 = vld [vmem:[%s328 + $0xe0] sm:$0xf]
      %v394 = vld [vmem:[%s328 + $0xe4] sm:$0xf]
      %v395 = vld [vmem:[%s328 + $0xe8] sm:$0xf]
      %v396 = vld [vmem:[%s328 + $0xec] sm:$0xf]
      %v397 = vld [vmem:[%s328 + $0xf0] sm:$0xf]
      %v398 = vld [vmem:[%s328 + $0xf4] sm:$0xf]
      %v399 = vld [vmem:[%s328 + $0xf8] sm:$0xf]
      %v400 = vld [vmem:[%s328 + $0xfc] sm:$0xf]
      %v401 = vld [vmem:[%s1] sm:$0xf]
      %v402 = vld [vmem:[%s1 + $0x4] sm:$0xf]
      %v403 = vld [vmem:[%s2] sm:$0x1]
      %v405 = vlaneseq
      %v406 = vshrl.u32 %v405, 7
      %v407 = vsub.s32 0, %v406
      %v408 = vrot.slane %v403, %v407
      %v474 = vunpack.c.l.b16 %v337
      %v475 = vunpack.c.l.b16 %v338
      %v476 = vunpack.c.l.b16 %v339
      %v477 = vunpack.c.l.b16 %v340
      %v478 = vunpack.c.l.b16 %v341
      %v479 = vunpack.c.l.b16 %v342
      %v480 = vunpack.c.l.b16 %v343
      %v481 = vunpack.c.l.b16 %v344
      %v482 = vunpack.c.l.b16 %v345
      %v483 = vunpack.c.l.b16 %v346
      %v484 = vunpack.c.l.b16 %v347
      %v485 = vunpack.c.l.b16 %v348
      %v486 = vunpack.c.l.b16 %v349
      %v487 = vunpack.c.l.b16 %v350
      %v488 = vunpack.c.l.b16 %v351
      %v489 = vunpack.c.l.b16 %v352
      %v490 = vunpack.c.l.b16 %v353
      %v491 = vunpack.c.l.b16 %v354
      %v492 = vunpack.c.l.b16 %v355
      %v493 = vunpack.c.l.b16 %v356
      %v494 = vunpack.c.l.b16 %v357
      %v495 = vunpack.c.l.b16 %v358
      %v496 = vunpack.c.l.b16 %v359
      %v497 = vunpack.c.l.b16 %v360
      %v498 = vunpack.c.l.b16 %v361
      %v499 = vunpack.c.l.b16 %v362
      %v500 = vunpack.c.l.b16 %v363
      %v501 = vunpack.c.l.b16 %v364
      %v502 = vunpack.c.l.b16 %v365
      %v503 = vunpack.c.l.b16 %v366
      %v504 = vunpack.c.l.b16 %v367
      %v505 = vunpack.c.l.b16 %v368
      %v506 = vunpack.c.l.b16 %v369
      %v507 = vunpack.c.l.b16 %v370
      %v508 = vunpack.c.l.b16 %v371
      %v509 = vunpack.c.l.b16 %v372
      %v510 = vunpack.c.l.b16 %v373
      %v511 = vunpack.c.l.b16 %v374
      %v512 = vunpack.c.l.b16 %v375
      %v513 = vunpack.c.l.b16 %v376
      %v514 = vunpack.c.l.b16 %v377
      %v515 = vunpack.c.l.b16 %v378
      %v516 = vunpack.c.l.b16 %v379
      %v517 = vunpack.c.l.b16 %v380
      %v518 = vunpack.c.l.b16 %v381
      %v519 = vunpack.c.l.b16 %v382
      %v520 = vunpack.c.l.b16 %v383
      %v521 = vunpack.c.l.b16 %v384
      %v522 = vunpack.c.l.b16 %v385
      %v523 = vunpack.c.l.b16 %v386
      %v524 = vunpack.c.l.b16 %v387
      %v525 = vunpack.c.l.b16 %v388
      %v526 = vunpack.c.l.b16 %v389
      %v527 = vunpack.c.l.b16 %v390
      %v528 = vunpack.c.l.b16 %v391
      %v529 = vunpack.c.l.b16 %v392
      %v530 = vunpack.c.l.b16 %v393
      %v531 = vunpack.c.l.b16 %v394
      %v532 = vunpack.c.l.b16 %v395
      %v533 = vunpack.c.l.b16 %v396
      %v534 = vunpack.c.l.b16 %v397
      %v535 = vunpack.c.l.b16 %v398
      %v536 = vunpack.c.l.b16 %v399
      %v537 = vunpack.c.l.b16 %v400
      %v538 = vpack.c.b16 %v475, %v474
      %v539 = vpack.c.b16 %v477, %v476
      %v540 = vpack.c.b16 %v479, %v478
      %v541 = vpack.c.b16 %v481, %v480
      %v542 = vpack.c.b16 %v483, %v482
      %v543 = vpack.c.b16 %v485, %v484
      %v544 = vpack.c.b16 %v487, %v486
      %v545 = vpack.c.b16 %v489, %v488
      %v546 = vpack.c.b16 %v491, %v490
      %v547 = vpack.c.b16 %v493, %v492
      %v548 = vpack.c.b16 %v495, %v494
      %v549 = vpack.c.b16 %v497, %v496
      %v550 = vpack.c.b16 %v499, %v498
      %v551 = vpack.c.b16 %v501, %v500
      %v552 = vpack.c.b16 %v503, %v502
      %v553 = vpack.c.b16 %v505, %v504
      %v554 = vpack.c.b16 %v507, %v506
      %v555 = vpack.c.b16 %v509, %v508
      %v556 = vpack.c.b16 %v511, %v510
      %v557 = vpack.c.b16 %v513, %v512
      %v558 = vpack.c.b16 %v515, %v514
      %v559 = vpack.c.b16 %v517, %v516
      %v560 = vpack.c.b16 %v519, %v518
      %v561 = vpack.c.b16 %v521, %v520
      %v562 = vpack.c.b16 %v523, %v522
      %v563 = vpack.c.b16 %v525, %v524
      %v564 = vpack.c.b16 %v527, %v526
      %v565 = vpack.c.b16 %v529, %v528
      %v566 = vpack.c.b16 %v531, %v530
      %v567 = vpack.c.b16 %v533, %v532
      %v568 = vpack.c.b16 %v535, %v534
      %v569 = vpack.c.b16 %v537, %v536
      %v572 = vunpack.c.l.b16 %v401
      %v573 = vunpack.c.l.b16 %v402
      %v574 = vpack.c.b16 %v573, %v572
      %vm576 = vcmask 130048
      %v578 = vsel %vm576, %v538, 0
      %v581 = vsel %vm576, %v539, 0
      %v584 = vsel %vm576, %v540, 0
      %v587 = vsel %vm576, %v541, 0
      %v590 = vsel %vm576, %v542, 0
      %v593 = vsel %vm576, %v543, 0
      %v596 = vsel %vm576, %v544, 0
      %v599 = vsel %vm576, %v545, 0
      %v602 = vsel %vm576, %v546, 0
      %v605 = vsel %vm576, %v547, 0
      %v608 = vsel %vm576, %v548, 0
      %v611 = vsel %vm576, %v549, 0
      %v614 = vsel %vm576, %v550, 0
      %v617 = vsel %vm576, %v551, 0
      %v620 = vsel %vm576, %v552, 0
      %v623 = vsel %vm576, %v553, 0
      %v626 = vsel %vm576, %v554, 0
      %v629 = vsel %vm576, %v555, 0
      %v632 = vsel %vm576, %v556, 0
      %v635 = vsel %vm576, %v557, 0
      %v638 = vsel %vm576, %v558, 0
      %v641 = vsel %vm576, %v559, 0
      %v644 = vsel %vm576, %v560, 0
      %v647 = vsel %vm576, %v561, 0
      %v650 = vsel %vm576, %v562, 0
      %v653 = vsel %vm576, %v563, 0
      %v656 = vsel %vm576, %v564, 0
      %v659 = vsel %vm576, %v565, 0
      %v662 = vsel %vm576, %v566, 0
      %v665 = vsel %vm576, %v567, 0
      %v668 = vsel %vm576, %v568, 0
      %v671 = vsel %vm576, %v569, 0
      %673 = vmatprep.subr.bf16.mxu0 0
      %674 = vmatpush1.bf16.msra.mxu0 %v574
      %675 = vmatprep.subr.bf16.mxu0 0
      %676 = vmatpush1.bf16.msra.mxu0 0
      %677 = vmatprep.subr.bf16.mxu0 0
      %678 = vmatpush1.bf16.msra.mxu0 0
      %679 = vmatprep.subr.bf16.mxu0 0
      %680 = vmatpush1.bf16.msra.mxu0 0
      %681 = vmatprep.subr.bf16.mxu0 0
      %682 = vmatpush1.bf16.msra.mxu0 0
      %683 = vmatprep.subr.bf16.mxu0 0
      %684 = vmatpush1.bf16.msra.mxu0 0
      %685 = vmatprep.subr.bf16.mxu0 0
      %686 = vmatpush1.bf16.msra.mxu0 0
      %687 = vmatprep.subr.bf16.mxu0 0
      %688 = vmatpush1.bf16.msra.mxu0 0
      %689 = vmatprep.subr.bf16.mxu0 0
      %690 = vmatpush1.bf16.msra.mxu0 0
      %691 = vmatprep.subr.bf16.mxu0 0
      %692 = vmatpush1.bf16.msra.mxu0 0
      %693 = vmatprep.subr.bf16.mxu0 0
      %694 = vmatpush1.bf16.msra.mxu0 0
      %695 = vmatprep.subr.bf16.mxu0 0
      %696 = vmatpush1.bf16.msra.mxu0 0
      %697 = vmatprep.subr.bf16.mxu0 0
      %698 = vmatpush1.bf16.msra.mxu0 0
      %699 = vmatprep.subr.bf16.mxu0 0
      %700 = vmatpush1.bf16.msra.mxu0 0
      %701 = vmatprep.subr.bf16.mxu0 0
      %702 = vmatpush1.bf16.msra.mxu0 0
      %703 = vmatprep.subr.bf16.mxu0 0
      %704 = vmatpush1.bf16.msra.mxu0 0
      %705 = vmatprep.mubr.bf16.mxu0 0
      %706 = vmatmul.mubr.bf16.gmra.mrb[0].mxu0 %v578
      %v707 = vpop.f32.mrb[0].mxu0
      %v708 = vadd.f32 %v408, %v707
      %v709 = vpop.f32.mrb[0].mxu0
      %v710 = vpop.f32.mrb[0].mxu0
      %v711 = vadd.f32 %v408, %v710
      %v712 = vpop.f32.mrb[0].mxu0
      %713 = vmatprep.mubr.bf16.mxu0 0
      %714 = vmatmul.mubr.bf16.gmra.mrb[0].mxu0 %v581
      %v715 = vpop.f32.mrb[0].mxu0
      %v716 = vadd.f32 %v408, %v715
      %v717 = vpop.f32.mrb[0].mxu0
      %v718 = vpop.f32.mrb[0].mxu0
      %v719 = vadd.f32 %v408, %v718
      %v720 = vpop.f32.mrb[0].mxu0
      %721 = vmatprep.mubr.bf16.mxu0 0
      %722 = vmatmul.mubr.bf16.gmra.mrb[0].mxu0 %v584
      %v723 = vpop.f32.mrb[0].mxu0
      %v724 = vadd.f32 %v408, %v723
      %v725 = vpop.f32.mrb[0].mxu0
      %v726 = vpop.f32.mrb[0].mxu0
      %v727 = vadd.f32 %v408, %v726
      %v728 = vpop.f32.mrb[0].mxu0
      %729 = vmatprep.mubr.bf16.mxu0 0
      %730 = vmatmul.mubr.bf16.gmra.mrb[0].mxu0 %v587
      %v731 = vpop.f32.mrb[0].mxu0
      %v732 = vadd.f32 %v408, %v731
      %v733 = vpop.f32.mrb[0].mxu0
      %v734 = vpop.f32.mrb[0].mxu0
      %v735 = vadd.f32 %v408, %v734
      %v736 = vpop.f32.mrb[0].mxu0
      %737 = vmatprep.mubr.bf16.mxu0 0
      %738 = vmatmul.mubr.bf16.gmra.mrb[0].mxu0 %v590
      %v739 = vpop.f32.mrb[0].mxu0
      %v740 = vadd.f32 %v408, %v739
      %v741 = vpop.f32.mrb[0].mxu0
      %v742 = vpop.f32.mrb[0].mxu0
      %v743 = vadd.f32 %v408, %v742
      %v744 = vpop.f32.mrb[0].mxu0
      %745 = vmatprep.mubr.bf16.mxu0 0
      %746 = vmatmul.mubr.bf16.gmra.mrb[0].mxu0 %v593
      %v747 = vpop.f32.mrb[0].mxu0
      %v748 = vadd.f32 %v408, %v747
      %v749 = vpop.f32.mrb[0].mxu0
      %v750 = vpop.f32.mrb[0].mxu0
      %v751 = vadd.f32 %v408, %v750
      %v752 = vpop.f32.mrb[0].mxu0
      %753 = vmatprep.mubr.bf16.mxu0 0
      %754 = vmatmul.mubr.bf16.gmra.mrb[0].mxu0 %v596
      %v755 = vpop.f32.mrb[0].mxu0
      %v756 = vadd.f32 %v408, %v755
      %v757 = vpop.f32.mrb[0].mxu0
      %v758 = vpop.f32.mrb[0].mxu0
      %v759 = vadd.f32 %v408, %v758
      %v760 = vpop.f32.mrb[0].mxu0
      %761 = vmatprep.mubr.bf16.mxu0 0
      %762 = vmatmul.mubr.bf16.gmra.mrb[0].mxu0 %v599
      %v763 = vpop.f32.mrb[0].mxu0
      %v764 = vadd.f32 %v408, %v763
      %v765 = vpop.f32.mrb[0].mxu0
      %v766 = vpop.f32.mrb[0].mxu0
      %v767 = vadd.f32 %v408, %v766
      %v768 = vpop.f32.mrb[0].mxu0
      %769 = vmatprep.mubr.bf16.mxu0 0
      %770 = vmatmul.mubr.bf16.gmra.mrb[0].mxu0 %v602
      %v771 = vpop.f32.mrb[0].mxu0
      %v772 = vadd.f32 %v408, %v771
      %v773 = vpop.f32.mrb[0].mxu0
      %v774 = vpop.f32.mrb[0].mxu0
      %v775 = vadd.f32 %v408, %v774
      %v776 = vpop.f32.mrb[0].mxu0
      %777 = vmatprep.mubr.bf16.mxu0 0
      %778 = vmatmul.mubr.bf16.gmra.mrb[0].mxu0 %v605
      %v779 = vpop.f32.mrb[0].mxu0
      %v780 = vadd.f32 %v408, %v779
      %v781 = vpop.f32.mrb[0].mxu0
      %v782 = vpop.f32.mrb[0].mxu0
      %v783 = vadd.f32 %v408, %v782
      %v784 = vpop.f32.mrb[0].mxu0
      %785 = vmatprep.mubr.bf16.mxu0 0
      %786 = vmatmul.mubr.bf16.gmra.mrb[0].mxu0 %v608
      %v787 = vpop.f32.mrb[0].mxu0
      %v788 = vadd.f32 %v408, %v787
      %v789 = vpop.f32.mrb[0].mxu0
      %v790 = vpop.f32.mrb[0].mxu0
      %v791 = vadd.f32 %v408, %v790
      %v792 = vpop.f32.mrb[0].mxu0
      %793 = vmatprep.mubr.bf16.mxu0 0
      %794 = vmatmul.mubr.bf16.gmra.mrb[0].mxu0 %v611
      %v795 = vpop.f32.mrb[0].mxu0
      %v796 = vadd.f32 %v408, %v795
      %v797 = vpop.f32.mrb[0].mxu0
      %v798 = vpop.f32.mrb[0].mxu0
      %v799 = vadd.f32 %v408, %v798
      %v800 = vpop.f32.mrb[0].mxu0
      %801 = vmatprep.mubr.bf16.mxu0 0
      %802 = vmatmul.mubr.bf16.gmra.mrb[0].mxu0 %v614
      %v803 = vpop.f32.mrb[0].mxu0
      %v804 = vadd.f32 %v408, %v803
      %v805 = vpop.f32.mrb[0].mxu0
      %v806 = vpop.f32.mrb[0].mxu0
      %v807 = vadd.f32 %v408, %v806
      %v808 = vpop.f32.mrb[0].mxu0
      %809 = vmatprep.mubr.bf16.mxu0 0
      %810 = vmatmul.mubr.bf16.gmra.mrb[0].mxu0 %v617
      %v811 = vpop.f32.mrb[0].mxu0
      %v812 = vadd.f32 %v408, %v811
      %v813 = vpop.f32.mrb[0].mxu0
      %v814 = vpop.f32.mrb[0].mxu0
      %v815 = vadd.f32 %v408, %v814
      %v816 = vpop.f32.mrb[0].mxu0
      %817 = vmatprep.mubr.bf16.mxu0 0
      %818 = vmatmul.mubr.bf16.gmra.mrb[0].mxu0 %v620
      %v819 = vpop.f32.mrb[0].mxu0
      %v820 = vadd.f32 %v408, %v819
      %v821 = vpop.f32.mrb[0].mxu0
      %v822 = vpop.f32.mrb[0].mxu0
      %v823 = vadd.f32 %v408, %v822
      %v824 = vpop.f32.mrb[0].mxu0
      %825 = vmatprep.mubr.bf16.mxu0 0
      %826 = vmatmul.mubr.bf16.gmra.mrb[0].mxu0 %v623
      %v827 = vpop.f32.mrb[0].mxu0
      %v828 = vadd.f32 %v408, %v827
      %v829 = vpop.f32.mrb[0].mxu0
      %v830 = vpop.f32.mrb[0].mxu0
      %v831 = vadd.f32 %v408, %v830
      %v832 = vpop.f32.mrb[0].mxu0
      %833 = vmatprep.mubr.bf16.mxu0 0
      %834 = vmatmul.mubr.bf16.gmra.mrb[0].mxu0 %v626
      %v835 = vpop.f32.mrb[0].mxu0
      %v836 = vadd.f32 %v408, %v835
      %v837 = vpop.f32.mrb[0].mxu0
      %v838 = vpop.f32.mrb[0].mxu0
      %v839 = vadd.f32 %v408, %v838
      %v840 = vpop.f32.mrb[0].mxu0
      %841 = vmatprep.mubr.bf16.mxu0 0
      %842 = vmatmul.mubr.bf16.gmra.mrb[0].mxu0 %v629
      %v843 = vpop.f32.mrb[0].mxu0
      %v844 = vadd.f32 %v408, %v843
      %v845 = vpop.f32.mrb[0].mxu0
      %v846 = vpop.f32.mrb[0].mxu0
      %v847 = vadd.f32 %v408, %v846
      %v848 = vpop.f32.mrb[0].mxu0
      %849 = vmatprep.mubr.bf16.mxu0 0
      %850 = vmatmul.mubr.bf16.gmra.mrb[0].mxu0 %v632
      %v851 = vpop.f32.mrb[0].mxu0
      %v852 = vadd.f32 %v408, %v851
      %v853 = vpop.f32.mrb[0].mxu0
      %v854 = vpop.f32.mrb[0].mxu0
      %v855 = vadd.f32 %v408, %v854
      %v856 = vpop.f32.mrb[0].mxu0
      %857 = vmatprep.mubr.bf16.mxu0 0
      %858 = vmatmul.mubr.bf16.gmra.mrb[0].mxu0 %v635
      %v859 = vpop.f32.mrb[0].mxu0
      %v860 = vadd.f32 %v408, %v859
      %v861 = vpop.f32.mrb[0].mxu0
      %v862 = vpop.f32.mrb[0].mxu0
      %v863 = vadd.f32 %v408, %v862
      %v864 = vpop.f32.mrb[0].mxu0
      %865 = vmatprep.mubr.bf16.mxu0 0
      %866 = vmatmul.mubr.bf16.gmra.mrb[0].mxu0 %v638
      %v867 = vpop.f32.mrb[0].mxu0
      %v868 = vadd.f32 %v408, %v867
      %v869 = vpop.f32.mrb[0].mxu0
      %v870 = vpop.f32.mrb[0].mxu0
      %v871 = vadd.f32 %v408, %v870
      %v872 = vpop.f32.mrb[0].mxu0
      %873 = vmatprep.mubr.bf16.mxu0 0
      %874 = vmatmul.mubr.bf16.gmra.mrb[0].mxu0 %v641
      %v875 = vpop.f32.mrb[0].mxu0
      %v876 = vadd.f32 %v408, %v875
      %v877 = vpop.f32.mrb[0].mxu0
      %v878 = vpop.f32.mrb[0].mxu0
      %v879 = vadd.f32 %v408, %v878
      %v880 = vpop.f32.mrb[0].mxu0
      %881 = vmatprep.mubr.bf16.mxu0 0
      %882 = vmatmul.mubr.bf16.gmra.mrb[0].mxu0 %v644
      %v883 = vpop.f32.mrb[0].mxu0
      %v884 = vadd.f32 %v408, %v883
      %v885 = vpop.f32.mrb[0].mxu0
      %v886 = vpop.f32.mrb[0].mxu0
      %v887 = vadd.f32 %v408, %v886
      %v888 = vpop.f32.mrb[0].mxu0
      %889 = vmatprep.mubr.bf16.mxu0 0
      %890 = vmatmul.mubr.bf16.gmra.mrb[0].mxu0 %v647
      %v891 = vpop.f32.mrb[0].mxu0
      %v892 = vadd.f32 %v408, %v891
      %v893 = vpop.f32.mrb[0].mxu0
      %v894 = vpop.f32.mrb[0].mxu0
      %v895 = vadd.f32 %v408, %v894
      %v896 = vpop.f32.mrb[0].mxu0
      %897 = vmatprep.mubr.bf16.mxu0 0
      %898 = vmatmul.mubr.bf16.gmra.mrb[0].mxu0 %v650
      %v899 = vpop.f32.mrb[0].mxu0
      %v900 = vadd.f32 %v408, %v899
      %v901 = vpop.f32.mrb[0].mxu0
      %v902 = vpop.f32.mrb[0].mxu0
      %v903 = vadd.f32 %v408, %v902
      %v904 = vpop.f32.mrb[0].mxu0
      %905 = vmatprep.mubr.bf16.mxu0 0
      %906 = vmatmul.mubr.bf16.gmra.mrb[0].mxu0 %v653
      %v907 = vpop.f32.mrb[0].mxu0
      %v908 = vadd.f32 %v408, %v907
      %v909 = vpop.f32.mrb[0].mxu0
      %v910 = vpop.f32.mrb[0].mxu0
      %v911 = vadd.f32 %v408, %v910
      %v912 = vpop.f32.mrb[0].mxu0
      %913 = vmatprep.mubr.bf16.mxu0 0
      %914 = vmatmul.mubr.bf16.gmra.mrb[0].mxu0 %v656
      %v915 = vpop.f32.mrb[0].mxu0
      %v916 = vadd.f32 %v408, %v915
      %v917 = vpop.f32.mrb[0].mxu0
      %v918 = vpop.f32.mrb[0].mxu0
      %v919 = vadd.f32 %v408, %v918
      %v920 = vpop.f32.mrb[0].mxu0
      %921 = vmatprep.mubr.bf16.mxu0 0
      %922 = vmatmul.mubr.bf16.gmra.mrb[0].mxu0 %v659
      %v923 = vpop.f32.mrb[0].mxu0
      %v924 = vadd.f32 %v408, %v923
      %v925 = vpop.f32.mrb[0].mxu0
      %v926 = vpop.f32.mrb[0].mxu0
      %v927 = vadd.f32 %v408, %v926
      %v928 = vpop.f32.mrb[0].mxu0
      %929 = vmatprep.mubr.bf16.mxu0 0
      %930 = vmatmul.mubr.bf16.gmra.mrb[0].mxu0 %v662
      %v931 = vpop.f32.mrb[0].mxu0
      %v932 = vadd.f32 %v408, %v931
      %v933 = vpop.f32.mrb[0].mxu0
      %v934 = vpop.f32.mrb[0].mxu0
      %v935 = vadd.f32 %v408, %v934
      %v936 = vpop.f32.mrb[0].mxu0
      %937 = vmatprep.mubr.bf16.mxu0 0
      %938 = vmatmul.mubr.bf16.gmra.mrb[0].mxu0 %v665
      %v939 = vpop.f32.mrb[0].mxu0
      %v940 = vadd.f32 %v408, %v939
      %v941 = vpop.f32.mrb[0].mxu0
      %v942 = vpop.f32.mrb[0].mxu0
      %v943 = vadd.f32 %v408, %v942
      %v944 = vpop.f32.mrb[0].mxu0
      %945 = vmatprep.mubr.bf16.mxu0 0
      %946 = vmatmul.mubr.bf16.gmra.mrb[0].mxu0 %v668
      %v947 = vpop.f32.mrb[0].mxu0
      %v948 = vadd.f32 %v408, %v947
      %v949 = vpop.f32.mrb[0].mxu0
      %v950 = vpop.f32.mrb[0].mxu0
      %v951 = vadd.f32 %v408, %v950
      %v952 = vpop.f32.mrb[0].mxu0
      %953 = vmatprep.mubr.bf16.mxu0 0
      %954 = vmatmul.mubr.bf16.gmra.mrb[0].mxu0 %v671
      %v955 = vpop.f32.mrb[0].mxu0
      %v956 = vadd.f32 %v408, %v955
      %v957 = vpop.f32.mrb[0].mxu0
      %v958 = vpop.f32.mrb[0].mxu0
      %v959 = vadd.f32 %v408, %v958
      %v960 = vpop.f32.mrb[0].mxu0
      %961 = vdwg.mxu0
      %v962 = vmax.f32 %v708, 0.0
      %v963 = vmax.f32 %v711, 0.0
      %v964 = vmax.f32 %v716, 0.0
      %v965 = vmax.f32 %v719, 0.0
      %v966 = vmax.f32 %v724, 0.0
      %v967 = vmax.f32 %v727, 0.0
      %v968 = vmax.f32 %v732, 0.0
      %v969 = vmax.f32 %v735, 0.0
      %v970 = vmax.f32 %v740, 0.0
      %v971 = vmax.f32 %v743, 0.0
      %v972 = vmax.f32 %v748, 0.0
      %v973 = vmax.f32 %v751, 0.0
      %v974 = vmax.f32 %v756, 0.0
      %v975 = vmax.f32 %v759, 0.0
      %v976 = vmax.f32 %v764, 0.0
      %v977 = vmax.f32 %v767, 0.0
      %v978 = vmax.f32 %v772, 0.0
      %v979 = vmax.f32 %v775, 0.0
      %v980 = vmax.f32 %v780, 0.0
      %v981 = vmax.f32 %v783, 0.0
      %v982 = vmax.f32 %v788, 0.0
      %v983 = vmax.f32 %v791, 0.0
      %v984 = vmax.f32 %v796, 0.0
      %v985 = vmax.f32 %v799, 0.0
      %v986 = vmax.f32 %v804, 0.0
      %v987 = vmax.f32 %v807, 0.0
      %v988 = vmax.f32 %v812, 0.0
      %v989 = vmax.f32 %v815, 0.0
      %v990 = vmax.f32 %v820, 0.0
      %v991 = vmax.f32 %v823, 0.0
      %v992 = vmax.f32 %v828, 0.0
      %v993 = vmax.f32 %v831, 0.0
      %v994 = vmax.f32 %v836, 0.0
      %v995 = vmax.f32 %v839, 0.0
      %v996 = vmax.f32 %v844, 0.0
      %v997 = vmax.f32 %v847, 0.0
      %v998 = vmax.f32 %v852, 0.0
      %v999 = vmax.f32 %v855, 0.0
      %v1000 = vmax.f32 %v860, 0.0
      %v1001 = vmax.f32 %v863, 0.0
      %v1002 = vmax.f32 %v868, 0.0
      %v1003 = vmax.f32 %v871, 0.0
      %v1004 = vmax.f32 %v876, 0.0
      %v1005 = vmax.f32 %v879, 0.0
      %v1006 = vmax.f32 %v884, 0.0
      %v1007 = vmax.f32 %v887, 0.0
      %v1008 = vmax.f32 %v892, 0.0
      %v1009 = vmax.f32 %v895, 0.0
      %v1010 = vmax.f32 %v900, 0.0
      %v1011 = vmax.f32 %v903, 0.0
      %v1012 = vmax.f32 %v908, 0.0
      %v1013 = vmax.f32 %v911, 0.0
      %v1014 = vmax.f32 %v916, 0.0
      %v1015 = vmax.f32 %v919, 0.0
      %v1016 = vmax.f32 %v924, 0.0
      %v1017 = vmax.f32 %v927, 0.0
      %v1018 = vmax.f32 %v932, 0.0
      %v1019 = vmax.f32 %v935, 0.0
      %v1020 = vmax.f32 %v940, 0.0
      %v1021 = vmax.f32 %v943, 0.0
      %v1022 = vmax.f32 %v948, 0.0
      %v1023 = vmax.f32 %v951, 0.0
      %v1024 = vmax.f32 %v956, 0.0
      %v1025 = vmax.f32 %v959, 0.0
      %v1026 = vpack.c.bf16 %v963, %v962
      %v1027 = vpack.c.bf16 %v965, %v964
      %v1028 = vpack.c.bf16 %v967, %v966
      %v1029 = vpack.c.bf16 %v969, %v968
      %v1030 = vpack.c.bf16 %v971, %v970
      %v1031 = vpack.c.bf16 %v973, %v972
      %v1032 = vpack.c.bf16 %v975, %v974
      %v1033 = vpack.c.bf16 %v977, %v976
      %v1034 = vpack.c.bf16 %v979, %v978
      %v1035 = vpack.c.bf16 %v981, %v980
      %v1036 = vpack.c.bf16 %v983, %v982
      %v1037 = vpack.c.bf16 %v985, %v984
      %v1038 = vpack.c.bf16 %v987, %v986
      %v1039 = vpack.c.bf16 %v989, %v988
      %v1040 = vpack.c.bf16 %v991, %v990
      %v1041 = vpack.c.bf16 %v993, %v992
      %v1042 = vpack.c.bf16 %v995, %v994
      %v1043 = vpack.c.bf16 %v997, %v996
      %v1044 = vpack.c.bf16 %v999, %v998
      %v1045 = vpack.c.bf16 %v1001, %v1000
      %v1046 = vpack.c.bf16 %v1003, %v1002
      %v1047 = vpack.c.bf16 %v1005, %v1004
      %v1048 = vpack.c.bf16 %v1007, %v1006
      %v1049 = vpack.c.bf16 %v1009, %v1008
      %v1050 = vpack.c.bf16 %v1011, %v1010
      %v1051 = vpack.c.bf16 %v1013, %v1012
      %v1052 = vpack.c.bf16 %v1015, %v1014
      %v1053 = vpack.c.bf16 %v1017, %v1016
      %v1054 = vpack.c.bf16 %v1019, %v1018
      %v1055 = vpack.c.bf16 %v1021, %v1020
      %v1056 = vpack.c.bf16 %v1023, %v1022
      %v1057 = vpack.c.bf16 %v1025, %v1024
      %v1058 = vld [vmem:[%s3] sm:$0xf]
      %v1059 = vld [vmem:[%s3 + $0x4] sm:$0xf]
      %v1060 = vld [vmem:[%s3 + $0x8] sm:$0xf]
      %v1061 = vld [vmem:[%s3 + $0xc] sm:$0xf]
      %v1062 = vld [vmem:[%s3 + $0x10] sm:$0xf]
      %v1063 = vld [vmem:[%s3 + $0x14] sm:$0xf]
      %v1064 = vld [vmem:[%s3 + $0x18] sm:$0xf]
      %v1065 = vld [vmem:[%s3 + $0x1c] sm:$0xf]
      %v1066 = vld [vmem:[%s3 + $0x20] sm:$0xf]
      %v1067 = vld [vmem:[%s3 + $0x24] sm:$0xf]
      %v1068 = vld [vmem:[%s3 + $0x28] sm:$0xf]
      %v1069 = vld [vmem:[%s3 + $0x2c] sm:$0xf]
      %v1070 = vld [vmem:[%s3 + $0x30] sm:$0xf]
      %v1071 = vld [vmem:[%s3 + $0x34] sm:$0xf]
      %v1072 = vld [vmem:[%s3 + $0x38] sm:$0xf]
      %v1073 = vld [vmem:[%s3 + $0x3c] sm:$0xf]
      %v1074 = vld [vmem:[%s4] sm:$0x1]
      %v1076 = vlaneseq
      %v1077 = vshrl.u32 %v1076, 7
      %v1078 = vsub.s32 0, %v1077
      %v1079 = vrot.slane %v1074, %v1078
      %v1097 = vunpack.c.l.b16 %v1058
      %v1098 = vunpack.c.l.b16 %v1059
      %v1099 = vunpack.c.l.b16 %v1060
      %v1100 = vunpack.c.l.b16 %v1061
      %v1101 = vunpack.c.l.b16 %v1062
      %v1102 = vunpack.c.l.b16 %v1063
      %v1103 = vunpack.c.l.b16 %v1064
      %v1104 = vunpack.c.l.b16 %v1065
      %v1105 = vunpack.c.l.b16 %v1066
      %v1106 = vunpack.c.l.b16 %v1067
      %v1107 = vunpack.c.l.b16 %v1068
      %v1108 = vunpack.c.l.b16 %v1069
      %v1109 = vunpack.c.l.b16 %v1070
      %v1110 = vunpack.c.l.b16 %v1071
      %v1111 = vunpack.c.l.b16 %v1072
      %v1112 = vunpack.c.l.b16 %v1073
      %v1113 = vpack.c.b16 %v1098, %v1097
      %v1114 = vpack.c.b16 %v1100, %v1099
      %v1115 = vpack.c.b16 %v1102, %v1101
      %v1116 = vpack.c.b16 %v1104, %v1103
      %v1117 = vpack.c.b16 %v1106, %v1105
      %v1118 = vpack.c.b16 %v1108, %v1107
      %v1119 = vpack.c.b16 %v1110, %v1109
      %v1120 = vpack.c.b16 %v1112, %v1111
      %1129 = vmatprep.subr.bf16.mxu0 0
      %1130 = vmatpush1.bf16.msra.mxu0 %v1113
      %1131 = vmatprep.subr.bf16.mxu0 0
      %1132 = vmatpush1.bf16.msra.mxu0 %v1114
      %1133 = vmatprep.subr.bf16.mxu0 0
      %1134 = vmatpush1.bf16.msra.mxu0 %v1115
      %1135 = vmatprep.subr.bf16.mxu0 0
      %1136 = vmatpush1.bf16.msra.mxu0 %v1116
      %1137 = vmatprep.subr.bf16.mxu0 0
      %1138 = vmatpush1.bf16.msra.mxu0 %v1117
      %1139 = vmatprep.subr.bf16.mxu0 0
      %1140 = vmatpush1.bf16.msra.mxu0 %v1118
      %1141 = vmatprep.subr.bf16.mxu0 0
      %1142 = vmatpush1.bf16.msra.mxu0 %v1119
      %1143 = vmatprep.subr.bf16.mxu0 0
      %1144 = vmatpush1.bf16.msra.mxu0 %v1120
      %1145 = vmatprep.subr.bf16.mxu0 0
      %1146 = vmatpush1.bf16.msra.mxu0 0
      %1147 = vmatprep.subr.bf16.mxu0 0
      %1148 = vmatpush1.bf16.msra.mxu0 0
      %1149 = vmatprep.subr.bf16.mxu0 0
      %1150 = vmatpush1.bf16.msra.mxu0 0
      %1151 = vmatprep.subr.bf16.mxu0 0
      %1152 = vmatpush1.bf16.msra.mxu0 0
      %1153 = vmatprep.subr.bf16.mxu0 0
      %1154 = vmatpush1.bf16.msra.mxu0 0
      %1155 = vmatprep.subr.bf16.mxu0 0
      %1156 = vmatpush1.bf16.msra.mxu0 0
      %1157 = vmatprep.subr.bf16.mxu0 0
      %1158 = vmatpush1.bf16.msra.mxu0 0
      %1159 = vmatprep.subr.bf16.mxu0 0
      %1160 = vmatpush1.bf16.msra.mxu0 0
      %1161 = vmatprep.mubr.bf16.mxu0 0
      %1162 = vmatmul.mubr.bf16.gmra.mrb[0].mxu0 %v1026
      %v1163 = vpop.f32.mrb[0].mxu0
      %v1164 = vadd.f32 %v1079, %v1163
      %v1165 = vpop.f32.mrb[0].mxu0
      %v1166 = vpop.f32.mrb[0].mxu0
      %v1167 = vadd.f32 %v1079, %v1166
      %v1168 = vpop.f32.mrb[0].mxu0
      %1169 = vmatprep.mubr.bf16.mxu0 0
      %1170 = vmatmul.mubr.bf16.gmra.mrb[0].mxu0 %v1027
      %v1171 = vpop.f32.mrb[0].mxu0
      %v1172 = vadd.f32 %v1079, %v1171
      %v1173 = vpop.f32.mrb[0].mxu0
      %v1174 = vpop.f32.mrb[0].mxu0
      %v1175 = vadd.f32 %v1079, %v1174
      %v1176 = vpop.f32.mrb[0].mxu0
      %1177 = vmatprep.mubr.bf16.mxu0 0
      %1178 = vmatmul.mubr.bf16.gmra.mrb[0].mxu0 %v1028
      %v1179 = vpop.f32.mrb[0].mxu0
      %v1180 = vadd.f32 %v1079, %v1179
      %v1181 = vpop.f32.mrb[0].mxu0
      %v1182 = vpop.f32.mrb[0].mxu0
      %v1183 = vadd.f32 %v1079, %v1182
      %v1184 = vpop.f32.mrb[0].mxu0
      %1185 = vmatprep.mubr.bf16.mxu0 0
      %1186 = vmatmul.mubr.bf16.gmra.mrb[0].mxu0 %v1029
      %v1187 = vpop.f32.mrb[0].mxu0
      %v1188 = vadd.f32 %v1079, %v1187
      %v1189 = vpop.f32.mrb[0].mxu0
      %v1190 = vpop.f32.mrb[0].mxu0
      %v1191 = vadd.f32 %v1079, %v1190
      %v1192 = vpop.f32.mrb[0].mxu0
      %1193 = vmatprep.mubr.bf16.mxu0 0
      %1194 = vmatmul.mubr.bf16.gmra.mrb[0].mxu0 %v1030
      %v1195 = vpop.f32.mrb[0].mxu0
      %v1196 = vadd.f32 %v1079, %v1195
      %v1197 = vpop.f32.mrb[0].mxu0
      %v1198 = vpop.f32.mrb[0].mxu0
      %v1199 = vadd.f32 %v1079, %v1198
      %v1200 = vpop.f32.mrb[0].mxu0
      %1201 = vmatprep.mubr.bf16.mxu0 0
      %1202 = vmatmul.mubr.bf16.gmra.mrb[0].mxu0 %v1031
      %v1203 = vpop.f32.mrb[0].mxu0
      %v1204 = vadd.f32 %v1079, %v1203
      %v1205 = vpop.f32.mrb[0].mxu0
      %v1206 = vpop.f32.mrb[0].mxu0
      %v1207 = vadd.f32 %v1079, %v1206
      %v1208 = vpop.f32.mrb[0].mxu0
      %1209 = vmatprep.mubr.bf16.mxu0 0
      %1210 = vmatmul.mubr.bf16.gmra.mrb[0].mxu0 %v1032
      %v1211 = vpop.f32.mrb[0].mxu0
      %v1212 = vadd.f32 %v1079, %v1211
      %v1213 = vpop.f32.mrb[0].mxu0
      %v1214 = vpop.f32.mrb[0].mxu0
      %v1215 = vadd.f32 %v1079, %v1214
      %v1216 = vpop.f32.mrb[0].mxu0
      %1217 = vmatprep.mubr.bf16.mxu0 0
      %1218 = vmatmul.mubr.bf16.gmra.mrb[0].mxu0 %v1033
      %v1219 = vpop.f32.mrb[0].mxu0
      %v1220 = vadd.f32 %v1079, %v1219
      %v1221 = vpop.f32.mrb[0].mxu0
      %v1222 = vpop.f32.mrb[0].mxu0
      %v1223 = vadd.f32 %v1079, %v1222
      %v1224 = vpop.f32.mrb[0].mxu0
      %1225 = vmatprep.mubr.bf16.mxu0 0
      %1226 = vmatmul.mubr.bf16.gmra.mrb[0].mxu0 %v1034
      %v1227 = vpop.f32.mrb[0].mxu0
      %v1228 = vadd.f32 %v1079, %v1227
      %v1229 = vpop.f32.mrb[0].mxu0
      %v1230 = vpop.f32.mrb[0].mxu0
      %v1231 = vadd.f32 %v1079, %v1230
      %v1232 = vpop.f32.mrb[0].mxu0
      %1233 = vmatprep.mubr.bf16.mxu0 0
      %1234 = vmatmul.mubr.bf16.gmra.mrb[0].mxu0 %v1035
      %v1235 = vpop.f32.mrb[0].mxu0
      %v1236 = vadd.f32 %v1079, %v1235
      %v1237 = vpop.f32.mrb[0].mxu0
      %v1238 = vpop.f32.mrb[0].mxu0
      %v1239 = vadd.f32 %v1079, %v1238
      %v1240 = vpop.f32.mrb[0].mxu0
      %1241 = vmatprep.mubr.bf16.mxu0 0
      %1242 = vmatmul.mubr.bf16.gmra.mrb[0].mxu0 %v1036
      %v1243 = vpop.f32.mrb[0].mxu0
      %v1244 = vadd.f32 %v1079, %v1243
      %v1245 = vpop.f32.mrb[0].mxu0
      %v1246 = vpop.f32.mrb[0].mxu0
      %v1247 = vadd.f32 %v1079, %v1246
      %v1248 = vpop.f32.mrb[0].mxu0
      %1249 = vmatprep.mubr.bf16.mxu0 0
      %1250 = vmatmul.mubr.bf16.gmra.mrb[0].mxu0 %v1037
      %v1251 = vpop.f32.mrb[0].mxu0
      %v1252 = vadd.f32 %v1079, %v1251
      %v1253 = vpop.f32.mrb[0].mxu0
      %v1254 = vpop.f32.mrb[0].mxu0
      %v1255 = vadd.f32 %v1079, %v1254
      %v1256 = vpop.f32.mrb[0].mxu0
      %1257 = vmatprep.mubr.bf16.mxu0 0
      %1258 = vmatmul.mubr.bf16.gmra.mrb[0].mxu0 %v1038
      %v1259 = vpop.f32.mrb[0].mxu0
      %v1260 = vadd.f32 %v1079, %v1259
      %v1261 = vpop.f32.mrb[0].mxu0
      %v1262 = vpop.f32.mrb[0].mxu0
      %v1263 = vadd.f32 %v1079, %v1262
      %v1264 = vpop.f32.mrb[0].mxu0
      %1265 = vmatprep.mubr.bf16.mxu0 0
      %1266 = vmatmul.mubr.bf16.gmra.mrb[0].mxu0 %v1039
      %v1267 = vpop.f32.mrb[0].mxu0
      %v1268 = vadd.f32 %v1079, %v1267
      %v1269 = vpop.f32.mrb[0].mxu0
      %v1270 = vpop.f32.mrb[0].mxu0
      %v1271 = vadd.f32 %v1079, %v1270
      %v1272 = vpop.f32.mrb[0].mxu0
      %1273 = vmatprep.mubr.bf16.mxu0 0
      %1274 = vmatmul.mubr.bf16.gmra.mrb[0].mxu0 %v1040
      %v1275 = vpop.f32.mrb[0].mxu0
      %v1276 = vadd.f32 %v1079, %v1275
      %v1277 = vpop.f32.mrb[0].mxu0
      %v1278 = vpop.f32.mrb[0].mxu0
      %v1279 = vadd.f32 %v1079, %v1278
      %v1280 = vpop.f32.mrb[0].mxu0
      %1281 = vmatprep.mubr.bf16.mxu0 0
      %1282 = vmatmul.mubr.bf16.gmra.mrb[0].mxu0 %v1041
      %v1283 = vpop.f32.mrb[0].mxu0
      %v1284 = vadd.f32 %v1079, %v1283
      %v1285 = vpop.f32.mrb[0].mxu0
      %v1286 = vpop.f32.mrb[0].mxu0
      %v1287 = vadd.f32 %v1079, %v1286
      %v1288 = vpop.f32.mrb[0].mxu0
      %1289 = vmatprep.mubr.bf16.mxu0 0
      %1290 = vmatmul.mubr.bf16.gmra.mrb[0].mxu0 %v1042
      %v1291 = vpop.f32.mrb[0].mxu0
      %v1292 = vadd.f32 %v1079, %v1291
      %v1293 = vpop.f32.mrb[0].mxu0
      %v1294 = vpop.f32.mrb[0].mxu0
      %v1295 = vadd.f32 %v1079, %v1294
      %v1296 = vpop.f32.mrb[0].mxu0
      %1297 = vmatprep.mubr.bf16.mxu0 0
      %1298 = vmatmul.mubr.bf16.gmra.mrb[0].mxu0 %v1043
      %v1299 = vpop.f32.mrb[0].mxu0
      %v1300 = vadd.f32 %v1079, %v1299
      %v1301 = vpop.f32.mrb[0].mxu0
      %v1302 = vpop.f32.mrb[0].mxu0
      %v1303 = vadd.f32 %v1079, %v1302
      %v1304 = vpop.f32.mrb[0].mxu0
      %1305 = vmatprep.mubr.bf16.mxu0 0
      %1306 = vmatmul.mubr.bf16.gmra.mrb[0].mxu0 %v1044
      %v1307 = vpop.f32.mrb[0].mxu0
      %v1308 = vadd.f32 %v1079, %v1307
      %v1309 = vpop.f32.mrb[0].mxu0
      %v1310 = vpop.f32.mrb[0].mxu0
      %v1311 = vadd.f32 %v1079, %v1310
      %v1312 = vpop.f32.mrb[0].mxu0
      %1313 = vmatprep.mubr.bf16.mxu0 0
      %1314 = vmatmul.mubr.bf16.gmra.mrb[0].mxu0 %v1045
      %v1315 = vpop.f32.mrb[0].mxu0
      %v1316 = vadd.f32 %v1079, %v1315
      %v1317 = vpop.f32.mrb[0].mxu0
      %v1318 = vpop.f32.mrb[0].mxu0
      %v1319 = vadd.f32 %v1079, %v1318
      %v1320 = vpop.f32.mrb[0].mxu0
      %1321 = vmatprep.mubr.bf16.mxu0 0
      %1322 = vmatmul.mubr.bf16.gmra.mrb[0].mxu0 %v1046
      %v1323 = vpop.f32.mrb[0].mxu0
      %v1324 = vadd.f32 %v1079, %v1323
      %v1325 = vpop.f32.mrb[0].mxu0
      %v1326 = vpop.f32.mrb[0].mxu0
      %v1327 = vadd.f32 %v1079, %v1326
      %v1328 = vpop.f32.mrb[0].mxu0
      %1329 = vmatprep.mubr.bf16.mxu0 0
      %1330 = vmatmul.mubr.bf16.gmra.mrb[0].mxu0 %v1047
      %v1331 = vpop.f32.mrb[0].mxu0
      %v1332 = vadd.f32 %v1079, %v1331
      %v1333 = vpop.f32.mrb[0].mxu0
      %v1334 = vpop.f32.mrb[0].mxu0
      %v1335 = vadd.f32 %v1079, %v1334
      %v1336 = vpop.f32.mrb[0].mxu0
      %1337 = vmatprep.mubr.bf16.mxu0 0
      %1338 = vmatmul.mubr.bf16.gmra.mrb[0].mxu0 %v1048
      %v1339 = vpop.f32.mrb[0].mxu0
      %v1340 = vadd.f32 %v1079, %v1339
      %v1341 = vpop.f32.mrb[0].mxu0
      %v1342 = vpop.f32.mrb[0].mxu0
      %v1343 = vadd.f32 %v1079, %v1342
      %v1344 = vpop.f32.mrb[0].mxu0
      %1345 = vmatprep.mubr.bf16.mxu0 0
      %1346 = vmatmul.mubr.bf16.gmra.mrb[0].mxu0 %v1049
      %v1347 = vpop.f32.mrb[0].mxu0
      %v1348 = vadd.f32 %v1079, %v1347
      %v1349 = vpop.f32.mrb[0].mxu0
      %v1350 = vpop.f32.mrb[0].mxu0
      %v1351 = vadd.f32 %v1079, %v1350
      %v1352 = vpop.f32.mrb[0].mxu0
      %1353 = vmatprep.mubr.bf16.mxu0 0
      %1354 = vmatmul.mubr.bf16.gmra.mrb[0].mxu0 %v1050
      %v1355 = vpop.f32.mrb[0].mxu0
      %v1356 = vadd.f32 %v1079, %v1355
      %v1357 = vpop.f32.mrb[0].mxu0
      %v1358 = vpop.f32.mrb[0].mxu0
      %v1359 = vadd.f32 %v1079, %v1358
      %v1360 = vpop.f32.mrb[0].mxu0
      %1361 = vmatprep.mubr.bf16.mxu0 0
      %1362 = vmatmul.mubr.bf16.gmra.mrb[0].mxu0 %v1051
      %v1363 = vpop.f32.mrb[0].mxu0
      %v1364 = vadd.f32 %v1079, %v1363
      %v1365 = vpop.f32.mrb[0].mxu0
      %v1366 = vpop.f32.mrb[0].mxu0
      %v1367 = vadd.f32 %v1079, %v1366
      %v1368 = vpop.f32.mrb[0].mxu0
      %1369 = vmatprep.mubr.bf16.mxu0 0
      %1370 = vmatmul.mubr.bf16.gmra.mrb[0].mxu0 %v1052
      %v1371 = vpop.f32.mrb[0].mxu0
      %v1372 = vadd.f32 %v1079, %v1371
      %v1373 = vpop.f32.mrb[0].mxu0
      %v1374 = vpop.f32.mrb[0].mxu0
      %v1375 = vadd.f32 %v1079, %v1374
      %v1376 = vpop.f32.mrb[0].mxu0
      %1377 = vmatprep.mubr.bf16.mxu0 0
      %1378 = vmatmul.mubr.bf16.gmra.mrb[0].mxu0 %v1053
      %v1379 = vpop.f32.mrb[0].mxu0
      %v1380 = vadd.f32 %v1079, %v1379
      %v1381 = vpop.f32.mrb[0].mxu0
      %v1382 = vpop.f32.mrb[0].mxu0
      %v1383 = vadd.f32 %v1079, %v1382
      %v1384 = vpop.f32.mrb[0].mxu0
      %1385 = vmatprep.mubr.bf16.mxu0 0
      %1386 = vmatmul.mubr.bf16.gmra.mrb[0].mxu0 %v1054
      %v1387 = vpop.f32.mrb[0].mxu0
      %v1388 = vadd.f32 %v1079, %v1387
      %v1389 = vpop.f32.mrb[0].mxu0
      %v1390 = vpop.f32.mrb[0].mxu0
      %v1391 = vadd.f32 %v1079, %v1390
      %v1392 = vpop.f32.mrb[0].mxu0
      %1393 = vmatprep.mubr.bf16.mxu0 0
      %1394 = vmatmul.mubr.bf16.gmra.mrb[0].mxu0 %v1055
      %v1395 = vpop.f32.mrb[0].mxu0
      %v1396 = vadd.f32 %v1079, %v1395
      %v1397 = vpop.f32.mrb[0].mxu0
      %v1398 = vpop.f32.mrb[0].mxu0
      %v1399 = vadd.f32 %v1079, %v1398
      %v1400 = vpop.f32.mrb[0].mxu0
      %1401 = vmatprep.mubr.bf16.mxu0 0
      %1402 = vmatmul.mubr.bf16.gmra.mrb[0].mxu0 %v1056
      %v1403 = vpop.f32.mrb[0].mxu0
      %v1404 = vadd.f32 %v1079, %v1403
      %v1405 = vpop.f32.mrb[0].mxu0
      %v1406 = vpop.f32.mrb[0].mxu0
      %v1407 = vadd.f32 %v1079, %v1406
      %v1408 = vpop.f32.mrb[0].mxu0
      %1409 = vmatprep.mubr.bf16.mxu0 0
      %1410 = vmatmul.mubr.bf16.gmra.mrb[0].mxu0 %v1057
      %v1411 = vpop.f32.mrb[0].mxu0
      %v1412 = vadd.f32 %v1079, %v1411
      %v1413 = vpop.f32.mrb[0].mxu0
      %v1414 = vpop.f32.mrb[0].mxu0
      %v1415 = vadd.f32 %v1079, %v1414
      %v1416 = vpop.f32.mrb[0].mxu0
      %1417 = vdwg.mxu0
      %v1418 = vmax.f32 %v1164, 0.0
      %v1419 = vmax.f32 %v1167, 0.0
      %v1420 = vmax.f32 %v1172, 0.0
      %v1421 = vmax.f32 %v1175, 0.0
      %v1422 = vmax.f32 %v1180, 0.0
      %v1423 = vmax.f32 %v1183, 0.0
      %v1424 = vmax.f32 %v1188, 0.0
      %v1425 = vmax.f32 %v1191, 0.0
      %v1426 = vmax.f32 %v1196, 0.0
      %v1427 = vmax.f32 %v1199, 0.0
      %v1428 = vmax.f32 %v1204, 0.0
      %v1429 = vmax.f32 %v1207, 0.0
      %v1430 = vmax.f32 %v1212, 0.0
      %v1431 = vmax.f32 %v1215, 0.0
      %v1432 = vmax.f32 %v1220, 0.0
      %v1433 = vmax.f32 %v1223, 0.0
      %v1434 = vmax.f32 %v1228, 0.0
      %v1435 = vmax.f32 %v1231, 0.0
      %v1436 = vmax.f32 %v1236, 0.0
      %v1437 = vmax.f32 %v1239, 0.0
      %v1438 = vmax.f32 %v1244, 0.0
      %v1439 = vmax.f32 %v1247, 0.0
      %v1440 = vmax.f32 %v1252, 0.0
      %v1441 = vmax.f32 %v1255, 0.0
      %v1442 = vmax.f32 %v1260, 0.0
      %v1443 = vmax.f32 %v1263, 0.0
      %v1444 = vmax.f32 %v1268, 0.0
      %v1445 = vmax.f32 %v1271, 0.0
      %v1446 = vmax.f32 %v1276, 0.0
      %v1447 = vmax.f32 %v1279, 0.0
      %v1448 = vmax.f32 %v1284, 0.0
      %v1449 = vmax.f32 %v1287, 0.0
      %v1450 = vmax.f32 %v1292, 0.0
      %v1451 = vmax.f32 %v1295, 0.0
      %v1452 = vmax.f32 %v1300, 0.0
      %v1453 = vmax.f32 %v1303, 0.0
      %v1454 = vmax.f32 %v1308, 0.0
      %v1455 = vmax.f32 %v1311, 0.0
      %v1456 = vmax.f32 %v1316, 0.0
      %v1457 = vmax.f32 %v1319, 0.0
      %v1458 = vmax.f32 %v1324, 0.0
      %v1459 = vmax.f32 %v1327, 0.0
      %v1460 = vmax.f32 %v1332, 0.0
      %v1461 = vmax.f32 %v1335, 0.0
      %v1462 = vmax.f32 %v1340, 0.0
      %v1463 = vmax.f32 %v1343, 0.0
      %v1464 = vmax.f32 %v1348, 0.0
      %v1465 = vmax.f32 %v1351, 0.0
      %v1466 = vmax.f32 %v1356, 0.0
      %v1467 = vmax.f32 %v1359, 0.0
      %v1468 = vmax.f32 %v1364, 0.0
      %v1469 = vmax.f32 %v1367, 0.0
      %v1470 = vmax.f32 %v1372, 0.0
      %v1471 = vmax.f32 %v1375, 0.0
      %v1472 = vmax.f32 %v1380, 0.0
      %v1473 = vmax.f32 %v1383, 0.0
      %v1474 = vmax.f32 %v1388, 0.0
      %v1475 = vmax.f32 %v1391, 0.0
      %v1476 = vmax.f32 %v1396, 0.0
      %v1477 = vmax.f32 %v1399, 0.0
      %v1478 = vmax.f32 %v1404, 0.0
      %v1479 = vmax.f32 %v1407, 0.0
      %v1480 = vmax.f32 %v1412, 0.0
      %v1481 = vmax.f32 %v1415, 0.0
      %v1482 = vpack.c.bf16 %v1419, %v1418
      %v1483 = vpack.c.bf16 %v1421, %v1420
      %v1484 = vpack.c.bf16 %v1423, %v1422
      %v1485 = vpack.c.bf16 %v1425, %v1424
      %v1486 = vpack.c.bf16 %v1427, %v1426
      %v1487 = vpack.c.bf16 %v1429, %v1428
      %v1488 = vpack.c.bf16 %v1431, %v1430
      %v1489 = vpack.c.bf16 %v1433, %v1432
      %v1490 = vpack.c.bf16 %v1435, %v1434
      %v1491 = vpack.c.bf16 %v1437, %v1436
      %v1492 = vpack.c.bf16 %v1439, %v1438
      %v1493 = vpack.c.bf16 %v1441, %v1440
      %v1494 = vpack.c.bf16 %v1443, %v1442
      %v1495 = vpack.c.bf16 %v1445, %v1444
      %v1496 = vpack.c.bf16 %v1447, %v1446
      %v1497 = vpack.c.bf16 %v1449, %v1448
      %v1498 = vpack.c.bf16 %v1451, %v1450
      %v1499 = vpack.c.bf16 %v1453, %v1452
      %v1500 = vpack.c.bf16 %v1455, %v1454
      %v1501 = vpack.c.bf16 %v1457, %v1456
      %v1502 = vpack.c.bf16 %v1459, %v1458
      %v1503 = vpack.c.bf16 %v1461, %v1460
      %v1504 = vpack.c.bf16 %v1463, %v1462
      %v1505 = vpack.c.bf16 %v1465, %v1464
      %v1506 = vpack.c.bf16 %v1467, %v1466
      %v1507 = vpack.c.bf16 %v1469, %v1468
      %v1508 = vpack.c.bf16 %v1471, %v1470
      %v1509 = vpack.c.bf16 %v1473, %v1472
      %v1510 = vpack.c.bf16 %v1475, %v1474
      %v1511 = vpack.c.bf16 %v1477, %v1476
      %v1512 = vpack.c.bf16 %v1479, %v1478
      %v1513 = vpack.c.bf16 %v1481, %v1480
      %v1514 = vld [vmem:[%s5] sm:$0xf]
      %v1515 = vld [vmem:[%s5 + $0x4] sm:$0xf]
      %v1516 = vld [vmem:[%s5 + $0x8] sm:$0xf]
      %v1517 = vld [vmem:[%s5 + $0xc] sm:$0xf]
      %v1518 = vld [vmem:[%s5 + $0x10] sm:$0xf]
      %v1519 = vld [vmem:[%s5 + $0x14] sm:$0xf]
      %v1520 = vld [vmem:[%s5 + $0x18] sm:$0xf]
      %v1521 = vld [vmem:[%s5 + $0x1c] sm:$0xf]
      %v1522 = vld [vmem:[%s5 + $0x20] sm:$0xf]
      %v1523 = vld [vmem:[%s5 + $0x24] sm:$0xf]
      %v1524 = vld [vmem:[%s5 + $0x28] sm:$0xf]
      %v1525 = vld [vmem:[%s5 + $0x2c] sm:$0xf]
      %v1526 = vld [vmem:[%s5 + $0x30] sm:$0xf]
      %v1527 = vld [vmem:[%s5 + $0x34] sm:$0xf]
      %v1528 = vld [vmem:[%s5 + $0x38] sm:$0xf]
      %v1529 = vld [vmem:[%s5 + $0x3c] sm:$0xf]
      %v1530 = vld [vmem:[%s6] sm:$0x1]
      %v1532 = vlaneseq
      %v1533 = vshrl.u32 %v1532, 7
      %v1534 = vsub.s32 0, %v1533
      %v1535 = vrot.slane %v1530, %v1534
      %v1553 = vunpack.c.l.b16 %v1514
      %v1554 = vunpack.c.l.b16 %v1515
      %v1555 = vunpack.c.l.b16 %v1516
      %v1556 = vunpack.c.l.b16 %v1517
      %v1557 = vunpack.c.l.b16 %v1518
      %v1558 = vunpack.c.l.b16 %v1519
      %v1559 = vunpack.c.l.b16 %v1520
      %v1560 = vunpack.c.l.b16 %v1521
      %v1561 = vunpack.c.l.b16 %v1522
      %v1562 = vunpack.c.l.b16 %v1523
      %v1563 = vunpack.c.l.b16 %v1524
      %v1564 = vunpack.c.l.b16 %v1525
      %v1565 = vunpack.c.l.b16 %v1526
      %v1566 = vunpack.c.l.b16 %v1527
      %v1567 = vunpack.c.l.b16 %v1528
      %v1568 = vunpack.c.l.b16 %v1529
      %v1569 = vpack.c.b16 %v1554, %v1553
      %v1570 = vpack.c.b16 %v1556, %v1555
      %v1571 = vpack.c.b16 %v1558, %v1557
      %v1572 = vpack.c.b16 %v1560, %v1559
      %v1573 = vpack.c.b16 %v1562, %v1561
      %v1574 = vpack.c.b16 %v1564, %v1563
      %v1575 = vpack.c.b16 %v1566, %v1565
      %v1576 = vpack.c.b16 %v1568, %v1567
      %1585 = vmatprep.subr.bf16.mxu0 0
      %1586 = vmatpush1.bf16.msra.mxu0 %v1569
      %1587 = vmatprep.subr.bf16.mxu0 0
      %1588 = vmatpush1.bf16.msra.mxu0 %v1570
      %1589 = vmatprep.subr.bf16.mxu0 0
      %1590 = vmatpush1.bf16.msra.mxu0 %v1571
      %1591 = vmatprep.subr.bf16.mxu0 0
      %1592 = vmatpush1.bf16.msra.mxu0 %v1572
      %1593 = vmatprep.subr.bf16.mxu0 0
      %1594 = vmatpush1.bf16.msra.mxu0 %v1573
      %1595 = vmatprep.subr.bf16.mxu0 0
      %1596 = vmatpush1.bf16.msra.mxu0 %v1574
      %1597 = vmatprep.subr.bf16.mxu0 0
      %1598 = vmatpush1.bf16.msra.mxu0 %v1575
      %1599 = vmatprep.subr.bf16.mxu0 0
      %1600 = vmatpush1.bf16.msra.mxu0 %v1576
      %1601 = vmatprep.subr.bf16.mxu0 0
      %1602 = vmatpush1.bf16.msra.mxu0 0
      %1603 = vmatprep.subr.bf16.mxu0 0
      %1604 = vmatpush1.bf16.msra.mxu0 0
      %1605 = vmatprep.subr.bf16.mxu0 0
      %1606 = vmatpush1.bf16.msra.mxu0 0
      %1607 = vmatprep.subr.bf16.mxu0 0
      %1608 = vmatpush1.bf16.msra.mxu0 0
      %1609 = vmatprep.subr.bf16.mxu0 0
      %1610 = vmatpush1.bf16.msra.mxu0 0
      %1611 = vmatprep.subr.bf16.mxu0 0
      %1612 = vmatpush1.bf16.msra.mxu0 0
      %1613 = vmatprep.subr.bf16.mxu0 0
      %1614 = vmatpush1.bf16.msra.mxu0 0
      %1615 = vmatprep.subr.bf16.mxu0 0
      %1616 = vmatpush1.bf16.msra.mxu0 0
      %1617 = vmatprep.mubr.bf16.mxu0 0
      %1618 = vmatmul.mubr.bf16.gmra.mrb[0].mxu0 %v1482
      %v1619 = vpop.f32.mrb[0].mxu0
      %v1620 = vadd.f32 %v1535, %v1619
      %v1621 = vpop.f32.mrb[0].mxu0
      %v1622 = vpop.f32.mrb[0].mxu0
      %v1623 = vadd.f32 %v1535, %v1622
      %v1624 = vpop.f32.mrb[0].mxu0
      %1625 = vmatprep.mubr.bf16.mxu0 0
      %1626 = vmatmul.mubr.bf16.gmra.mrb[0].mxu0 %v1483
      %v1627 = vpop.f32.mrb[0].mxu0
      %v1628 = vadd.f32 %v1535, %v1627
      %v1629 = vpop.f32.mrb[0].mxu0
      %v1630 = vpop.f32.mrb[0].mxu0
      %v1631 = vadd.f32 %v1535, %v1630
      %v1632 = vpop.f32.mrb[0].mxu0
      %1633 = vmatprep.mubr.bf16.mxu0 0
      %1634 = vmatmul.mubr.bf16.gmra.mrb[0].mxu0 %v1484
      %v1635 = vpop.f32.mrb[0].mxu0
      %v1636 = vadd.f32 %v1535, %v1635
      %v1637 = vpop.f32.mrb[0].mxu0
      %v1638 = vpop.f32.mrb[0].mxu0
      %v1639 = vadd.f32 %v1535, %v1638
      %v1640 = vpop.f32.mrb[0].mxu0
      %1641 = vmatprep.mubr.bf16.mxu0 0
      %1642 = vmatmul.mubr.bf16.gmra.mrb[0].mxu0 %v1485
      %v1643 = vpop.f32.mrb[0].mxu0
      %v1644 = vadd.f32 %v1535, %v1643
      %v1645 = vpop.f32.mrb[0].mxu0
      %v1646 = vpop.f32.mrb[0].mxu0
      %v1647 = vadd.f32 %v1535, %v1646
      %v1648 = vpop.f32.mrb[0].mxu0
      %1649 = vmatprep.mubr.bf16.mxu0 0
      %1650 = vmatmul.mubr.bf16.gmra.mrb[0].mxu0 %v1486
      %v1651 = vpop.f32.mrb[0].mxu0
      %v1652 = vadd.f32 %v1535, %v1651
      %v1653 = vpop.f32.mrb[0].mxu0
      %v1654 = vpop.f32.mrb[0].mxu0
      %v1655 = vadd.f32 %v1535, %v1654
      %v1656 = vpop.f32.mrb[0].mxu0
      %1657 = vmatprep.mubr.bf16.mxu0 0
      %1658 = vmatmul.mubr.bf16.gmra.mrb[0].mxu0 %v1487
      %v1659 = vpop.f32.mrb[0].mxu0
      %v1660 = vadd.f32 %v1535, %v1659
      %v1661 = vpop.f32.mrb[0].mxu0
      %v1662 = vpop.f32.mrb[0].mxu0
      %v1663 = vadd.f32 %v1535, %v1662
      %v1664 = vpop.f32.mrb[0].mxu0
      %1665 = vmatprep.mubr.bf16.mxu0 0
      %1666 = vmatmul.mubr.bf16.gmra.mrb[0].mxu0 %v1488
      %v1667 = vpop.f32.mrb[0].mxu0
      %v1668 = vadd.f32 %v1535, %v1667
      %v1669 = vpop.f32.mrb[0].mxu0
      %v1670 = vpop.f32.mrb[0].mxu0
      %v1671 = vadd.f32 %v1535, %v1670
      %v1672 = vpop.f32.mrb[0].mxu0
      %1673 = vmatprep.mubr.bf16.mxu0 0
      %1674 = vmatmul.mubr.bf16.gmra.mrb[0].mxu0 %v1489
      %v1675 = vpop.f32.mrb[0].mxu0
      %v1676 = vadd.f32 %v1535, %v1675
      %v1677 = vpop.f32.mrb[0].mxu0
      %v1678 = vpop.f32.mrb[0].mxu0
      %v1679 = vadd.f32 %v1535, %v1678
      %v1680 = vpop.f32.mrb[0].mxu0
      %1681 = vmatprep.mubr.bf16.mxu0 0
      %1682 = vmatmul.mubr.bf16.gmra.mrb[0].mxu0 %v1490
      %v1683 = vpop.f32.mrb[0].mxu0
      %v1684 = vadd.f32 %v1535, %v1683
      %v1685 = vpop.f32.mrb[0].mxu0
      %v1686 = vpop.f32.mrb[0].mxu0
      %v1687 = vadd.f32 %v1535, %v1686
      %v1688 = vpop.f32.mrb[0].mxu0
      %1689 = vmatprep.mubr.bf16.mxu0 0
      %1690 = vmatmul.mubr.bf16.gmra.mrb[0].mxu0 %v1491
      %v1691 = vpop.f32.mrb[0].mxu0
      %v1692 = vadd.f32 %v1535, %v1691
      %v1693 = vpop.f32.mrb[0].mxu0
      %v1694 = vpop.f32.mrb[0].mxu0
      %v1695 = vadd.f32 %v1535, %v1694
      %v1696 = vpop.f32.mrb[0].mxu0
      %1697 = vmatprep.mubr.bf16.mxu0 0
      %1698 = vmatmul.mubr.bf16.gmra.mrb[0].mxu0 %v1492
      %v1699 = vpop.f32.mrb[0].mxu0
      %v1700 = vadd.f32 %v1535, %v1699
      %v1701 = vpop.f32.mrb[0].mxu0
      %v1702 = vpop.f32.mrb[0].mxu0
      %v1703 = vadd.f32 %v1535, %v1702
      %v1704 = vpop.f32.mrb[0].mxu0
      %1705 = vmatprep.mubr.bf16.mxu0 0
      %1706 = vmatmul.mubr.bf16.gmra.mrb[0].mxu0 %v1493
      %v1707 = vpop.f32.mrb[0].mxu0
      %v1708 = vadd.f32 %v1535, %v1707
      %v1709 = vpop.f32.mrb[0].mxu0
      %v1710 = vpop.f32.mrb[0].mxu0
      %v1711 = vadd.f32 %v1535, %v1710
      %v1712 = vpop.f32.mrb[0].mxu0
      %1713 = vmatprep.mubr.bf16.mxu0 0
      %1714 = vmatmul.mubr.bf16.gmra.mrb[0].mxu0 %v1494
      %v1715 = vpop.f32.mrb[0].mxu0
      %v1716 = vadd.f32 %v1535, %v1715
      %v1717 = vpop.f32.mrb[0].mxu0
      %v1718 = vpop.f32.mrb[0].mxu0
      %v1719 = vadd.f32 %v1535, %v1718
      %v1720 = vpop.f32.mrb[0].mxu0
      %1721 = vmatprep.mubr.bf16.mxu0 0
      %1722 = vmatmul.mubr.bf16.gmra.mrb[0].mxu0 %v1495
      %v1723 = vpop.f32.mrb[0].mxu0
      %v1724 = vadd.f32 %v1535, %v1723
      %v1725 = vpop.f32.mrb[0].mxu0
      %v1726 = vpop.f32.mrb[0].mxu0
      %v1727 = vadd.f32 %v1535, %v1726
      %v1728 = vpop.f32.mrb[0].mxu0
      %1729 = vmatprep.mubr.bf16.mxu0 0
      %1730 = vmatmul.mubr.bf16.gmra.mrb[0].mxu0 %v1496
      %v1731 = vpop.f32.mrb[0].mxu0
      %v1732 = vadd.f32 %v1535, %v1731
      %v1733 = vpop.f32.mrb[0].mxu0
      %v1734 = vpop.f32.mrb[0].mxu0
      %v1735 = vadd.f32 %v1535, %v1734
      %v1736 = vpop.f32.mrb[0].mxu0
      %1737 = vmatprep.mubr.bf16.mxu0 0
      %1738 = vmatmul.mubr.bf16.gmra.mrb[0].mxu0 %v1497
      %v1739 = vpop.f32.mrb[0].mxu0
      %v1740 = vadd.f32 %v1535, %v1739
      %v1741 = vpop.f32.mrb[0].mxu0
      %v1742 = vpop.f32.mrb[0].mxu0
      %v1743 = vadd.f32 %v1535, %v1742
      %v1744 = vpop.f32.mrb[0].mxu0
      %1745 = vmatprep.mubr.bf16.mxu0 0
      %1746 = vmatmul.mubr.bf16.gmra.mrb[0].mxu0 %v1498
      %v1747 = vpop.f32.mrb[0].mxu0
      %v1748 = vadd.f32 %v1535, %v1747
      %v1749 = vpop.f32.mrb[0].mxu0
      %v1750 = vpop.f32.mrb[0].mxu0
      %v1751 = vadd.f32 %v1535, %v1750
      %v1752 = vpop.f32.mrb[0].mxu0
      %1753 = vmatprep.mubr.bf16.mxu0 0
      %1754 = vmatmul.mubr.bf16.gmra.mrb[0].mxu0 %v1499
      %v1755 = vpop.f32.mrb[0].mxu0
      %v1756 = vadd.f32 %v1535, %v1755
      %v1757 = vpop.f32.mrb[0].mxu0
      %v1758 = vpop.f32.mrb[0].mxu0
      %v1759 = vadd.f32 %v1535, %v1758
      %v1760 = vpop.f32.mrb[0].mxu0
      %1761 = vmatprep.mubr.bf16.mxu0 0
      %1762 = vmatmul.mubr.bf16.gmra.mrb[0].mxu0 %v1500
      %v1763 = vpop.f32.mrb[0].mxu0
      %v1764 = vadd.f32 %v1535, %v1763
      %v1765 = vpop.f32.mrb[0].mxu0
      %v1766 = vpop.f32.mrb[0].mxu0
      %v1767 = vadd.f32 %v1535, %v1766
      %v1768 = vpop.f32.mrb[0].mxu0
      %1769 = vmatprep.mubr.bf16.mxu0 0
      %1770 = vmatmul.mubr.bf16.gmra.mrb[0].mxu0 %v1501
      %v1771 = vpop.f32.mrb[0].mxu0
      %v1772 = vadd.f32 %v1535, %v1771
      %v1773 = vpop.f32.mrb[0].mxu0
      %v1774 = vpop.f32.mrb[0].mxu0
      %v1775 = vadd.f32 %v1535, %v1774
      %v1776 = vpop.f32.mrb[0].mxu0
      %1777 = vmatprep.mubr.bf16.mxu0 0
      %1778 = vmatmul.mubr.bf16.gmra.mrb[0].mxu0 %v1502
      %v1779 = vpop.f32.mrb[0].mxu0
      %v1780 = vadd.f32 %v1535, %v1779
      %v1781 = vpop.f32.mrb[0].mxu0
      %v1782 = vpop.f32.mrb[0].mxu0
      %v1783 = vadd.f32 %v1535, %v1782
      %v1784 = vpop.f32.mrb[0].mxu0
      %1785 = vmatprep.mubr.bf16.mxu0 0
      %1786 = vmatmul.mubr.bf16.gmra.mrb[0].mxu0 %v1503
      %v1787 = vpop.f32.mrb[0].mxu0
      %v1788 = vadd.f32 %v1535, %v1787
      %v1789 = vpop.f32.mrb[0].mxu0
      %v1790 = vpop.f32.mrb[0].mxu0
      %v1791 = vadd.f32 %v1535, %v1790
      %v1792 = vpop.f32.mrb[0].mxu0
      %1793 = vmatprep.mubr.bf16.mxu0 0
      %1794 = vmatmul.mubr.bf16.gmra.mrb[0].mxu0 %v1504
      %v1795 = vpop.f32.mrb[0].mxu0
      %v1796 = vadd.f32 %v1535, %v1795
      %v1797 = vpop.f32.mrb[0].mxu0
      %v1798 = vpop.f32.mrb[0].mxu0
      %v1799 = vadd.f32 %v1535, %v1798
      %v1800 = vpop.f32.mrb[0].mxu0
      %1801 = vmatprep.mubr.bf16.mxu0 0
      %1802 = vmatmul.mubr.bf16.gmra.mrb[0].mxu0 %v1505
      %v1803 = vpop.f32.mrb[0].mxu0
      %v1804 = vadd.f32 %v1535, %v1803
      %v1805 = vpop.f32.mrb[0].mxu0
      %v1806 = vpop.f32.mrb[0].mxu0
      %v1807 = vadd.f32 %v1535, %v1806
      %v1808 = vpop.f32.mrb[0].mxu0
      %1809 = vmatprep.mubr.bf16.mxu0 0
      %1810 = vmatmul.mubr.bf16.gmra.mrb[0].mxu0 %v1506
      %v1811 = vpop.f32.mrb[0].mxu0
      %v1812 = vadd.f32 %v1535, %v1811
      %v1813 = vpop.f32.mrb[0].mxu0
      %v1814 = vpop.f32.mrb[0].mxu0
      %v1815 = vadd.f32 %v1535, %v1814
      %v1816 = vpop.f32.mrb[0].mxu0
      %1817 = vmatprep.mubr.bf16.mxu0 0
      %1818 = vmatmul.mubr.bf16.gmra.mrb[0].mxu0 %v1507
      %v1819 = vpop.f32.mrb[0].mxu0
      %v1820 = vadd.f32 %v1535, %v1819
      %v1821 = vpop.f32.mrb[0].mxu0
      %v1822 = vpop.f32.mrb[0].mxu0
      %v1823 = vadd.f32 %v1535, %v1822
      %v1824 = vpop.f32.mrb[0].mxu0
      %1825 = vmatprep.mubr.bf16.mxu0 0
      %1826 = vmatmul.mubr.bf16.gmra.mrb[0].mxu0 %v1508
      %v1827 = vpop.f32.mrb[0].mxu0
      %v1828 = vadd.f32 %v1535, %v1827
      %v1829 = vpop.f32.mrb[0].mxu0
      %v1830 = vpop.f32.mrb[0].mxu0
      %v1831 = vadd.f32 %v1535, %v1830
      %v1832 = vpop.f32.mrb[0].mxu0
      %1833 = vmatprep.mubr.bf16.mxu0 0
      %1834 = vmatmul.mubr.bf16.gmra.mrb[0].mxu0 %v1509
      %v1835 = vpop.f32.mrb[0].mxu0
      %v1836 = vadd.f32 %v1535, %v1835
      %v1837 = vpop.f32.mrb[0].mxu0
      %v1838 = vpop.f32.mrb[0].mxu0
      %v1839 = vadd.f32 %v1535, %v1838
      %v1840 = vpop.f32.mrb[0].mxu0
      %1841 = vmatprep.mubr.bf16.mxu0 0
      %1842 = vmatmul.mubr.bf16.gmra.mrb[0].mxu0 %v1510
      %v1843 = vpop.f32.mrb[0].mxu0
      %v1844 = vadd.f32 %v1535, %v1843
      %v1845 = vpop.f32.mrb[0].mxu0
      %v1846 = vpop.f32.mrb[0].mxu0
      %v1847 = vadd.f32 %v1535, %v1846
      %v1848 = vpop.f32.mrb[0].mxu0
      %1849 = vmatprep.mubr.bf16.mxu0 0
      %1850 = vmatmul.mubr.bf16.gmra.mrb[0].mxu0 %v1511
      %v1851 = vpop.f32.mrb[0].mxu0
      %v1852 = vadd.f32 %v1535, %v1851
      %v1853 = vpop.f32.mrb[0].mxu0
      %v1854 = vpop.f32.mrb[0].mxu0
      %v1855 = vadd.f32 %v1535, %v1854
      %v1856 = vpop.f32.mrb[0].mxu0
      %1857 = vmatprep.mubr.bf16.mxu0 0
      %1858 = vmatmul.mubr.bf16.gmra.mrb[0].mxu0 %v1512
      %v1859 = vpop.f32.mrb[0].mxu0
      %v1860 = vadd.f32 %v1535, %v1859
      %v1861 = vpop.f32.mrb[0].mxu0
      %v1862 = vpop.f32.mrb[0].mxu0
      %v1863 = vadd.f32 %v1535, %v1862
      %v1864 = vpop.f32.mrb[0].mxu0
      %1865 = vmatprep.mubr.bf16.mxu0 0
      %1866 = vmatmul.mubr.bf16.gmra.mrb[0].mxu0 %v1513
      %v1867 = vpop.f32.mrb[0].mxu0
      %v1868 = vadd.f32 %v1535, %v1867
      %v1869 = vpop.f32.mrb[0].mxu0
      %v1870 = vpop.f32.mrb[0].mxu0
      %v1871 = vadd.f32 %v1535, %v1870
      %v1872 = vpop.f32.mrb[0].mxu0
      %1873 = vdwg.mxu0
      %v1874 = vmax.f32 %v1620, 0.0
      %v1875 = vmax.f32 %v1623, 0.0
      %v1876 = vmax.f32 %v1628, 0.0
      %v1877 = vmax.f32 %v1631, 0.0
      %v1878 = vmax.f32 %v1636, 0.0
      %v1879 = vmax.f32 %v1639, 0.0
      %v1880 = vmax.f32 %v1644, 0.0
      %v1881 = vmax.f32 %v1647, 0.0
      %v1882 = vmax.f32 %v1652, 0.0
      %v1883 = vmax.f32 %v1655, 0.0
      %v1884 = vmax.f32 %v1660, 0.0
      %v1885 = vmax.f32 %v1663, 0.0
      %v1886 = vmax.f32 %v1668, 0.0
      %v1887 = vmax.f32 %v1671, 0.0
      %v1888 = vmax.f32 %v1676, 0.0
      %v1889 = vmax.f32 %v1679, 0.0
      %v1890 = vmax.f32 %v1684, 0.0
      %v1891 = vmax.f32 %v1687, 0.0
      %v1892 = vmax.f32 %v1692, 0.0
      %v1893 = vmax.f32 %v1695, 0.0
      %v1894 = vmax.f32 %v1700, 0.0
      %v1895 = vmax.f32 %v1703, 0.0
      %v1896 = vmax.f32 %v1708, 0.0
      %v1897 = vmax.f32 %v1711, 0.0
      %v1898 = vmax.f32 %v1716, 0.0
      %v1899 = vmax.f32 %v1719, 0.0
      %v1900 = vmax.f32 %v1724, 0.0
      %v1901 = vmax.f32 %v1727, 0.0
      %v1902 = vmax.f32 %v1732, 0.0
      %v1903 = vmax.f32 %v1735, 0.0
      %v1904 = vmax.f32 %v1740, 0.0
      %v1905 = vmax.f32 %v1743, 0.0
      %v1906 = vmax.f32 %v1748, 0.0
      %v1907 = vmax.f32 %v1751, 0.0
      %v1908 = vmax.f32 %v1756, 0.0
      %v1909 = vmax.f32 %v1759, 0.0
      %v1910 = vmax.f32 %v1764, 0.0
      %v1911 = vmax.f32 %v1767, 0.0
      %v1912 = vmax.f32 %v1772, 0.0
      %v1913 = vmax.f32 %v1775, 0.0
      %v1914 = vmax.f32 %v1780, 0.0
      %v1915 = vmax.f32 %v1783, 0.0
      %v1916 = vmax.f32 %v1788, 0.0
      %v1917 = vmax.f32 %v1791, 0.0
      %v1918 = vmax.f32 %v1796, 0.0
      %v1919 = vmax.f32 %v1799, 0.0
      %v1920 = vmax.f32 %v1804, 0.0
      %v1921 = vmax.f32 %v1807, 0.0
      %v1922 = vmax.f32 %v1812, 0.0
      %v1923 = vmax.f32 %v1815, 0.0
      %v1924 = vmax.f32 %v1820, 0.0
      %v1925 = vmax.f32 %v1823, 0.0
      %v1926 = vmax.f32 %v1828, 0.0
      %v1927 = vmax.f32 %v1831, 0.0
      %v1928 = vmax.f32 %v1836, 0.0
      %v1929 = vmax.f32 %v1839, 0.0
      %v1930 = vmax.f32 %v1844, 0.0
      %v1931 = vmax.f32 %v1847, 0.0
      %v1932 = vmax.f32 %v1852, 0.0
      %v1933 = vmax.f32 %v1855, 0.0
      %v1934 = vmax.f32 %v1860, 0.0
      %v1935 = vmax.f32 %v1863, 0.0
      %v1936 = vmax.f32 %v1868, 0.0
      %v1937 = vmax.f32 %v1871, 0.0
      %v1938 = vpack.c.bf16 %v1875, %v1874
      %v1939 = vpack.c.bf16 %v1877, %v1876
      %v1940 = vpack.c.bf16 %v1879, %v1878
      %v1941 = vpack.c.bf16 %v1881, %v1880
      %v1942 = vpack.c.bf16 %v1883, %v1882
      %v1943 = vpack.c.bf16 %v1885, %v1884
      %v1944 = vpack.c.bf16 %v1887, %v1886
      %v1945 = vpack.c.bf16 %v1889, %v1888
      %v1946 = vpack.c.bf16 %v1891, %v1890
      %v1947 = vpack.c.bf16 %v1893, %v1892
      %v1948 = vpack.c.bf16 %v1895, %v1894
      %v1949 = vpack.c.bf16 %v1897, %v1896
      %v1950 = vpack.c.bf16 %v1899, %v1898
      %v1951 = vpack.c.bf16 %v1901, %v1900
      %v1952 = vpack.c.bf16 %v1903, %v1902
      %v1953 = vpack.c.bf16 %v1905, %v1904
      %v1954 = vpack.c.bf16 %v1907, %v1906
      %v1955 = vpack.c.bf16 %v1909, %v1908
      %v1956 = vpack.c.bf16 %v1911, %v1910
      %v1957 = vpack.c.bf16 %v1913, %v1912
      %v1958 = vpack.c.bf16 %v1915, %v1914
      %v1959 = vpack.c.bf16 %v1917, %v1916
      %v1960 = vpack.c.bf16 %v1919, %v1918
      %v1961 = vpack.c.bf16 %v1921, %v1920
      %v1962 = vpack.c.bf16 %v1923, %v1922
      %v1963 = vpack.c.bf16 %v1925, %v1924
      %v1964 = vpack.c.bf16 %v1927, %v1926
      %v1965 = vpack.c.bf16 %v1929, %v1928
      %v1966 = vpack.c.bf16 %v1931, %v1930
      %v1967 = vpack.c.bf16 %v1933, %v1932
      %v1968 = vpack.c.bf16 %v1935, %v1934
      %v1969 = vpack.c.bf16 %v1937, %v1936
      %v1970 = vld [vmem:[%s7] sm:$0xf]
      %v1971 = vld [vmem:[%s7 + $0x4] sm:$0xf]
      %v1972 = vld [vmem:[%s7 + $0x8] sm:$0xf]
      %v1973 = vld [vmem:[%s7 + $0xc] sm:$0xf]
      %v1974 = vld [vmem:[%s7 + $0x10] sm:$0xf]
      %v1975 = vld [vmem:[%s7 + $0x14] sm:$0xf]
      %v1976 = vld [vmem:[%s7 + $0x18] sm:$0xf]
      %v1977 = vld [vmem:[%s7 + $0x1c] sm:$0xf]
      %v1978 = vld [vmem:[%s7 + $0x20] sm:$0xf]
      %v1979 = vld [vmem:[%s7 + $0x24] sm:$0xf]
      %v1980 = vld [vmem:[%s7 + $0x28] sm:$0xf]
      %v1981 = vld [vmem:[%s7 + $0x2c] sm:$0xf]
      %v1982 = vld [vmem:[%s7 + $0x30] sm:$0xf]
      %v1983 = vld [vmem:[%s7 + $0x34] sm:$0xf]
      %v1984 = vld [vmem:[%s7 + $0x38] sm:$0xf]
      %v1985 = vld [vmem:[%s7 + $0x3c] sm:$0xf]
      %v1986 = vld [vmem:[%s8] sm:$0x1]
      %v1988 = vlaneseq
      %v1989 = vshrl.u32 %v1988, 7
      %v1990 = vsub.s32 0, %v1989
      %v1991 = vrot.slane %v1986, %v1990
      %v2009 = vunpack.c.l.b16 %v1970
      %v2010 = vunpack.c.l.b16 %v1971
      %v2011 = vunpack.c.l.b16 %v1972
      %v2012 = vunpack.c.l.b16 %v1973
      %v2013 = vunpack.c.l.b16 %v1974
      %v2014 = vunpack.c.l.b16 %v1975
      %v2015 = vunpack.c.l.b16 %v1976
      %v2016 = vunpack.c.l.b16 %v1977
      %v2017 = vunpack.c.l.b16 %v1978
      %v2018 = vunpack.c.l.b16 %v1979
      %v2019 = vunpack.c.l.b16 %v1980
      %v2020 = vunpack.c.l.b16 %v1981
      %v2021 = vunpack.c.l.b16 %v1982
      %v2022 = vunpack.c.l.b16 %v1983
      %v2023 = vunpack.c.l.b16 %v1984
      %v2024 = vunpack.c.l.b16 %v1985
      %v2025 = vpack.c.b16 %v2010, %v2009
      %v2026 = vpack.c.b16 %v2012, %v2011
      %v2027 = vpack.c.b16 %v2014, %v2013
      %v2028 = vpack.c.b16 %v2016, %v2015
      %v2029 = vpack.c.b16 %v2018, %v2017
      %v2030 = vpack.c.b16 %v2020, %v2019
      %v2031 = vpack.c.b16 %v2022, %v2021
      %v2032 = vpack.c.b16 %v2024, %v2023
      %2041 = vmatprep.subr.bf16.mxu0 0
      %2042 = vmatpush1.bf16.msra.mxu0 %v2025
      %2043 = vmatprep.subr.bf16.mxu0 0
      %2044 = vmatpush1.bf16.msra.mxu0 %v2026
      %2045 = vmatprep.subr.bf16.mxu0 0
      %2046 = vmatpush1.bf16.msra.mxu0 %v2027
      %2047 = vmatprep.subr.bf16.mxu0 0
      %2048 = vmatpush1.bf16.msra.mxu0 %v2028
      %2049 = vmatprep.subr.bf16.mxu0 0
      %2050 = vmatpush1.bf16.msra.mxu0 %v2029
      %2051 = vmatprep.subr.bf16.mxu0 0
      %2052 = vmatpush1.bf16.msra.mxu0 %v2030
      %2053 = vmatprep.subr.bf16.mxu0 0
      %2054 = vmatpush1.bf16.msra.mxu0 %v2031
      %2055 = vmatprep.subr.bf16.mxu0 0
      %2056 = vmatpush1.bf16.msra.mxu0 %v2032
      %2057 = vmatprep.subr.bf16.mxu0 0
      %2058 = vmatpush1.bf16.msra.mxu0 0
      %2059 = vmatprep.subr.bf16.mxu0 0
      %2060 = vmatpush1.bf16.msra.mxu0 0
      %2061 = vmatprep.subr.bf16.mxu0 0
      %2062 = vmatpush1.bf16.msra.mxu0 0
      %2063 = vmatprep.subr.bf16.mxu0 0
      %2064 = vmatpush1.bf16.msra.mxu0 0
      %2065 = vmatprep.subr.bf16.mxu0 0
      %2066 = vmatpush1.bf16.msra.mxu0 0
      %2067 = vmatprep.subr.bf16.mxu0 0
      %2068 = vmatpush1.bf16.msra.mxu0 0
      %2069 = vmatprep.subr.bf16.mxu0 0
      %2070 = vmatpush1.bf16.msra.mxu0 0
      %2071 = vmatprep.subr.bf16.mxu0 0
      %2072 = vmatpush1.bf16.msra.mxu0 0
      %2073 = vmatprep.mubr.bf16.mxu0 0
      %2074 = vmatmul.mubr.bf16.gmra.mrb[0].mxu0 %v1938
      %v2075 = vpop.f32.mrb[0].mxu0
      %v2076 = vadd.f32 %v1991, %v2075
      %v2077 = vpop.f32.mrb[0].mxu0
      %v2078 = vpop.f32.mrb[0].mxu0
      %v2079 = vadd.f32 %v1991, %v2078
      %v2080 = vpop.f32.mrb[0].mxu0
      %2081 = vmatprep.mubr.bf16.mxu0 0
      %2082 = vmatmul.mubr.bf16.gmra.mrb[0].mxu0 %v1939
      %v2083 = vpop.f32.mrb[0].mxu0
      %v2084 = vadd.f32 %v1991, %v2083
      %v2085 = vpop.f32.mrb[0].mxu0
      %v2086 = vpop.f32.mrb[0].mxu0
      %v2087 = vadd.f32 %v1991, %v2086
      %v2088 = vpop.f32.mrb[0].mxu0
      %2089 = vmatprep.mubr.bf16.mxu0 0
      %2090 = vmatmul.mubr.bf16.gmra.mrb[0].mxu0 %v1940
      %v2091 = vpop.f32.mrb[0].mxu0
      %v2092 = vadd.f32 %v1991, %v2091
      %v2093 = vpop.f32.mrb[0].mxu0
      %v2094 = vpop.f32.mrb[0].mxu0
      %v2095 = vadd.f32 %v1991, %v2094
      %v2096 = vpop.f32.mrb[0].mxu0
      %2097 = vmatprep.mubr.bf16.mxu0 0
      %2098 = vmatmul.mubr.bf16.gmra.mrb[0].mxu0 %v1941
      %v2099 = vpop.f32.mrb[0].mxu0
      %v2100 = vadd.f32 %v1991, %v2099
      %v2101 = vpop.f32.mrb[0].mxu0
      %v2102 = vpop.f32.mrb[0].mxu0
      %v2103 = vadd.f32 %v1991, %v2102
      %v2104 = vpop.f32.mrb[0].mxu0
      %2105 = vmatprep.mubr.bf16.mxu0 0
      %2106 = vmatmul.mubr.bf16.gmra.mrb[0].mxu0 %v1942
      %v2107 = vpop.f32.mrb[0].mxu0
      %v2108 = vadd.f32 %v1991, %v2107
      %v2109 = vpop.f32.mrb[0].mxu0
      %v2110 = vpop.f32.mrb[0].mxu0
      %v2111 = vadd.f32 %v1991, %v2110
      %v2112 = vpop.f32.mrb[0].mxu0
      %2113 = vmatprep.mubr.bf16.mxu0 0
      %2114 = vmatmul.mubr.bf16.gmra.mrb[0].mxu0 %v1943
      %v2115 = vpop.f32.mrb[0].mxu0
      %v2116 = vadd.f32 %v1991, %v2115
      %v2117 = vpop.f32.mrb[0].mxu0
      %v2118 = vpop.f32.mrb[0].mxu0
      %v2119 = vadd.f32 %v1991, %v2118
      %v2120 = vpop.f32.mrb[0].mxu0
      %2121 = vmatprep.mubr.bf16.mxu0 0
      %2122 = vmatmul.mubr.bf16.gmra.mrb[0].mxu0 %v1944
      %v2123 = vpop.f32.mrb[0].mxu0
      %v2124 = vadd.f32 %v1991, %v2123
      %v2125 = vpop.f32.mrb[0].mxu0
      %v2126 = vpop.f32.mrb[0].mxu0
      %v2127 = vadd.f32 %v1991, %v2126
      %v2128 = vpop.f32.mrb[0].mxu0
      %2129 = vmatprep.mubr.bf16.mxu0 0
      %2130 = vmatmul.mubr.bf16.gmra.mrb[0].mxu0 %v1945
      %v2131 = vpop.f32.mrb[0].mxu0
      %v2132 = vadd.f32 %v1991, %v2131
      %v2133 = vpop.f32.mrb[0].mxu0
      %v2134 = vpop.f32.mrb[0].mxu0
      %v2135 = vadd.f32 %v1991, %v2134
      %v2136 = vpop.f32.mrb[0].mxu0
      %2137 = vmatprep.mubr.bf16.mxu0 0
      %2138 = vmatmul.mubr.bf16.gmra.mrb[0].mxu0 %v1946
      %v2139 = vpop.f32.mrb[0].mxu0
      %v2140 = vadd.f32 %v1991, %v2139
      %v2141 = vpop.f32.mrb[0].mxu0
      %v2142 = vpop.f32.mrb[0].mxu0
      %v2143 = vadd.f32 %v1991, %v2142
      %v2144 = vpop.f32.mrb[0].mxu0
      %2145 = vmatprep.mubr.bf16.mxu0 0
      %2146 = vmatmul.mubr.bf16.gmra.mrb[0].mxu0 %v1947
      %v2147 = vpop.f32.mrb[0].mxu0
      %v2148 = vadd.f32 %v1991, %v2147
      %v2149 = vpop.f32.mrb[0].mxu0
      %v2150 = vpop.f32.mrb[0].mxu0
      %v2151 = vadd.f32 %v1991, %v2150
      %v2152 = vpop.f32.mrb[0].mxu0
      %2153 = vmatprep.mubr.bf16.mxu0 0
      %2154 = vmatmul.mubr.bf16.gmra.mrb[0].mxu0 %v1948
      %v2155 = vpop.f32.mrb[0].mxu0
      %v2156 = vadd.f32 %v1991, %v2155
      %v2157 = vpop.f32.mrb[0].mxu0
      %v2158 = vpop.f32.mrb[0].mxu0
      %v2159 = vadd.f32 %v1991, %v2158
      %v2160 = vpop.f32.mrb[0].mxu0
      %2161 = vmatprep.mubr.bf16.mxu0 0
      %2162 = vmatmul.mubr.bf16.gmra.mrb[0].mxu0 %v1949
      %v2163 = vpop.f32.mrb[0].mxu0
      %v2164 = vadd.f32 %v1991, %v2163
      %v2165 = vpop.f32.mrb[0].mxu0
      %v2166 = vpop.f32.mrb[0].mxu0
      %v2167 = vadd.f32 %v1991, %v2166
      %v2168 = vpop.f32.mrb[0].mxu0
      %2169 = vmatprep.mubr.bf16.mxu0 0
      %2170 = vmatmul.mubr.bf16.gmra.mrb[0].mxu0 %v1950
      %v2171 = vpop.f32.mrb[0].mxu0
      %v2172 = vadd.f32 %v1991, %v2171
      %v2173 = vpop.f32.mrb[0].mxu0
      %v2174 = vpop.f32.mrb[0].mxu0
      %v2175 = vadd.f32 %v1991, %v2174
      %v2176 = vpop.f32.mrb[0].mxu0
      %2177 = vmatprep.mubr.bf16.mxu0 0
      %2178 = vmatmul.mubr.bf16.gmra.mrb[0].mxu0 %v1951
      %v2179 = vpop.f32.mrb[0].mxu0
      %v2180 = vadd.f32 %v1991, %v2179
      %v2181 = vpop.f32.mrb[0].mxu0
      %v2182 = vpop.f32.mrb[0].mxu0
      %v2183 = vadd.f32 %v1991, %v2182
      %v2184 = vpop.f32.mrb[0].mxu0
      %2185 = vmatprep.mubr.bf16.mxu0 0
      %2186 = vmatmul.mubr.bf16.gmra.mrb[0].mxu0 %v1952
      %v2187 = vpop.f32.mrb[0].mxu0
      %v2188 = vadd.f32 %v1991, %v2187
      %v2189 = vpop.f32.mrb[0].mxu0
      %v2190 = vpop.f32.mrb[0].mxu0
      %v2191 = vadd.f32 %v1991, %v2190
      %v2192 = vpop.f32.mrb[0].mxu0
      %2193 = vmatprep.mubr.bf16.mxu0 0
      %2194 = vmatmul.mubr.bf16.gmra.mrb[0].mxu0 %v1953
      %v2195 = vpop.f32.mrb[0].mxu0
      %v2196 = vadd.f32 %v1991, %v2195
      %v2197 = vpop.f32.mrb[0].mxu0
      %v2198 = vpop.f32.mrb[0].mxu0
      %v2199 = vadd.f32 %v1991, %v2198
      %v2200 = vpop.f32.mrb[0].mxu0
      %2201 = vmatprep.mubr.bf16.mxu0 0
      %2202 = vmatmul.mubr.bf16.gmra.mrb[0].mxu0 %v1954
      %v2203 = vpop.f32.mrb[0].mxu0
      %v2204 = vadd.f32 %v1991, %v2203
      %v2205 = vpop.f32.mrb[0].mxu0
      %v2206 = vpop.f32.mrb[0].mxu0
      %v2207 = vadd.f32 %v1991, %v2206
      %v2208 = vpop.f32.mrb[0].mxu0
      %2209 = vmatprep.mubr.bf16.mxu0 0
      %2210 = vmatmul.mubr.bf16.gmra.mrb[0].mxu0 %v1955
      %v2211 = vpop.f32.mrb[0].mxu0
      %v2212 = vadd.f32 %v1991, %v2211
      %v2213 = vpop.f32.mrb[0].mxu0
      %v2214 = vpop.f32.mrb[0].mxu0
      %v2215 = vadd.f32 %v1991, %v2214
      %v2216 = vpop.f32.mrb[0].mxu0
      %2217 = vmatprep.mubr.bf16.mxu0 0
      %2218 = vmatmul.mubr.bf16.gmra.mrb[0].mxu0 %v1956
      %v2219 = vpop.f32.mrb[0].mxu0
      %v2220 = vadd.f32 %v1991, %v2219
      %v2221 = vpop.f32.mrb[0].mxu0
      %v2222 = vpop.f32.mrb[0].mxu0
      %v2223 = vadd.f32 %v1991, %v2222
      %v2224 = vpop.f32.mrb[0].mxu0
      %2225 = vmatprep.mubr.bf16.mxu0 0
      %2226 = vmatmul.mubr.bf16.gmra.mrb[0].mxu0 %v1957
      %v2227 = vpop.f32.mrb[0].mxu0
      %v2228 = vadd.f32 %v1991, %v2227
      %v2229 = vpop.f32.mrb[0].mxu0
      %v2230 = vpop.f32.mrb[0].mxu0
      %v2231 = vadd.f32 %v1991, %v2230
      %v2232 = vpop.f32.mrb[0].mxu0
      %2233 = vmatprep.mubr.bf16.mxu0 0
      %2234 = vmatmul.mubr.bf16.gmra.mrb[0].mxu0 %v1958
      %v2235 = vpop.f32.mrb[0].mxu0
      %v2236 = vadd.f32 %v1991, %v2235
      %v2237 = vpop.f32.mrb[0].mxu0
      %v2238 = vpop.f32.mrb[0].mxu0
      %v2239 = vadd.f32 %v1991, %v2238
      %v2240 = vpop.f32.mrb[0].mxu0
      %2241 = vmatprep.mubr.bf16.mxu0 0
      %2242 = vmatmul.mubr.bf16.gmra.mrb[0].mxu0 %v1959
      %v2243 = vpop.f32.mrb[0].mxu0
      %v2244 = vadd.f32 %v1991, %v2243
      %v2245 = vpop.f32.mrb[0].mxu0
      %v2246 = vpop.f32.mrb[0].mxu0
      %v2247 = vadd.f32 %v1991, %v2246
      %v2248 = vpop.f32.mrb[0].mxu0
      %2249 = vmatprep.mubr.bf16.mxu0 0
      %2250 = vmatmul.mubr.bf16.gmra.mrb[0].mxu0 %v1960
      %v2251 = vpop.f32.mrb[0].mxu0
      %v2252 = vadd.f32 %v1991, %v2251
      %v2253 = vpop.f32.mrb[0].mxu0
      %v2254 = vpop.f32.mrb[0].mxu0
      %v2255 = vadd.f32 %v1991, %v2254
      %v2256 = vpop.f32.mrb[0].mxu0
      %2257 = vmatprep.mubr.bf16.mxu0 0
      %2258 = vmatmul.mubr.bf16.gmra.mrb[0].mxu0 %v1961
      %v2259 = vpop.f32.mrb[0].mxu0
      %v2260 = vadd.f32 %v1991, %v2259
      %v2261 = vpop.f32.mrb[0].mxu0
      %v2262 = vpop.f32.mrb[0].mxu0
      %v2263 = vadd.f32 %v1991, %v2262
      %v2264 = vpop.f32.mrb[0].mxu0
      %2265 = vmatprep.mubr.bf16.mxu0 0
      %2266 = vmatmul.mubr.bf16.gmra.mrb[0].mxu0 %v1962
      %v2267 = vpop.f32.mrb[0].mxu0
      %v2268 = vadd.f32 %v1991, %v2267
      %v2269 = vpop.f32.mrb[0].mxu0
      %v2270 = vpop.f32.mrb[0].mxu0
      %v2271 = vadd.f32 %v1991, %v2270
      %v2272 = vpop.f32.mrb[0].mxu0
      %2273 = vmatprep.mubr.bf16.mxu0 0
      %2274 = vmatmul.mubr.bf16.gmra.mrb[0].mxu0 %v1963
      %v2275 = vpop.f32.mrb[0].mxu0
      %v2276 = vadd.f32 %v1991, %v2275
      %v2277 = vpop.f32.mrb[0].mxu0
      %v2278 = vpop.f32.mrb[0].mxu0
      %v2279 = vadd.f32 %v1991, %v2278
      %v2280 = vpop.f32.mrb[0].mxu0
      %2281 = vmatprep.mubr.bf16.mxu0 0
      %2282 = vmatmul.mubr.bf16.gmra.mrb[0].mxu0 %v1964
      %v2283 = vpop.f32.mrb[0].mxu0
      %v2284 = vadd.f32 %v1991, %v2283
      %v2285 = vpop.f32.mrb[0].mxu0
      %v2286 = vpop.f32.mrb[0].mxu0
      %v2287 = vadd.f32 %v1991, %v2286
      %v2288 = vpop.f32.mrb[0].mxu0
      %2289 = vmatprep.mubr.bf16.mxu0 0
      %2290 = vmatmul.mubr.bf16.gmra.mrb[0].mxu0 %v1965
      %v2291 = vpop.f32.mrb[0].mxu0
      %v2292 = vadd.f32 %v1991, %v2291
      %v2293 = vpop.f32.mrb[0].mxu0
      %v2294 = vpop.f32.mrb[0].mxu0
      %v2295 = vadd.f32 %v1991, %v2294
      %v2296 = vpop.f32.mrb[0].mxu0
      %2297 = vmatprep.mubr.bf16.mxu0 0
      %2298 = vmatmul.mubr.bf16.gmra.mrb[0].mxu0 %v1966
      %v2299 = vpop.f32.mrb[0].mxu0
      %v2300 = vadd.f32 %v1991, %v2299
      %v2301 = vpop.f32.mrb[0].mxu0
      %v2302 = vpop.f32.mrb[0].mxu0
      %v2303 = vadd.f32 %v1991, %v2302
      %v2304 = vpop.f32.mrb[0].mxu0
      %2305 = vmatprep.mubr.bf16.mxu0 0
      %2306 = vmatmul.mubr.bf16.gmra.mrb[0].mxu0 %v1967
      %v2307 = vpop.f32.mrb[0].mxu0
      %v2308 = vadd.f32 %v1991, %v2307
      %v2309 = vpop.f32.mrb[0].mxu0
      %v2310 = vpop.f32.mrb[0].mxu0
      %v2311 = vadd.f32 %v1991, %v2310
      %v2312 = vpop.f32.mrb[0].mxu0
      %2313 = vmatprep.mubr.bf16.mxu0 0
      %2314 = vmatmul.mubr.bf16.gmra.mrb[0].mxu0 %v1968
      %v2315 = vpop.f32.mrb[0].mxu0
      %v2316 = vadd.f32 %v1991, %v2315
      %v2317 = vpop.f32.mrb[0].mxu0
      %v2318 = vpop.f32.mrb[0].mxu0
      %v2319 = vadd.f32 %v1991, %v2318
      %v2320 = vpop.f32.mrb[0].mxu0
      %2321 = vmatprep.mubr.bf16.mxu0 0
      %2322 = vmatmul.mubr.bf16.gmra.mrb[0].mxu0 %v1969
      %v2323 = vpop.f32.mrb[0].mxu0
      %v2324 = vadd.f32 %v1991, %v2323
      %v2325 = vpop.f32.mrb[0].mxu0
      %v2326 = vpop.f32.mrb[0].mxu0
      %v2327 = vadd.f32 %v1991, %v2326
      %v2328 = vpop.f32.mrb[0].mxu0
      %2329 = vdwg.mxu0
      %vm2330 = vcmask 64512
      %2331 = vst.msk [vmem:[%s334] sm:$0xff] %vm2330, %v2076
      %2332 = vst.msk [vmem:[%s334 + $0x8] sm:$0xff] %vm2330, %v2079
      %2333 = vst.msk [vmem:[%s334 + $0x10] sm:$0xff] %vm2330, %v2084
      %2334 = vst.msk [vmem:[%s334 + $0x18] sm:$0xff] %vm2330, %v2087
      %2335 = vst.msk [vmem:[%s334 + $0x20] sm:$0xff] %vm2330, %v2092
      %2336 = vst.msk [vmem:[%s334 + $0x28] sm:$0xff] %vm2330, %v2095
      %2337 = vst.msk [vmem:[%s334 + $0x30] sm:$0xff] %vm2330, %v2100
      %2338 = vst.msk [vmem:[%s334 + $0x38] sm:$0xff] %vm2330, %v2103
      %2339 = vst.msk [vmem:[%s334 + $0x40] sm:$0xff] %vm2330, %v2108
      %2340 = vst.msk [vmem:[%s334 + $0x48] sm:$0xff] %vm2330, %v2111
      %2341 = vst.msk [vmem:[%s334 + $0x50] sm:$0xff] %vm2330, %v2116
      %2342 = vst.msk [vmem:[%s334 + $0x58] sm:$0xff] %vm2330, %v2119
      %2343 = vst.msk [vmem:[%s334 + $0x60] sm:$0xff] %vm2330, %v2124
      %2344 = vst.msk [vmem:[%s334 + $0x68] sm:$0xff] %vm2330, %v2127
      %2345 = vst.msk [vmem:[%s334 + $0x70] sm:$0xff] %vm2330, %v2132
      %2346 = vst.msk [vmem:[%s334 + $0x78] sm:$0xff] %vm2330, %v2135
      %2347 = vst.msk [vmem:[%s334 + $0x80] sm:$0xff] %vm2330, %v2140
      %2348 = vst.msk [vmem:[%s334 + $0x88] sm:$0xff] %vm2330, %v2143
      %2349 = vst.msk [vmem:[%s334 + $0x90] sm:$0xff] %vm2330, %v2148
      %2350 = vst.msk [vmem:[%s334 + $0x98] sm:$0xff] %vm2330, %v2151
      %2351 = vst.msk [vmem:[%s334 + $0xa0] sm:$0xff] %vm2330, %v2156
      %2352 = vst.msk [vmem:[%s334 + $0xa8] sm:$0xff] %vm2330, %v2159
      %2353 = vst.msk [vmem:[%s334 + $0xb0] sm:$0xff] %vm2330, %v2164
      %2354 = vst.msk [vmem:[%s334 + $0xb8] sm:$0xff] %vm2330, %v2167
      %2355 = vst.msk [vmem:[%s334 + $0xc0] sm:$0xff] %vm2330, %v2172
      %2356 = vst.msk [vmem:[%s334 + $0xc8] sm:$0xff] %vm2330, %v2175
      %2357 = vst.msk [vmem:[%s334 + $0xd0] sm:$0xff] %vm2330, %v2180
      %2358 = vst.msk [vmem:[%s334 + $0xd8] sm:$0xff] %vm2330, %v2183
      %2359 = vst.msk [vmem:[%s334 + $0xe0] sm:$0xff] %vm2330, %v2188
      %2360 = vst.msk [vmem:[%s334 + $0xe8] sm:$0xff] %vm2330, %v2191
      %2361 = vst.msk [vmem:[%s334 + $0xf0] sm:$0xff] %vm2330, %v2196
      %2362 = vst.msk [vmem:[%s334 + $0xf8] sm:$0xff] %vm2330, %v2199
      %2363 = vst.msk [vmem:[%s334 + $0x100] sm:$0xff] %vm2330, %v2204
      %2364 = vst.msk [vmem:[%s334 + $0x108] sm:$0xff] %vm2330, %v2207
      %2365 = vst.msk [vmem:[%s334 + $0x110] sm:$0xff] %vm2330, %v2212
      %2366 = vst.msk [vmem:[%s334 + $0x118] sm:$0xff] %vm2330, %v2215
      %2367 = vst.msk [vmem:[%s334 + $0x120] sm:$0xff] %vm2330, %v2220
      %2368 = vst.msk [vmem:[%s334 + $0x128] sm:$0xff] %vm2330, %v2223
      %2369 = vst.msk [vmem:[%s334 + $0x130] sm:$0xff] %vm2330, %v2228
      %2370 = vst.msk [vmem:[%s334 + $0x138] sm:$0xff] %vm2330, %v2231
      %2371 = vst.msk [vmem:[%s334 + $0x140] sm:$0xff] %vm2330, %v2236
      %2372 = vst.msk [vmem:[%s334 + $0x148] sm:$0xff] %vm2330, %v2239
      %2373 = vst.msk [vmem:[%s334 + $0x150] sm:$0xff] %vm2330, %v2244
      %2374 = vst.msk [vmem:[%s334 + $0x158] sm:$0xff] %vm2330, %v2247
      %2375 = vst.msk [vmem:[%s334 + $0x160] sm:$0xff] %vm2330, %v2252
      %2376 = vst.msk [vmem:[%s334 + $0x168] sm:$0xff] %vm2330, %v2255
      %2377 = vst.msk [vmem:[%s334 + $0x170] sm:$0xff] %vm2330, %v2260
      %2378 = vst.msk [vmem:[%s334 + $0x178] sm:$0xff] %vm2330, %v2263
      %2379 = vst.msk [vmem:[%s334 + $0x180] sm:$0xff] %vm2330, %v2268
      %2380 = vst.msk [vmem:[%s334 + $0x188] sm:$0xff] %vm2330, %v2271
      %2381 = vst.msk [vmem:[%s334 + $0x190] sm:$0xff] %vm2330, %v2276
      %2382 = vst.msk [vmem:[%s334 + $0x198] sm:$0xff] %vm2330, %v2279
      %2383 = vst.msk [vmem:[%s334 + $0x1a0] sm:$0xff] %vm2330, %v2284
      %2384 = vst.msk [vmem:[%s334 + $0x1a8] sm:$0xff] %vm2330, %v2287
      %2385 = vst.msk [vmem:[%s334 + $0x1b0] sm:$0xff] %vm2330, %v2292
      %2386 = vst.msk [vmem:[%s334 + $0x1b8] sm:$0xff] %vm2330, %v2295
      %2387 = vst.msk [vmem:[%s334 + $0x1c0] sm:$0xff] %vm2330, %v2300
      %2388 = vst.msk [vmem:[%s334 + $0x1c8] sm:$0xff] %vm2330, %v2303
      %2389 = vst.msk [vmem:[%s334 + $0x1d0] sm:$0xff] %vm2330, %v2308
      %2390 = vst.msk [vmem:[%s334 + $0x1d8] sm:$0xff] %vm2330, %v2311
      %2391 = vst.msk [vmem:[%s334 + $0x1e0] sm:$0xff] %vm2330, %v2316
      %2392 = vst.msk [vmem:[%s334 + $0x1e8] sm:$0xff] %vm2330, %v2319
      %2393 = vst.msk [vmem:[%s334 + $0x1f0] sm:$0xff] %vm2330, %v2324
      %2394 = vst.msk [vmem:[%s334 + $0x1f8] sm:$0xff] %vm2330, %v2327
      %s2395 = smul.u32 64, %s20
      %p2396 = scmp.lt.s32.totalorder %s2395, 255
      %s2397 = scalar_select %p2396, %s2395, 255
      %s2398 = smul.addr %s2397, 8
      %s2399 = scalar_lea.vmem %s9, %s2398
      // Predicated region
      $region57: #{tpu_custom_call.1} parent=55 // pred_check
        %p2400 = pneg %p232
      $region58: #{tpu_custom_call.1} parent=55 // pred_check_branch
        %2402 = sbr.rel (%p2400) target = $region60
      $region59: #{tpu_custom_call.1} parent=55 // pred_region
        %s2403 = smul.u32 64, %s20
      $region60: #{tpu_custom_call.1} parent=55 // pred_fallthru
        _
    $region56: #{tpu_custom_call.1} parent=5 // pred_fallthru
      _
    %p2404 = scmp.le.s32.totalorder 2, %s15
    // Predicated region
    $region61: #{tpu_custom_call.1} parent=5 // pred_check
      %p2405 = pneg %p2404
    $region62: #{tpu_custom_call.1} parent=5 // pred_check_branch
      %2407 = sbr.rel (%p2405) target = $region64
    $region63: #{tpu_custom_call.1} parent=5 // pred_region
      %s2408 = ssub.s32 %s15, 2
      // Predicated region
      $region65: #{tpu_custom_call.1} parent=63 // pred_check
        %p2409 = pneg %p238
      $region66: #{tpu_custom_call.1} parent=63 // pred_check_branch
        %2411 = sbr.rel (%p2409) target = $region68
      $region67: #{tpu_custom_call.1} parent=63 // pred_region
        %s2412 = smul.u32 64, %s21
        %p2413 = scmp.lt.s32.totalorder %s2412, 255
        %s2414 = scalar_select %p2413, %s2412, 255
        %s2415 = smul.addr %s2414, 8
        %s2416 = scalar_lea.vmem %s9, %s2415
      $region68: #{tpu_custom_call.1} parent=63 // pred_fallthru
        _
    $region64: #{tpu_custom_call.1} parent=5 // pred_fallthru
      _
  $region6: #{tpu_custom_call.1} parent=0 // loop_footer
    %s19 = sadd.s32 1, %s15
  $region7: #{tpu_custom_call.1} parent=0 // loop_footer_branch
    %14 = sbr.rel target = $region3
  $region8: #{tpu_custom_call.1} parent=0 // loop_exit
    _

</llo_original>
